<compile_context>
chip_gen: v7x
topology: tpu7x:2x2x1
jax: 0.10.0
libtpu: 0.0.40
codegen_flags: <defaults>
</compile_context>

<pallas_src>
import functools

import jax
import jax.numpy as jnp
from jax import lax
from jax.experimental import pallas as pl
from jax.experimental.pallas import tpu as pltpu


# ----------------------------- tiled Linear kernel ---------------------------

def _linear_kernel(x_ref, w_ref, b_ref, o_ref, *, relu):
    y = jnp.dot(x_ref[...], w_ref[...], preferred_element_type=jnp.float32)
    y = y + b_ref[...]
    if relu:
        y = jnp.maximum(y, 0.0)
    o_ref[...] = y.astype(o_ref.dtype)


def linear(x, w, b, relu=False):
    """x: (M, K); w: (N, K) PyTorch Linear layout; b: (N,)  ->  (M, N) f32.

    Tiled over M and N (both 'parallel' -> usable by both TCs on v7x).  K is
    kept whole (it is small for this model: <= hidden_size), so there is no
    reduction axis and no partial-K masking issue.
    """
    M, K = x.shape
    N = w.shape[0]
    wt = jnp.transpose(w)                 # (K, N)
    b2 = b.reshape(1, N)

    tm = M if M <= 256 else 256           # 256 % 8 == 0 -> tail blocks OK
    tn = N if N <= 512 else 512           # 512 % 128 == 0

    return pl.pallas_call(
        functools.partial(_linear_kernel, relu=relu),
        out_shape=jax.ShapeDtypeStruct((M, N), jnp.float32),
        grid_spec=pltpu.PrefetchScalarGridSpec(
            num_scalar_prefetch=0,
            grid=(pl.cdiv(M, tm), pl.cdiv(N, tn)),
            in_specs=[pl.BlockSpec((tm, K), lambda i, j: (i, 0)),
                      pl.BlockSpec((K, tn), lambda i, j: (0, j)),
                      pl.BlockSpec((1, tn), lambda i, j: (0, j))],
            out_specs=pl.BlockSpec((tm, tn), lambda i, j: (i, j)),
        ),
        compiler_params=pltpu.CompilerParams(
            dimension_semantics=("parallel", "parallel")),
    )(x, wt, b2)


# --------------------------- fused GRU layer kernel ---------------------------

def _gru_layer_kernel(x_ref, wih_ref, bih_ref, whh_ref, bhh_ref,
                      o_ref, h_scratch, *, tc, hidden, unroll):
    """Processes one time-chunk of `tc` steps; h carried in VMEM scratch."""
    @pl.when(pl.program_id(0) == 0)
    def _():
        h_scratch[...] = jnp.zeros_like(h_scratch)      # zero initial hidden

    H = hidden

    def step(t, h):
        # fused input gates:  x_t @ W_ih^T + b_ih   -> (B, 3H), cols [r|z|n]
        xg = jnp.dot(x_ref[t], wih_ref[...],
                     preferred_element_type=jnp.float32) + bih_ref[...]
        # fused hidden gates: h   @ W_hh^T + b_hh   -> (B, 3H), one matmul
        hg = jnp.dot(h, whh_ref[...],
                     preferred_element_type=jnp.float32) + bhh_ref[...]
        r = jax.nn.sigmoid(xg[:, :H] + hg[:, :H])
        z = jax.nn.sigmoid(xg[:, H:2 * H] + hg[:, H:2 * H])
        n = jnp.tanh(xg[:, 2 * H:] + r * hg[:, 2 * H:])
        h_new = n + z * (h - n)           # == (1-z)*n + z*h, one fewer VPU op
        o_ref[t] = h_new.astype(o_ref.dtype)
        return h_new

    h_scratch[...] = lax.fori_loop(0, tc, step, h_scratch[...], unroll=unroll)


def gru_layer(x_tm, w_ih, b_ih, w_hh, b_hh, hidden_size, time_chunk=32):
    """One GRU layer over the full sequence (zero initial hidden state).

    x_tm : (T, B, F) time-major layer input
    w_ih : (3H, F), b_ih : (3H,)   (PyTorch layout, gate order [r, z, n])
    w_hh : (3H, H), b_hh : (3H,)
    returns (T, B, H) time-major hidden-state sequence.
    """
    T, B, F = x_tm.shape
    H = hidden_size

    # fused gate weights: one matmul per step instead of three
    wih_t = jnp.transpose(w_ih)          # (F, 3H), columns [r|z|n]
    whh_t = jnp.transpose(w_hh)          # (H, 3H)
    bih = b_ih.reshape(1, 3 * H)
    bhh = b_hh.reshape(1, 3 * H)

    # time chunk: largest divisor of T not exceeding `time_chunk`
    tc = 1
    for d in range(1, min(T, time_chunk) + 1):
        if T % d == 0:
            tc = d
    unroll = tc <= 16

    return pl.pallas_call(
        functools.partial(_gru_layer_kernel, tc=tc, hidden=H, unroll=unroll),
        out_shape=jax.ShapeDtypeStruct((T, B, H), jnp.float32),
        grid_spec=pltpu.PrefetchScalarGridSpec(
            num_scalar_prefetch=0,
            grid=(T // tc,),
            in_specs=[pl.BlockSpec((tc, B, F), lambda c: (c, 0, 0)),
                      pl.BlockSpec((F, 3 * H), lambda c: (0, 0)),
                      pl.BlockSpec((1, 3 * H), lambda c: (0, 0)),
                      pl.BlockSpec((H, 3 * H), lambda c: (0, 0)),
                      pl.BlockSpec((1, 3 * H), lambda c: (0, 0))],
            out_specs=pl.BlockSpec((tc, B, H), lambda c: (c, 0, 0)),
            scratch_shapes=[pltpu.VMEM((B, H), jnp.float32)],
        ),
        compiler_params=pltpu.CompilerParams(
            dimension_semantics=("arbitrary",)),   # serial time recurrence
    )(x_tm, wih_t, bih, whh_t, bhh)


# ------------------------- parameter initialization --------------------------

def _xavier_uniform(key, shape, gain):
    fan_out, fan_in = shape
    bound = gain * (6.0 / (fan_in + fan_out)) ** 0.5
    return jax.random.uniform(key, shape, jnp.float32, -bound, bound)


class GRUPlainPallas:
    """JAX/Pallas port of GRU_plain.forward (pack=False)."""

    def __init__(self, key, input_size, embedding_size, hidden_size, num_layers,
                 output_size, has_input=True, has_output=True):
        self.input_size = input_size
        self.embedding_size = embedding_size
        self.hidden_size = hidden_size
        self.num_layers = num_layers
        self.output_size = output_size
        self.has_input = has_input
        self.has_output = has_output

        relu_gain = 2.0 ** 0.5       # nn.init.calculate_gain('relu')
        sigm_gain = 1.0              # nn.init.calculate_gain('sigmoid')
        keys = jax.random.split(key, 6 + 2 * num_layers)
        ki = iter(keys)

        H, E = hidden_size, embedding_size

        if has_input:
            self.Wi = _xavier_uniform(next(ki), (E, input_size), relu_gain)
            self.bi = jax.random.uniform(
                next(ki), (E,), jnp.float32,
                -1.0 / input_size ** 0.5, 1.0 / input_size ** 0.5)

        self.w_ih, self.w_hh, self.b_ih, self.b_hh = [], [], [], []
        for layer in range(num_layers):
            in_l = E if layer == 0 else H
            self.w_ih.append(_xavier_uniform(next(ki), (3 * H, in_l), sigm_gain))
            self.w_hh.append(_xavier_uniform(next(ki), (3 * H, H), sigm_gain))
            self.b_ih.append(jnp.full((3 * H,), 0.25, jnp.float32))
            self.b_hh.append(jnp.full((3 * H,), 0.25, jnp.float32))

        if has_output:
            self.Wo1 = _xavier_uniform(next(ki), (E, H), relu_gain)
            self.bo1 = jax.random.uniform(
                next(ki), (E,), jnp.float32, -1.0 / H ** 0.5, 1.0 / H ** 0.5)
            self.Wo2 = _xavier_uniform(next(ki), (output_size, E), relu_gain)
            self.bo2 = jax.random.uniform(
                next(ki), (output_size,), jnp.float32,
                -1.0 / E ** 0.5, 1.0 / E ** 0.5)

    # ---------------------------- forward pass ------------------------------

    def forward(self, input_raw):
        B, T, _ = input_raw.shape
        H = self.hidden_size

        # go time-major ONCE; stay time-major through all layers
        x = jnp.transpose(input_raw.astype(jnp.float32), (1, 0, 2))   # (T,B,F)

        if self.has_input:
            h = linear(x.reshape(T * B, -1), self.Wi, self.bi, relu=True)
            h = h.reshape(T, B, self.embedding_size)
        else:
            h = x

        for layer in range(self.num_layers):
            # W_ih projection is fused into the recurrence kernel
            h = gru_layer(h, self.w_ih[layer], self.b_ih[layer],
                          self.w_hh[layer], self.b_hh[layer], H)      # (T,B,H)

        if self.has_output:
            y = linear(h.reshape(T * B, H), self.Wo1, self.bo1, relu=True)
            y = linear(y, self.Wo2, self.bo2, relu=False)
            out = y.reshape(T, B, self.output_size)
        else:
            out = h

        return jnp.transpose(out, (1, 0, 2))                          # (B,T,·)

    # pure-JAX reference for numerical sanity check
    def reference(self, input_raw):
        def lin(x, w, b):
            return x @ w.T + b

        B, T, _ = input_raw.shape
        H = self.hidden_size
        h = input_raw.astype(jnp.float32)
        if self.has_input:
            h = jax.nn.relu(lin(h, self.Wi, self.bi))
        for layer in range(self.num_layers):
            hprev = jnp.zeros((B, H), jnp.float32)
            outs = []
            for t in range(T):
                xg = lin(h[:, t], self.w_ih[layer], self.b_ih[layer])
                hg = lin(hprev, self.w_hh[layer], self.b_hh[layer])
                r = jax.nn.sigmoid(xg[:, :H] + hg[:, :H])
                z = jax.nn.sigmoid(xg[:, H:2 * H] + hg[:, H:2 * H])
                n = jnp.tanh(xg[:, 2 * H:] + r * hg[:, 2 * H:])
                hprev = (1.0 - z) * n + z * hprev
                outs.append(hprev)
            h = jnp.stack(outs, axis=1)
        if self.has_output:
            h = jax.nn.relu(lin(h, self.Wo1, self.bo1))
            h = lin(h, self.Wo2, self.bo2)
        return h


# --------------------------------- main ---------------------------------------

if __name__ == "__main__":
    key = jax.random.PRNGKey(0)
    k_param, k_x = jax.random.split(key)

    # small shapes consistent with GRU_plain's forward
    B, T = 2, 8
    input_size, embedding_size, hidden_size = 4, 16, 32
    num_layers, output_size = 2, 4

    model = GRUPlainPallas(k_param, input_size, embedding_size, hidden_size,
                           num_layers, output_size,
                           has_input=True, has_output=True)

    x = jax.random.normal(k_x, (B, T, input_size), jnp.float32)

    fwd = jax.jit(model.forward)
    out = jax.block_until_ready(fwd(x))

    ref = jax.block_until_ready(model.reference(x))
    assert out.shape == (B, T, output_size)
    assert jnp.allclose(out, ref, atol=2e-2, rtol=2e-2), (
        float(jnp.max(jnp.abs(out - ref))))

    print("KERNEL_OK")
</pallas_src>

<mosaic_0001>
module attributes {stable_mosaic.version = 11 : i64} {
  func.func @_linear_kernel(%arg0: i32, %arg1: i32, %arg2: memref<16x4xf32, #tpu.memory_space<vmem>>, %arg3: memref<4x16xf32, #tpu.memory_space<vmem>>, %arg4: memref<1x16xf32, #tpu.memory_space<vmem>>, %arg5: memref<16x16xf32, #tpu.memory_space<vmem>>) attributes {dimension_semantics = [#tpu.dimension_semantics<parallel>, #tpu.dimension_semantics<parallel>], iteration_bounds = array<i64: 1, 1>, scalar_prefetch = 0 : i64, scratch_operands = 0 : i64, tpu.core_type = #tpu.core_type<tc>, window_params = [{transform_indices = @transform_0, window_bounds = array<i64: 16, 4>}, {transform_indices = @transform_1, window_bounds = array<i64: 4, 16>}, {transform_indices = @transform_2, window_bounds = array<i64: 1, 16>}, {transform_indices = @transform_3, window_bounds = array<i64: 16, 16>}]} {
    %c0 = arith.constant 0 : index
    %c0_0 = arith.constant 0 : index
    %0 = vector.load %arg2[%c0, %c0_0] : memref<16x4xf32, #tpu.memory_space<vmem>>, vector<16x4xf32>
    %c0_1 = arith.constant 0 : index
    %c0_2 = arith.constant 0 : index
    %1 = vector.load %arg3[%c0_1, %c0_2] : memref<4x16xf32, #tpu.memory_space<vmem>>, vector<4x16xf32>
    %cst = arith.constant dense<0.000000e+00> : vector<16x16xf32>
    %2 = tpu.matmul %0, %1, %cst {dimension_numbers = #tpu.dot_dimension_numbers<[1], [0], [0], [1], [0, 0, 1, 1], [], []>} : vector<16x4xf32>, vector<4x16xf32>, vector<16x16xf32> -> vector<16x16xf32>
    %c0_3 = arith.constant 0 : index
    %c0_4 = arith.constant 0 : index
    %3 = vector.load %arg4[%c0_3, %c0_4] : memref<1x16xf32, #tpu.memory_space<vmem>>, vector<1x16xf32>
    %4 = vector.broadcast %3 : vector<1x16xf32> to vector<16x16xf32>
    %5 = arith.addf %2, %4 : vector<16x16xf32>
    %cst_5 = arith.constant 0.000000e+00 : f32
    %6 = vector.broadcast %cst_5 : f32 to vector<16x16xf32>
    %7 = arith.maximumf %5, %6 : vector<16x16xf32>
    %c0_6 = arith.constant 0 : index
    %c0_7 = arith.constant 0 : index
    %8 = vector.load %arg5[%c0_6, %c0_7] : memref<16x16xf32, #tpu.memory_space<vmem>>, vector<16x16xf32>
    tpu.vector_store %arg5[%c0_6, %c0_7], %7 {strides = array<i32>} : memref<16x16xf32, #tpu.memory_space<vmem>>, vector<16x16xf32>,
    return
  }
  func.func @transform_0(%arg0: i32, %arg1: i32) -> (i32, i32) {
    %c0_i32 = arith.constant 0 : i32
    %c0_i32_0 = arith.constant 0 : i32
    return %arg0, %c0_i32 : i32, i32
  }
  func.func @transform_1(%arg0: i32, %arg1: i32) -> (i32, i32) {
    %c0_i32 = arith.constant 0 : i32
    %c0_i32_0 = arith.constant 0 : i32
    return %c0_i32, %arg1 : i32, i32
  }
  func.func @transform_2(%arg0: i32, %arg1: i32) -> (i32, i32) {
    %c0_i32 = arith.constant 0 : i32
    %c0_i32_0 = arith.constant 0 : i32
    return %c0_i32, %arg1 : i32, i32
  }
  func.func @transform_3(%arg0: i32, %arg1: i32) -> (i32, i32) {
    %c0_i32 = arith.constant 0 : i32
    return %arg0, %arg1 : i32, i32
  }
}

module attributes {stable_mosaic.version = 11 : i64} {
  func.func @_gru_layer_kernel(%arg0: i32, %arg1: memref<8x2x16xf32, #tpu.memory_space<vmem>>, %arg2: memref<16x96xf32, #tpu.memory_space<vmem>>, %arg3: memref<1x96xf32, #tpu.memory_space<vmem>>, %arg4: memref<32x96xf32, #tpu.memory_space<vmem>>, %arg5: memref<1x96xf32, #tpu.memory_space<vmem>>, %arg6: memref<8x2x32xf32, #tpu.memory_space<vmem>>, %arg7: memref<2x32xf32, #tpu.memory_space<vmem>>) attributes {dimension_semantics = [#tpu.dimension_semantics<arbitrary>], iteration_bounds = array<i64: 1>, scalar_prefetch = 0 : i64, scratch_operands = 1 : i64, tpu.core_type = #tpu.core_type<tc>, window_params = [{transform_indices = @transform_0, window_bounds = array<i64: 8, 2, 16>}, {pipeline_mode = #tpu.pipeline_mode<synchronous>, transform_indices = @transform_1, window_bounds = array<i64: 16, 96>}, {pipeline_mode = #tpu.pipeline_mode<synchronous>, transform_indices = @transform_2, window_bounds = array<i64: 1, 96>}, {pipeline_mode = #tpu.pipeline_mode<synchronous>, transform_indices = @transform_3, window_bounds = array<i64: 32, 96>}, {pipeline_mode = #tpu.pipeline_mode<synchronous>, transform_indices = @transform_4, window_bounds = array<i64: 1, 96>}, {transform_indices = @transform_5, window_bounds = array<i64: 8, 2, 32>}]} {
    %c0_i32 = arith.constant 0 : i32
    %0 = arith.cmpi eq, %arg0, %c0_i32 : i32
    %1 = arith.extui %0 : i1 to i32
    %c0_i32_0 = arith.constant 0 : i32
    %2 = arith.cmpi ne, %1, %c0_i32_0 : i32
    scf.if %2 {
      %cst_132 = arith.constant 0.000000e+00 : f32
      %333 = vector.broadcast %cst_132 : f32 to vector<2x32xf32>
      %c0_133 = arith.constant 0 : index
      %c0_134 = arith.constant 0 : index
      %334 = vector.load %arg7[%c0_133, %c0_134] : memref<2x32xf32, #tpu.memory_space<vmem>>, vector<2x32xf32>
      tpu.vector_store %arg7[%c0_133, %c0_134], %333 {strides = array<i32>} : memref<2x32xf32, #tpu.memory_space<vmem>>, vector<2x32xf32>,
    } else {
    }
    %c0 = arith.constant 0 : index
    %c0_1 = arith.constant 0 : index
    %3 = vector.load %arg7[%c0, %c0_1] : memref<2x32xf32, #tpu.memory_space<vmem>>, vector<2x32xf32>
    %c0_i32_2 = arith.constant 0 : i32
    %4 = arith.index_cast %c0_i32_2 : i32 to index
    %c0_3 = arith.constant 0 : index
    %c0_4 = arith.constant 0 : index
    %5 = vector.load %arg1[%4, %c0_3, %c0_4] : memref<8x2x16xf32, #tpu.memory_space<vmem>>, vector<1x2x16xf32>
    %6 = vector.shape_cast %5 : vector<1x2x16xf32> to vector<2x16xf32>
    %c0_5 = arith.constant 0 : index
    %c0_6 = arith.constant 0 : index
    %7 = vector.load %arg2[%c0_5, %c0_6] : memref<16x96xf32, #tpu.memory_space<vmem>>, vector<16x96xf32>
    %cst = arith.constant dense<0.000000e+00> : vector<2x96xf32>
    %8 = tpu.matmul %6, %7, %cst {dimension_numbers = #tpu.dot_dimension_numbers<[1], [0], [0], [1], [0, 0, 1, 1], [], []>} : vector<2x16xf32>, vector<16x96xf32>, vector<2x96xf32> -> vector<2x96xf32>
    %c0_7 = arith.constant 0 : index
    %c0_8 = arith.constant 0 : index
    %9 = vector.load %arg3[%c0_7, %c0_8] : memref<1x96xf32, #tpu.memory_space<vmem>>, vector<1x96xf32>
    %10 = vector.broadcast %9 : vector<1x96xf32> to vector<2x96xf32>
    %11 = arith.addf %8, %10 : vector<2x96xf32>
    %c0_9 = arith.constant 0 : index
    %c0_10 = arith.constant 0 : index
    %12 = vector.load %arg4[%c0_9, %c0_10] : memref<32x96xf32, #tpu.memory_space<vmem>>, vector<32x96xf32>
    %cst_11 = arith.constant dense<0.000000e+00> : vector<2x96xf32>
    %13 = tpu.matmul %3, %12, %cst_11 {dimension_numbers = #tpu.dot_dimension_numbers<[1], [0], [0], [1], [0, 0, 1, 1], [], []>} : vector<2x32xf32>, vector<32x96xf32>, vector<2x96xf32> -> vector<2x96xf32>
    %c0_12 = arith.constant 0 : index
    %c0_13 = arith.constant 0 : index
    %14 = vector.load %arg5[%c0_12, %c0_13] : memref<1x96xf32, #tpu.memory_space<vmem>>, vector<1x96xf32>
    %15 = vector.broadcast %14 : vector<1x96xf32> to vector<2x96xf32>
    %16 = arith.addf %13, %15 : vector<2x96xf32>
    %17 = vector.extract_strided_slice %11 {offsets = [0, 0], sizes = [2, 32], strides = [1, 1]} : vector<2x96xf32> to vector<2x32xf32>
    %18 = vector.extract_strided_slice %16 {offsets = [0, 0], sizes = [2, 32], strides = [1, 1]} : vector<2x96xf32> to vector<2x32xf32>
    %19 = arith.addf %17, %18 : vector<2x32xf32>
    %20 = arith.negf %19 : vector<2x32xf32>
    %21 = math.exp %20 : vector<2x32xf32>
    %cst_14 = arith.constant 1.000000e+00 : f32
    %22 = vector.broadcast %cst_14 : f32 to vector<2x32xf32>
    %23 = arith.addf %22, %21 : vector<2x32xf32>
    %24 = arith.divf %22, %23 : vector<2x32xf32>
    %25 = vector.extract_strided_slice %11 {offsets = [0, 32], sizes = [2, 32], strides = [1, 1]} : vector<2x96xf32> to vector<2x32xf32>
    %26 = vector.extract_strided_slice %16 {offsets = [0, 32], sizes = [2, 32], strides = [1, 1]} : vector<2x96xf32> to vector<2x32xf32>
    %27 = arith.addf %25, %26 : vector<2x32xf32>
    %28 = arith.negf %27 : vector<2x32xf32>
    %29 = math.exp %28 : vector<2x32xf32>
    %cst_15 = arith.constant 1.000000e+00 : f32
    %30 = vector.broadcast %cst_15 : f32 to vector<2x32xf32>
    %31 = arith.addf %30, %29 : vector<2x32xf32>
    %32 = arith.divf %30, %31 : vector<2x32xf32>
    %33 = vector.extract_strided_slice %11 {offsets = [0, 64], sizes = [2, 32], strides = [1, 1]} : vector<2x96xf32> to vector<2x32xf32>
    %34 = vector.extract_strided_slice %16 {offsets = [0, 64], sizes = [2, 32], strides = [1, 1]} : vector<2x96xf32> to vector<2x32xf32>
    %35 = arith.mulf %24, %34 : vector<2x32xf32>
    %36 = arith.addf %33, %35 : vector<2x32xf32>
    %37 = math.tanh %36 : vector<2x32xf32>
    %38 = arith.subf %3, %37 : vector<2x32xf32>
    %39 = arith.mulf %32, %38 : vector<2x32xf32>
    %40 = arith.addf %37, %39 : vector<2x32xf32>
    %41 = arith.index_cast %c0_i32_2 : i32 to index
    %c0_16 = arith.constant 0 : index
    %c0_17 = arith.constant 0 : index
    %42 = vector.load %arg6[%41, %c0_16, %c0_17] : memref<8x2x32xf32, #tpu.memory_space<vmem>>, vector<1x2x32xf32>
    %43 = vector.shape_cast %42 : vector<1x2x32xf32> to vector<2x32xf32>
    %44 = vector.shape_cast %40 : vector<2x32xf32> to vector<1x2x32xf32>
    tpu.vector_store %arg6[%41, %c0_16, %c0_17], %44 {strides = array<i32>} : memref<8x2x32xf32, #tpu.memory_space<vmem>>, vector<1x2x32xf32>,
    %c1_i32 = arith.constant 1 : i32
    %45 = arith.index_cast %c1_i32 : i32 to index
    %c0_18 = arith.constant 0 : index
    %c0_19 = arith.constant 0 : index
    %46 = vector.load %arg1[%45, %c0_18, %c0_19] : memref<8x2x16xf32, #tpu.memory_space<vmem>>, vector<1x2x16xf32>
    %47 = vector.shape_cast %46 : vector<1x2x16xf32> to vector<2x16xf32>
    %c0_20 = arith.constant 0 : index
    %c0_21 = arith.constant 0 : index
    %48 = vector.load %arg2[%c0_20, %c0_21] : memref<16x96xf32, #tpu.memory_space<vmem>>, vector<16x96xf32>
    %cst_22 = arith.constant dense<0.000000e+00> : vector<2x96xf32>
    %49 = tpu.matmul %47, %48, %cst_22 {dimension_numbers = #tpu.dot_dimension_numbers<[1], [0], [0], [1], [0, 0, 1, 1], [], []>} : vector<2x16xf32>, vector<16x96xf32>, vector<2x96xf32> -> vector<2x96xf32>
    %c0_23 = arith.constant 0 : index
    %c0_24 = arith.constant 0 : index
    %50 = vector.load %arg3[%c0_23, %c0_24] : memref<1x96xf32, #tpu.memory_space<vmem>>, vector<1x96xf32>
    %51 = vector.broadcast %50 : vector<1x96xf32> to vector<2x96xf32>
    %52 = arith.addf %49, %51 : vector<2x96xf32>
    %c0_25 = arith.constant 0 : index
    %c0_26 = arith.constant 0 : index
    %53 = vector.load %arg4[%c0_25, %c0_26] : memref<32x96xf32, #tpu.memory_space<vmem>>, vector<32x96xf32>
    %cst_27 = arith.constant dense<0.000000e+00> : vector<2x96xf32>
    %54 = tpu.matmul %40, %53, %cst_27 {dimension_numbers = #tpu.dot_dimension_numbers<[1], [0], [0], [1], [0, 0, 1, 1], [], []>} : vector<2x32xf32>, vector<32x96xf32>, vector<2x96xf32> -> vector<2x96xf32>
    %c0_28 = arith.constant 0 : index
    %c0_29 = arith.constant 0 : index
    %55 = vector.load %arg5[%c0_28, %c0_29] : memref<1x96xf32, #tpu.memory_space<vmem>>, vector<1x96xf32>
    %56 = vector.broadcast %55 : vector<1x96xf32> to vector<2x96xf32>
    %57 = arith.addf %54, %56 : vector<2x96xf32>
    %58 = vector.extract_strided_slice %52 {offsets = [0, 0], sizes = [2, 32], strides = [1, 1]} : vector<2x96xf32> to vector<2x32xf32>
    %59 = vector.extract_strided_slice %57 {offsets = [0, 0], sizes = [2, 32], strides = [1, 1]} : vector<2x96xf32> to vector<2x32xf32>
    %60 = arith.addf %58, %59 : vector<2x32xf32>
    %61 = arith.negf %60 : vector<2x32xf32>
    %62 = math.exp %61 : vector<2x32xf32>
    %cst_30 = arith.constant 1.000000e+00 : f32
    %63 = vector.broadcast %cst_30 : f32 to vector<2x32xf32>
    %64 = arith.addf %63, %62 : vector<2x32xf32>
    %65 = arith.divf %63, %64 : vector<2x32xf32>
    %66 = vector.extract_strided_slice %52 {offsets = [0, 32], sizes = [2, 32], strides = [1, 1]} : vector<2x96xf32> to vector<2x32xf32>
    %67 = vector.extract_strided_slice %57 {offsets = [0, 32], sizes = [2, 32], strides = [1, 1]} : vector<2x96xf32> to vector<2x32xf32>
    %68 = arith.addf %66, %67 : vector<2x32xf32>
    %69 = arith.negf %68 : vector<2x32xf32>
    %70 = math.exp %69 : vector<2x32xf32>
    %cst_31 = arith.constant 1.000000e+00 : f32
    %71 = vector.broadcast %cst_31 : f32 to vector<2x32xf32>
    %72 = arith.addf %71, %70 : vector<2x32xf32>
    %73 = arith.divf %71, %72 : vector<2x32xf32>
    %74 = vector.extract_strided_slice %52 {offsets = [0, 64], sizes = [2, 32], strides = [1, 1]} : vector<2x96xf32> to vector<2x32xf32>
    %75 = vector.extract_strided_slice %57 {offsets = [0, 64], sizes = [2, 32], strides = [1, 1]} : vector<2x96xf32> to vector<2x32xf32>
    %76 = arith.mulf %65, %75 : vector<2x32xf32>
    %77 = arith.addf %74, %76 : vector<2x32xf32>
    %78 = math.tanh %77 : vector<2x32xf32>
    %79 = arith.subf %40, %78 : vector<2x32xf32>
    %80 = arith.mulf %73, %79 : vector<2x32xf32>
    %81 = arith.addf %78, %80 : vector<2x32xf32>
    %82 = arith.index_cast %c1_i32 : i32 to index
    %c0_32 = arith.constant 0 : index
    %c0_33 = arith.constant 0 : index
    %83 = vector.load %arg6[%82, %c0_32, %c0_33] : memref<8x2x32xf32, #tpu.memory_space<vmem>>, vector<1x2x32xf32>
    %84 = vector.shape_cast %83 : vector<1x2x32xf32> to vector<2x32xf32>
    %85 = vector.shape_cast %81 : vector<2x32xf32> to vector<1x2x32xf32>
    tpu.vector_store %arg6[%82, %c0_32, %c0_33], %85 {strides = array<i32>} : memref<8x2x32xf32, #tpu.memory_space<vmem>>, vector<1x2x32xf32>,
    %c2_i32 = arith.constant 2 : i32
    %86 = arith.index_cast %c2_i32 : i32 to index
    %c0_34 = arith.constant 0 : index
    %c0_35 = arith.constant 0 : index
    %87 = vector.load %arg1[%86, %c0_34, %c0_35] : memref<8x2x16xf32, #tpu.memory_space<vmem>>, vector<1x2x16xf32>
    %88 = vector.shape_cast %87 : vector<1x2x16xf32> to vector<2x16xf32>
    %c0_36 = arith.constant 0 : index
    %c0_37 = arith.constant 0 : index
    %89 = vector.load %arg2[%c0_36, %c0_37] : memref<16x96xf32, #tpu.memory_space<vmem>>, vector<16x96xf32>
    %cst_38 = arith.constant dense<0.000000e+00> : vector<2x96xf32>
    %90 = tpu.matmul %88, %89, %cst_38 {dimension_numbers = #tpu.dot_dimension_numbers<[1], [0], [0], [1], [0, 0, 1, 1], [], []>} : vector<2x16xf32>, vector<16x96xf32>, vector<2x96xf32> -> vector<2x96xf32>
    %c0_39 = arith.constant 0 : index
    %c0_40 = arith.constant 0 : index
    %91 = vector.load %arg3[%c0_39, %c0_40] : memref<1x96xf32, #tpu.memory_space<vmem>>, vector<1x96xf32>
    %92 = vector.broadcast %91 : vector<1x96xf32> to vector<2x96xf32>
    %93 = arith.addf %90, %92 : vector<2x96xf32>
    %c0_41 = arith.constant 0 : index
    %c0_42 = arith.constant 0 : index
    %94 = vector.load %arg4[%c0_41, %c0_42] : memref<32x96xf32, #tpu.memory_space<vmem>>, vector<32x96xf32>
    %cst_43 = arith.constant dense<0.000000e+00> : vector<2x96xf32>
    %95 = tpu.matmul %81, %94, %cst_43 {dimension_numbers = #tpu.dot_dimension_numbers<[1], [0], [0], [1], [0, 0, 1, 1], [], []>} : vector<2x32xf32>, vector<32x96xf32>, vector<2x96xf32> -> vector<2x96xf32>
    %c0_44 = arith.constant 0 : index
    %c0_45 = arith.constant 0 : index
    %96 = vector.load %arg5[%c0_44, %c0_45] : memref<1x96xf32, #tpu.memory_space<vmem>>, vector<1x96xf32>
    %97 = vector.broadcast %96 : vector<1x96xf32> to vector<2x96xf32>
    %98 = arith.addf %95, %97 : vector<2x96xf32>
    %99 = vector.extract_strided_slice %93 {offsets = [0, 0], sizes = [2, 32], strides = [1, 1]} : vector<2x96xf32> to vector<2x32xf32>
    %100 = vector.extract_strided_slice %98 {offsets = [0, 0], sizes = [2, 32], strides = [1, 1]} : vector<2x96xf32> to vector<2x32xf32>
    %101 = arith.addf %99, %100 : vector<2x32xf32>
    %102 = arith.negf %101 : vector<2x32xf32>
    %103 = math.exp %102 : vector<2x32xf32>
    %cst_46 = arith.constant 1.000000e+00 : f32
    %104 = vector.broadcast %cst_46 : f32 to vector<2x32xf32>
    %105 = arith.addf %104, %103 : vector<2x32xf32>
    %106 = arith.divf %104, %105 : vector<2x32xf32>
    %107 = vector.extract_strided_slice %93 {offsets = [0, 32], sizes = [2, 32], strides = [1, 1]} : vector<2x96xf32> to vector<2x32xf32>
    %108 = vector.extract_strided_slice %98 {offsets = [0, 32], sizes = [2, 32], strides = [1, 1]} : vector<2x96xf32> to vector<2x32xf32>
    %109 = arith.addf %107, %108 : vector<2x32xf32>
    %110 = arith.negf %109 : vector<2x32xf32>
    %111 = math.exp %110 : vector<2x32xf32>
    %cst_47 = arith.constant 1.000000e+00 : f32
    %112 = vector.broadcast %cst_47 : f32 to vector<2x32xf32>
    %113 = arith.addf %112, %111 : vector<2x32xf32>
    %114 = arith.divf %112, %113 : vector<2x32xf32>
    %115 = vector.extract_strided_slice %93 {offsets = [0, 64], sizes = [2, 32], strides = [1, 1]} : vector<2x96xf32> to vector<2x32xf32>
    %116 = vector.extract_strided_slice %98 {offsets = [0, 64], sizes = [2, 32], strides = [1, 1]} : vector<2x96xf32> to vector<2x32xf32>
    %117 = arith.mulf %106, %116 : vector<2x32xf32>
    %118 = arith.addf %115, %117 : vector<2x32xf32>
    %119 = math.tanh %118 : vector<2x32xf32>
    %120 = arith.subf %81, %119 : vector<2x32xf32>
    %121 = arith.mulf %114, %120 : vector<2x32xf32>
    %122 = arith.addf %119, %121 : vector<2x32xf32>
    %123 = arith.index_cast %c2_i32 : i32 to index
    %c0_48 = arith.constant 0 : index
    %c0_49 = arith.constant 0 : index
    %124 = vector.load %arg6[%123, %c0_48, %c0_49] : memref<8x2x32xf32, #tpu.memory_space<vmem>>, vector<1x2x32xf32>
    %125 = vector.shape_cast %124 : vector<1x2x32xf32> to vector<2x32xf32>
    %126 = vector.shape_cast %122 : vector<2x32xf32> to vector<1x2x32xf32>
    tpu.vector_store %arg6[%123, %c0_48, %c0_49], %126 {strides = array<i32>} : memref<8x2x32xf32, #tpu.memory_space<vmem>>, vector<1x2x32xf32>,
    %c3_i32 = arith.constant 3 : i32
    %127 = arith.index_cast %c3_i32 : i32 to index
    %c0_50 = arith.constant 0 : index
    %c0_51 = arith.constant 0 : index
    %128 = vector.load %arg1[%127, %c0_50, %c0_51] : memref<8x2x16xf32, #tpu.memory_space<vmem>>, vector<1x2x16xf32>
    %129 = vector.shape_cast %128 : vector<1x2x16xf32> to vector<2x16xf32>
    %c0_52 = arith.constant 0 : index
    %c0_53 = arith.constant 0 : index
    %130 = vector.load %arg2[%c0_52, %c0_53] : memref<16x96xf32, #tpu.memory_space<vmem>>, vector<16x96xf32>
    %cst_54 = arith.constant dense<0.000000e+00> : vector<2x96xf32>
    %131 = tpu.matmul %129, %130, %cst_54 {dimension_numbers = #tpu.dot_dimension_numbers<[1], [0], [0], [1], [0, 0, 1, 1], [], []>} : vector<2x16xf32>, vector<16x96xf32>, vector<2x96xf32> -> vector<2x96xf32>
    %c0_55 = arith.constant 0 : index
    %c0_56 = arith.constant 0 : index
    %132 = vector.load %arg3[%c0_55, %c0_56] : memref<1x96xf32, #tpu.memory_space<vmem>>, vector<1x96xf32>
    %133 = vector.broadcast %132 : vector<1x96xf32> to vector<2x96xf32>
    %134 = arith.addf %131, %133 : vector<2x96xf32>
    %c0_57 = arith.constant 0 : index
    %c0_58 = arith.constant 0 : index
    %135 = vector.load %arg4[%c0_57, %c0_58] : memref<32x96xf32, #tpu.memory_space<vmem>>, vector<32x96xf32>
    %cst_59 = arith.constant dense<0.000000e+00> : vector<2x96xf32>
    %136 = tpu.matmul %122, %135, %cst_59 {dimension_numbers = #tpu.dot_dimension_numbers<[1], [0], [0], [1], [0, 0, 1, 1], [], []>} : vector<2x32xf32>, vector<32x96xf32>, vector<2x96xf32> -> vector<2x96xf32>
    %c0_60 = arith.constant 0 : index
    %c0_61 = arith.constant 0 : index
    %137 = vector.load %arg5[%c0_60, %c0_61] : memref<1x96xf32, #tpu.memory_space<vmem>>, vector<1x96xf32>
    %138 = vector.broadcast %137 : vector<1x96xf32> to vector<2x96xf32>
    %139 = arith.addf %136, %138 : vector<2x96xf32>
    %140 = vector.extract_strided_slice %134 {offsets = [0, 0], sizes = [2, 32], strides = [1, 1]} : vector<2x96xf32> to vector<2x32xf32>
    %141 = vector.extract_strided_slice %139 {offsets = [0, 0], sizes = [2, 32], strides = [1, 1]} : vector<2x96xf32> to vector<2x32xf32>
    %142 = arith.addf %140, %141 : vector<2x32xf32>
    %143 = arith.negf %142 : vector<2x32xf32>
    %144 = math.exp %143 : vector<2x32xf32>
    %cst_62 = arith.constant 1.000000e+00 : f32
    %145 = vector.broadcast %cst_62 : f32 to vector<2x32xf32>
    %146 = arith.addf %145, %144 : vector<2x32xf32>
    %147 = arith.divf %145, %146 : vector<2x32xf32>
    %148 = vector.extract_strided_slice %134 {offsets = [0, 32], sizes = [2, 32], strides = [1, 1]} : vector<2x96xf32> to vector<2x32xf32>
    %149 = vector.extract_strided_slice %139 {offsets = [0, 32], sizes = [2, 32], strides = [1, 1]} : vector<2x96xf32> to vector<2x32xf32>
    %150 = arith.addf %148, %149 : vector<2x32xf32>
    %151 = arith.negf %150 : vector<2x32xf32>
    %152 = math.exp %151 : vector<2x32xf32>
    %cst_63 = arith.constant 1.000000e+00 : f32
    %153 = vector.broadcast %cst_63 : f32 to vector<2x32xf32>
    %154 = arith.addf %153, %152 : vector<2x32xf32>
    %155 = arith.divf %153, %154 : vector<2x32xf32>
    %156 = vector.extract_strided_slice %134 {offsets = [0, 64], sizes = [2, 32], strides = [1, 1]} : vector<2x96xf32> to vector<2x32xf32>
    %157 = vector.extract_strided_slice %139 {offsets = [0, 64], sizes = [2, 32], strides = [1, 1]} : vector<2x96xf32> to vector<2x32xf32>
    %158 = arith.mulf %147, %157 : vector<2x32xf32>
    %159 = arith.addf %156, %158 : vector<2x32xf32>
    %160 = math.tanh %159 : vector<2x32xf32>
    %161 = arith.subf %122, %160 : vector<2x32xf32>
    %162 = arith.mulf %155, %161 : vector<2x32xf32>
    %163 = arith.addf %160, %162 : vector<2x32xf32>
    %164 = arith.index_cast %c3_i32 : i32 to index
    %c0_64 = arith.constant 0 : index
    %c0_65 = arith.constant 0 : index
    %165 = vector.load %arg6[%164, %c0_64, %c0_65] : memref<8x2x32xf32, #tpu.memory_space<vmem>>, vector<1x2x32xf32>
    %166 = vector.shape_cast %165 : vector<1x2x32xf32> to vector<2x32xf32>
    %167 = vector.shape_cast %163 : vector<2x32xf32> to vector<1x2x32xf32>
    tpu.vector_store %arg6[%164, %c0_64, %c0_65], %167 {strides = array<i32>} : memref<8x2x32xf32, #tpu.memory_space<vmem>>, vector<1x2x32xf32>,
    %c4_i32 = arith.constant 4 : i32
    %168 = arith.index_cast %c4_i32 : i32 to index
    %c0_66 = arith.constant 0 : index
    %c0_67 = arith.constant 0 : index
    %169 = vector.load %arg1[%168, %c0_66, %c0_67] : memref<8x2x16xf32, #tpu.memory_space<vmem>>, vector<1x2x16xf32>
    %170 = vector.shape_cast %169 : vector<1x2x16xf32> to vector<2x16xf32>
    %c0_68 = arith.constant 0 : index
    %c0_69 = arith.constant 0 : index
    %171 = vector.load %arg2[%c0_68, %c0_69] : memref<16x96xf32, #tpu.memory_space<vmem>>, vector<16x96xf32>
    %cst_70 = arith.constant dense<0.000000e+00> : vector<2x96xf32>
    %172 = tpu.matmul %170, %171, %cst_70 {dimension_numbers = #tpu.dot_dimension_numbers<[1], [0], [0], [1], [0, 0, 1, 1], [], []>} : vector<2x16xf32>, vector<16x96xf32>, vector<2x96xf32> -> vector<2x96xf32>
    %c0_71 = arith.constant 0 : index
    %c0_72 = arith.constant 0 : index
    %173 = vector.load %arg3[%c0_71, %c0_72] : memref<1x96xf32, #tpu.memory_space<vmem>>, vector<1x96xf32>
    %174 = vector.broadcast %173 : vector<1x96xf32> to vector<2x96xf32>
    %175 = arith.addf %172, %174 : vector<2x96xf32>
    %c0_73 = arith.constant 0 : index
    %c0_74 = arith.constant 0 : index
    %176 = vector.load %arg4[%c0_73, %c0_74] : memref<32x96xf32, #tpu.memory_space<vmem>>, vector<32x96xf32>
    %cst_75 = arith.constant dense<0.000000e+00> : vector<2x96xf32>
    %177 = tpu.matmul %163, %176, %cst_75 {dimension_numbers = #tpu.dot_dimension_numbers<[1], [0], [0], [1], [0, 0, 1, 1], [], []>} : vector<2x32xf32>, vector<32x96xf32>, vector<2x96xf32> -> vector<2x96xf32>
    %c0_76 = arith.constant 0 : index
    %c0_77 = arith.constant 0 : index
    %178 = vector.load %arg5[%c0_76, %c0_77] : memref<1x96xf32, #tpu.memory_space<vmem>>, vector<1x96xf32>
    %179 = vector.broadcast %178 : vector<1x96xf32> to vector<2x96xf32>
    %180 = arith.addf %177, %179 : vector<2x96xf32>
    %181 = vector.extract_strided_slice %175 {offsets = [0, 0], sizes = [2, 32], strides = [1, 1]} : vector<2x96xf32> to vector<2x32xf32>
    %182 = vector.extract_strided_slice %180 {offsets = [0, 0], sizes = [2, 32], strides = [1, 1]} : vector<2x96xf32> to vector<2x32xf32>
    %183 = arith.addf %181, %182 : vector<2x32xf32>
    %184 = arith.negf %183 : vector<2x32xf32>
    %185 = math.exp %184 : vector<2x32xf32>
    %cst_78 = arith.constant 1.000000e+00 : f32
    %186 = vector.broadcast %cst_78 : f32 to vector<2x32xf32>
    %187 = arith.addf %186, %185 : vector<2x32xf32>
    %188 = arith.divf %186, %187 : vector<2x32xf32>
    %189 = vector.extract_strided_slice %175 {offsets = [0, 32], sizes = [2, 32], strides = [1, 1]} : vector<2x96xf32> to vector<2x32xf32>
    %190 = vector.extract_strided_slice %180 {offsets = [0, 32], sizes = [2, 32], strides = [1, 1]} : vector<2x96xf32> to vector<2x32xf32>
    %191 = arith.addf %189, %190 : vector<2x32xf32>
    %192 = arith.negf %191 : vector<2x32xf32>
    %193 = math.exp %192 : vector<2x32xf32>
    %cst_79 = arith.constant 1.000000e+00 : f32
    %194 = vector.broadcast %cst_79 : f32 to vector<2x32xf32>
    %195 = arith.addf %194, %193 : vector<2x32xf32>
    %196 = arith.divf %194, %195 : vector<2x32xf32>
    %197 = vector.extract_strided_slice %175 {offsets = [0, 64], sizes = [2, 32], strides = [1, 1]} : vector<2x96xf32> to vector<2x32xf32>
    %198 = vector.extract_strided_slice %180 {offsets = [0, 64], sizes = [2, 32], strides = [1, 1]} : vector<2x96xf32> to vector<2x32xf32>
    %199 = arith.mulf %188, %198 : vector<2x32xf32>
    %200 = arith.addf %197, %199 : vector<2x32xf32>
    %201 = math.tanh %200 : vector<2x32xf32>
    %202 = arith.subf %163, %201 : vector<2x32xf32>
    %203 = arith.mulf %196, %202 : vector<2x32xf32>
    %204 = arith.addf %201, %203 : vector<2x32xf32>
    %205 = arith.index_cast %c4_i32 : i32 to index
    %c0_80 = arith.constant 0 : index
    %c0_81 = arith.constant 0 : index
    %206 = vector.load %arg6[%205, %c0_80, %c0_81] : memref<8x2x32xf32, #tpu.memory_space<vmem>>, vector<1x2x32xf32>
    %207 = vector.shape_cast %206 : vector<1x2x32xf32> to vector<2x32xf32>
    %208 = vector.shape_cast %204 : vector<2x32xf32> to vector<1x2x32xf32>
    tpu.vector_store %arg6[%205, %c0_80, %c0_81], %208 {strides = array<i32>} : memref<8x2x32xf32, #tpu.memory_space<vmem>>, vector<1x2x32xf32>,
    %c5_i32 = arith.constant 5 : i32
    %209 = arith.index_cast %c5_i32 : i32 to index
    %c0_82 = arith.constant 0 : index
    %c0_83 = arith.constant 0 : index
    %210 = vector.load %arg1[%209, %c0_82, %c0_83] : memref<8x2x16xf32, #tpu.memory_space<vmem>>, vector<1x2x16xf32>
    %211 = vector.shape_cast %210 : vector<1x2x16xf32> to vector<2x16xf32>
    %c0_84 = arith.constant 0 : index
    %c0_85 = arith.constant 0 : index
    %212 = vector.load %arg2[%c0_84, %c0_85] : memref<16x96xf32, #tpu.memory_space<vmem>>, vector<16x96xf32>
    %cst_86 = arith.constant dense<0.000000e+00> : vector<2x96xf32>
    %213 = tpu.matmul %211, %212, %cst_86 {dimension_numbers = #tpu.dot_dimension_numbers<[1], [0], [0], [1], [0, 0, 1, 1], [], []>} : vector<2x16xf32>, vector<16x96xf32>, vector<2x96xf32> -> vector<2x96xf32>
    %c0_87 = arith.constant 0 : index
    %c0_88 = arith.constant 0 : index
    %214 = vector.load %arg3[%c0_87, %c0_88] : memref<1x96xf32, #tpu.memory_space<vmem>>, vector<1x96xf32>
    %215 = vector.broadcast %214 : vector<1x96xf32> to vector<2x96xf32>
    %216 = arith.addf %213, %215 : vector<2x96xf32>
    %c0_89 = arith.constant 0 : index
    %c0_90 = arith.constant 0 : index
    %217 = vector.load %arg4[%c0_89, %c0_90] : memref<32x96xf32, #tpu.memory_space<vmem>>, vector<32x96xf32>
    %cst_91 = arith.constant dense<0.000000e+00> : vector<2x96xf32>
    %218 = tpu.matmul %204, %217, %cst_91 {dimension_numbers = #tpu.dot_dimension_numbers<[1], [0], [0], [1], [0, 0, 1, 1], [], []>} : vector<2x32xf32>, vector<32x96xf32>, vector<2x96xf32> -> vector<2x96xf32>
    %c0_92 = arith.constant 0 : index
    %c0_93 = arith.constant 0 : index
    %219 = vector.load %arg5[%c0_92, %c0_93] : memref<1x96xf32, #tpu.memory_space<vmem>>, vector<1x96xf32>
    %220 = vector.broadcast %219 : vector<1x96xf32> to vector<2x96xf32>
    %221 = arith.addf %218, %220 : vector<2x96xf32>
    %222 = vector.extract_strided_slice %216 {offsets = [0, 0], sizes = [2, 32], strides = [1, 1]} : vector<2x96xf32> to vector<2x32xf32>
    %223 = vector.extract_strided_slice %221 {offsets = [0, 0], sizes = [2, 32], strides = [1, 1]} : vector<2x96xf32> to vector<2x32xf32>
    %224 = arith.addf %222, %223 : vector<2x32xf32>
    %225 = arith.negf %224 : vector<2x32xf32>
    %226 = math.exp %225 : vector<2x32xf32>
    %cst_94 = arith.constant 1.000000e+00 : f32
    %227 = vector.broadcast %cst_94 : f32 to vector<2x32xf32>
    %228 = arith.addf %227, %226 : vector<2x32xf32>
    %229 = arith.divf %227, %228 : vector<2x32xf32>
    %230 = vector.extract_strided_slice %216 {offsets = [0, 32], sizes = [2, 32], strides = [1, 1]} : vector<2x96xf32> to vector<2x32xf32>
    %231 = vector.extract_strided_slice %221 {offsets = [0, 32], sizes = [2, 32], strides = [1, 1]} : vector<2x96xf32> to vector<2x32xf32>
    %232 = arith.addf %230, %231 : vector<2x32xf32>
    %233 = arith.negf %232 : vector<2x32xf32>
    %234 = math.exp %233 : vector<2x32xf32>
    %cst_95 = arith.constant 1.000000e+00 : f32
    %235 = vector.broadcast %cst_95 : f32 to vector<2x32xf32>
    %236 = arith.addf %235, %234 : vector<2x32xf32>
    %237 = arith.divf %235, %236 : vector<2x32xf32>
    %238 = vector.extract_strided_slice %216 {offsets = [0, 64], sizes = [2, 32], strides = [1, 1]} : vector<2x96xf32> to vector<2x32xf32>
    %239 = vector.extract_strided_slice %221 {offsets = [0, 64], sizes = [2, 32], strides = [1, 1]} : vector<2x96xf32> to vector<2x32xf32>
    %240 = arith.mulf %229, %239 : vector<2x32xf32>
    %241 = arith.addf %238, %240 : vector<2x32xf32>
    %242 = math.tanh %241 : vector<2x32xf32>
    %243 = arith.subf %204, %242 : vector<2x32xf32>
    %244 = arith.mulf %237, %243 : vector<2x32xf32>
    %245 = arith.addf %242, %244 : vector<2x32xf32>
    %246 = arith.index_cast %c5_i32 : i32 to index
    %c0_96 = arith.constant 0 : index
    %c0_97 = arith.constant 0 : index
    %247 = vector.load %arg6[%246, %c0_96, %c0_97] : memref<8x2x32xf32, #tpu.memory_space<vmem>>, vector<1x2x32xf32>
    %248 = vector.shape_cast %247 : vector<1x2x32xf32> to vector<2x32xf32>
    %249 = vector.shape_cast %245 : vector<2x32xf32> to vector<1x2x32xf32>
    tpu.vector_store %arg6[%246, %c0_96, %c0_97], %249 {strides = array<i32>} : memref<8x2x32xf32, #tpu.memory_space<vmem>>, vector<1x2x32xf32>,
    %c6_i32 = arith.constant 6 : i32
    %250 = arith.index_cast %c6_i32 : i32 to index
    %c0_98 = arith.constant 0 : index
    %c0_99 = arith.constant 0 : index
    %251 = vector.load %arg1[%250, %c0_98, %c0_99] : memref<8x2x16xf32, #tpu.memory_space<vmem>>, vector<1x2x16xf32>
    %252 = vector.shape_cast %251 : vector<1x2x16xf32> to vector<2x16xf32>
    %c0_100 = arith.constant 0 : index
    %c0_101 = arith.constant 0 : index
    %253 = vector.load %arg2[%c0_100, %c0_101] : memref<16x96xf32, #tpu.memory_space<vmem>>, vector<16x96xf32>
    %cst_102 = arith.constant dense<0.000000e+00> : vector<2x96xf32>
    %254 = tpu.matmul %252, %253, %cst_102 {dimension_numbers = #tpu.dot_dimension_numbers<[1], [0], [0], [1], [0, 0, 1, 1], [], []>} : vector<2x16xf32>, vector<16x96xf32>, vector<2x96xf32> -> vector<2x96xf32>
    %c0_103 = arith.constant 0 : index
    %c0_104 = arith.constant 0 : index
    %255 = vector.load %arg3[%c0_103, %c0_104] : memref<1x96xf32, #tpu.memory_space<vmem>>, vector<1x96xf32>
    %256 = vector.broadcast %255 : vector<1x96xf32> to vector<2x96xf32>
    %257 = arith.addf %254, %256 : vector<2x96xf32>
    %c0_105 = arith.constant 0 : index
    %c0_106 = arith.constant 0 : index
    %258 = vector.load %arg4[%c0_105, %c0_106] : memref<32x96xf32, #tpu.memory_space<vmem>>, vector<32x96xf32>
    %cst_107 = arith.constant dense<0.000000e+00> : vector<2x96xf32>
    %259 = tpu.matmul %245, %258, %cst_107 {dimension_numbers = #tpu.dot_dimension_numbers<[1], [0], [0], [1], [0, 0, 1, 1], [], []>} : vector<2x32xf32>, vector<32x96xf32>, vector<2x96xf32> -> vector<2x96xf32>
    %c0_108 = arith.constant 0 : index
    %c0_109 = arith.constant 0 : index
    %260 = vector.load %arg5[%c0_108, %c0_109] : memref<1x96xf32, #tpu.memory_space<vmem>>, vector<1x96xf32>
    %261 = vector.broadcast %260 : vector<1x96xf32> to vector<2x96xf32>
    %262 = arith.addf %259, %261 : vector<2x96xf32>
    %263 = vector.extract_strided_slice %257 {offsets = [0, 0], sizes = [2, 32], strides = [1, 1]} : vector<2x96xf32> to vector<2x32xf32>
    %264 = vector.extract_strided_slice %262 {offsets = [0, 0], sizes = [2, 32], strides = [1, 1]} : vector<2x96xf32> to vector<2x32xf32>
    %265 = arith.addf %263, %264 : vector<2x32xf32>
    %266 = arith.negf %265 : vector<2x32xf32>
    %267 = math.exp %266 : vector<2x32xf32>
    %cst_110 = arith.constant 1.000000e+00 : f32
    %268 = vector.broadcast %cst_110 : f32 to vector<2x32xf32>
    %269 = arith.addf %268, %267 : vector<2x32xf32>
    %270 = arith.divf %268, %269 : vector<2x32xf32>
    %271 = vector.extract_strided_slice %257 {offsets = [0, 32], sizes = [2, 32], strides = [1, 1]} : vector<2x96xf32> to vector<2x32xf32>
    %272 = vector.extract_strided_slice %262 {offsets = [0, 32], sizes = [2, 32], strides = [1, 1]} : vector<2x96xf32> to vector<2x32xf32>
    %273 = arith.addf %271, %272 : vector<2x32xf32>
    %274 = arith.negf %273 : vector<2x32xf32>
    %275 = math.exp %274 : vector<2x32xf32>
    %cst_111 = arith.constant 1.000000e+00 : f32
    %276 = vector.broadcast %cst_111 : f32 to vector<2x32xf32>
    %277 = arith.addf %276, %275 : vector<2x32xf32>
    %278 = arith.divf %276, %277 : vector<2x32xf32>
    %279 = vector.extract_strided_slice %257 {offsets = [0, 64], sizes = [2, 32], strides = [1, 1]} : vector<2x96xf32> to vector<2x32xf32>
    %280 = vector.extract_strided_slice %262 {offsets = [0, 64], sizes = [2, 32], strides = [1, 1]} : vector<2x96xf32> to vector<2x32xf32>
    %281 = arith.mulf %270, %280 : vector<2x32xf32>
    %282 = arith.addf %279, %281 : vector<2x32xf32>
    %283 = math.tanh %282 : vector<2x32xf32>
    %284 = arith.subf %245, %283 : vector<2x32xf32>
    %285 = arith.mulf %278, %284 : vector<2x32xf32>
    %286 = arith.addf %283, %285 : vector<2x32xf32>
    %287 = arith.index_cast %c6_i32 : i32 to index
    %c0_112 = arith.constant 0 : index
    %c0_113 = arith.constant 0 : index
    %288 = vector.load %arg6[%287, %c0_112, %c0_113] : memref<8x2x32xf32, #tpu.memory_space<vmem>>, vector<1x2x32xf32>
    %289 = vector.shape_cast %288 : vector<1x2x32xf32> to vector<2x32xf32>
    %290 = vector.shape_cast %286 : vector<2x32xf32> to vector<1x2x32xf32>
    tpu.vector_store %arg6[%287, %c0_112, %c0_113], %290 {strides = array<i32>} : memref<8x2x32xf32, #tpu.memory_space<vmem>>, vector<1x2x32xf32>,
    %c7_i32 = arith.constant 7 : i32
    %291 = arith.index_cast %c7_i32 : i32 to index
    %c0_114 = arith.constant 0 : index
    %c0_115 = arith.constant 0 : index
    %292 = vector.load %arg1[%291, %c0_114, %c0_115] : memref<8x2x16xf32, #tpu.memory_space<vmem>>, vector<1x2x16xf32>
    %293 = vector.shape_cast %292 : vector<1x2x16xf32> to vector<2x16xf32>
    %c0_116 = arith.constant 0 : index
    %c0_117 = arith.constant 0 : index
    %294 = vector.load %arg2[%c0_116, %c0_117] : memref<16x96xf32, #tpu.memory_space<vmem>>, vector<16x96xf32>
    %cst_118 = arith.constant dense<0.000000e+00> : vector<2x96xf32>
    %295 = tpu.matmul %293, %294, %cst_118 {dimension_numbers = #tpu.dot_dimension_numbers<[1], [0], [0], [1], [0, 0, 1, 1], [], []>} : vector<2x16xf32>, vector<16x96xf32>, vector<2x96xf32> -> vector<2x96xf32>
    %c0_119 = arith.constant 0 : index
    %c0_120 = arith.constant 0 : index
    %296 = vector.load %arg3[%c0_119, %c0_120] : memref<1x96xf32, #tpu.memory_space<vmem>>, vector<1x96xf32>
    %297 = vector.broadcast %296 : vector<1x96xf32> to vector<2x96xf32>
    %298 = arith.addf %295, %297 : vector<2x96xf32>
    %c0_121 = arith.constant 0 : index
    %c0_122 = arith.constant 0 : index
    %299 = vector.load %arg4[%c0_121, %c0_122] : memref<32x96xf32, #tpu.memory_space<vmem>>, vector<32x96xf32>
    %cst_123 = arith.constant dense<0.000000e+00> : vector<2x96xf32>
    %300 = tpu.matmul %286, %299, %cst_123 {dimension_numbers = #tpu.dot_dimension_numbers<[1], [0], [0], [1], [0, 0, 1, 1], [], []>} : vector<2x32xf32>, vector<32x96xf32>, vector<2x96xf32> -> vector<2x96xf32>
    %c0_124 = arith.constant 0 : index
    %c0_125 = arith.constant 0 : index
    %301 = vector.load %arg5[%c0_124, %c0_125] : memref<1x96xf32, #tpu.memory_space<vmem>>, vector<1x96xf32>
    %302 = vector.broadcast %301 : vector<1x96xf32> to vector<2x96xf32>
    %303 = arith.addf %300, %302 : vector<2x96xf32>
    %304 = vector.extract_strided_slice %298 {offsets = [0, 0], sizes = [2, 32], strides = [1, 1]} : vector<2x96xf32> to vector<2x32xf32>
    %305 = vector.extract_strided_slice %303 {offsets = [0, 0], sizes = [2, 32], strides = [1, 1]} : vector<2x96xf32> to vector<2x32xf32>
    %306 = arith.addf %304, %305 : vector<2x32xf32>
    %307 = arith.negf %306 : vector<2x32xf32>
    %308 = math.exp %307 : vector<2x32xf32>
    %cst_126 = arith.constant 1.000000e+00 : f32
    %309 = vector.broadcast %cst_126 : f32 to vector<2x32xf32>
    %310 = arith.addf %309, %308 : vector<2x32xf32>
    %311 = arith.divf %309, %310 : vector<2x32xf32>
    %312 = vector.extract_strided_slice %298 {offsets = [0, 32], sizes = [2, 32], strides = [1, 1]} : vector<2x96xf32> to vector<2x32xf32>
    %313 = vector.extract_strided_slice %303 {offsets = [0, 32], sizes = [2, 32], strides = [1, 1]} : vector<2x96xf32> to vector<2x32xf32>
    %314 = arith.addf %312, %313 : vector<2x32xf32>
    %315 = arith.negf %314 : vector<2x32xf32>
    %316 = math.exp %315 : vector<2x32xf32>
    %cst_127 = arith.constant 1.000000e+00 : f32
    %317 = vector.broadcast %cst_127 : f32 to vector<2x32xf32>
    %318 = arith.addf %317, %316 : vector<2x32xf32>
    %319 = arith.divf %317, %318 : vector<2x32xf32>
    %320 = vector.extract_strided_slice %298 {offsets = [0, 64], sizes = [2, 32], strides = [1, 1]} : vector<2x96xf32> to vector<2x32xf32>
    %321 = vector.extract_strided_slice %303 {offsets = [0, 64], sizes = [2, 32], strides = [1, 1]} : vector<2x96xf32> to vector<2x32xf32>
    %322 = arith.mulf %311, %321 : vector<2x32xf32>
    %323 = arith.addf %320, %322 : vector<2x32xf32>
    %324 = math.tanh %323 : vector<2x32xf32>
    %325 = arith.subf %286, %324 : vector<2x32xf32>
    %326 = arith.mulf %319, %325 : vector<2x32xf32>
    %327 = arith.addf %324, %326 : vector<2x32xf32>
    %328 = arith.index_cast %c7_i32 : i32 to index
    %c0_128 = arith.constant 0 : index
    %c0_129 = arith.constant 0 : index
    %329 = vector.load %arg6[%328, %c0_128, %c0_129] : memref<8x2x32xf32, #tpu.memory_space<vmem>>, vector<1x2x32xf32>
    %330 = vector.shape_cast %329 : vector<1x2x32xf32> to vector<2x32xf32>
    %331 = vector.shape_cast %327 : vector<2x32xf32> to vector<1x2x32xf32>
    tpu.vector_store %arg6[%328, %c0_128, %c0_129], %331 {strides = array<i32>} : memref<8x2x32xf32, #tpu.memory_space<vmem>>, vector<1x2x32xf32>,
    %c8_i32 = arith.constant 8 : i32
    %c0_130 = arith.constant 0 : index
    %c0_131 = arith.constant 0 : index
    %332 = vector.load %arg7[%c0_130, %c0_131] : memref<2x32xf32, #tpu.memory_space<vmem>>, vector<2x32xf32>
    tpu.vector_store %arg7[%c0_130, %c0_131], %327 {strides = array<i32>} : memref<2x32xf32, #tpu.memory_space<vmem>>, vector<2x32xf32>,
    return
  }
  func.func @transform_0(%arg0: i32) -> (i32, i32, i32) {
    %c0_i32 = arith.constant 0 : i32
    %c0_i32_0 = arith.constant 0 : i32
    %c0_i32_1 = arith.constant 0 : i32
    return %arg0, %c0_i32, %c0_i32_0 : i32, i32, i32
  }
  func.func @transform_1(%arg0: i32) -> (i32, i32) {
    %c0_i32 = arith.constant 0 : i32
    %c0_i32_0 = arith.constant 0 : i32
    %c0_i32_1 = arith.constant 0 : i32
    return %c0_i32, %c0_i32_0 : i32, i32
  }
  func.func @transform_2(%arg0: i32) -> (i32, i32) {
    %c0_i32 = arith.constant 0 : i32
    %c0_i32_0 = arith.constant 0 : i32
    %c0_i32_1 = arith.constant 0 : i32
    return %c0_i32, %c0_i32_0 : i32, i32
  }
  func.func @transform_3(%arg0: i32) -> (i32, i32) {
    %c0_i32 = arith.constant 0 : i32
    %c0_i32_0 = arith.constant 0 : i32
    %c0_i32_1 = arith.constant 0 : i32
    return %c0_i32, %c0_i32_0 : i32, i32
  }
  func.func @transform_4(%arg0: i32) -> (i32, i32) {
    %c0_i32 = arith.constant 0 : i32
    %c0_i32_0 = arith.constant 0 : i32
    %c0_i32_1 = arith.constant 0 : i32
    return %c0_i32, %c0_i32_0 : i32, i32
  }
  func.func @transform_5(%arg0: i32) -> (i32, i32, i32) {
    %c0_i32 = arith.constant 0 : i32
    %c0_i32_0 = arith.constant 0 : i32
    %c0_i32_1 = arith.constant 0 : i32
    return %arg0, %c0_i32, %c0_i32_0 : i32, i32, i32
  }
}

module attributes {stable_mosaic.version = 11 : i64} {
  func.func @_linear_kernel(%arg0: i32, %arg1: i32, %arg2: memref<16x32xf32, #tpu.memory_space<vmem>>, %arg3: memref<32x16xf32, #tpu.memory_space<vmem>>, %arg4: memref<1x16xf32, #tpu.memory_space<vmem>>, %arg5: memref<16x16xf32, #tpu.memory_space<vmem>>) attributes {dimension_semantics = [#tpu.dimension_semantics<parallel>, #tpu.dimension_semantics<parallel>], iteration_bounds = array<i64: 1, 1>, scalar_prefetch = 0 : i64, scratch_operands = 0 : i64, tpu.core_type = #tpu.core_type<tc>, window_params = [{transform_indices = @transform_0, window_bounds = array<i64: 16, 32>}, {transform_indices = @transform_1, window_bounds = array<i64: 32, 16>}, {transform_indices = @transform_2, window_bounds = array<i64: 1, 16>}, {transform_indices = @transform_3, window_bounds = array<i64: 16, 16>}]} {
    %c0 = arith.constant 0 : index
    %c0_0 = arith.constant 0 : index
    %0 = vector.load %arg2[%c0, %c0_0] : memref<16x32xf32, #tpu.memory_space<vmem>>, vector<16x32xf32>
    %c0_1 = arith.constant 0 : index
    %c0_2 = arith.constant 0 : index
    %1 = vector.load %arg3[%c0_1, %c0_2] : memref<32x16xf32, #tpu.memory_space<vmem>>, vector<32x16xf32>
    %cst = arith.constant dense<0.000000e+00> : vector<16x16xf32>
    %2 = tpu.matmul %0, %1, %cst {dimension_numbers = #tpu.dot_dimension_numbers<[1], [0], [0], [1], [0, 0, 1, 1], [], []>} : vector<16x32xf32>, vector<32x16xf32>, vector<16x16xf32> -> vector<16x16xf32>
    %c0_3 = arith.constant 0 : index
    %c0_4 = arith.constant 0 : index
    %3 = vector.load %arg4[%c0_3, %c0_4] : memref<1x16xf32, #tpu.memory_space<vmem>>, vector<1x16xf32>
    %4 = vector.broadcast %3 : vector<1x16xf32> to vector<16x16xf32>
    %5 = arith.addf %2, %4 : vector<16x16xf32>
    %cst_5 = arith.constant 0.000000e+00 : f32
    %6 = vector.broadcast %cst_5 : f32 to vector<16x16xf32>
    %7 = arith.maximumf %5, %6 : vector<16x16xf32>
    %c0_6 = arith.constant 0 : index
    %c0_7 = arith.constant 0 : index
    %8 = vector.load %arg5[%c0_6, %c0_7] : memref<16x16xf32, #tpu.memory_space<vmem>>, vector<16x16xf32>
    tpu.vector_store %arg5[%c0_6, %c0_7], %7 {strides = array<i32>} : memref<16x16xf32, #tpu.memory_space<vmem>>, vector<16x16xf32>,
    return
  }
  func.func @transform_0(%arg0: i32, %arg1: i32) -> (i32, i32) {
    %c0_i32 = arith.constant 0 : i32
    %c0_i32_0 = arith.constant 0 : i32
    return %arg0, %c0_i32 : i32, i32
  }
  func.func @transform_1(%arg0: i32, %arg1: i32) -> (i32, i32) {
    %c0_i32 = arith.constant 0 : i32
    %c0_i32_0 = arith.constant 0 : i32
    return %c0_i32, %arg1 : i32, i32
  }
  func.func @transform_2(%arg0: i32, %arg1: i32) -> (i32, i32) {
    %c0_i32 = arith.constant 0 : i32
    %c0_i32_0 = arith.constant 0 : i32
    return %c0_i32, %arg1 : i32, i32
  }
  func.func @transform_3(%arg0: i32, %arg1: i32) -> (i32, i32) {
    %c0_i32 = arith.constant 0 : i32
    return %arg0, %arg1 : i32, i32
  }
}

module attributes {stable_mosaic.version = 11 : i64} {
  func.func @_gru_layer_kernel(%arg0: i32, %arg1: memref<8x2x32xf32, #tpu.memory_space<vmem>>, %arg2: memref<32x96xf32, #tpu.memory_space<vmem>>, %arg3: memref<1x96xf32, #tpu.memory_space<vmem>>, %arg4: memref<32x96xf32, #tpu.memory_space<vmem>>, %arg5: memref<1x96xf32, #tpu.memory_space<vmem>>, %arg6: memref<8x2x32xf32, #tpu.memory_space<vmem>>, %arg7: memref<2x32xf32, #tpu.memory_space<vmem>>) attributes {dimension_semantics = [#tpu.dimension_semantics<arbitrary>], iteration_bounds = array<i64: 1>, scalar_prefetch = 0 : i64, scratch_operands = 1 : i64, tpu.core_type = #tpu.core_type<tc>, window_params = [{transform_indices = @transform_0, window_bounds = array<i64: 8, 2, 32>}, {pipeline_mode = #tpu.pipeline_mode<synchronous>, transform_indices = @transform_1, window_bounds = array<i64: 32, 96>}, {pipeline_mode = #tpu.pipeline_mode<synchronous>, transform_indices = @transform_2, window_bounds = array<i64: 1, 96>}, {pipeline_mode = #tpu.pipeline_mode<synchronous>, transform_indices = @transform_3, window_bounds = array<i64: 32, 96>}, {pipeline_mode = #tpu.pipeline_mode<synchronous>, transform_indices = @transform_4, window_bounds = array<i64: 1, 96>}, {transform_indices = @transform_5, window_bounds = array<i64: 8, 2, 32>}]} {
    %c0_i32 = arith.constant 0 : i32
    %0 = arith.cmpi eq, %arg0, %c0_i32 : i32
    %1 = arith.extui %0 : i1 to i32
    %c0_i32_0 = arith.constant 0 : i32
    %2 = arith.cmpi ne, %1, %c0_i32_0 : i32
    scf.if %2 {
      %cst_132 = arith.constant 0.000000e+00 : f32
      %333 = vector.broadcast %cst_132 : f32 to vector<2x32xf32>
      %c0_133 = arith.constant 0 : index
      %c0_134 = arith.constant 0 : index
      %334 = vector.load %arg7[%c0_133, %c0_134] : memref<2x32xf32, #tpu.memory_space<vmem>>, vector<2x32xf32>
      tpu.vector_store %arg7[%c0_133, %c0_134], %333 {strides = array<i32>} : memref<2x32xf32, #tpu.memory_space<vmem>>, vector<2x32xf32>,
    } else {
    }
    %c0 = arith.constant 0 : index
    %c0_1 = arith.constant 0 : index
    %3 = vector.load %arg7[%c0, %c0_1] : memref<2x32xf32, #tpu.memory_space<vmem>>, vector<2x32xf32>
    %c0_i32_2 = arith.constant 0 : i32
    %4 = arith.index_cast %c0_i32_2 : i32 to index
    %c0_3 = arith.constant 0 : index
    %c0_4 = arith.constant 0 : index
    %5 = vector.load %arg1[%4, %c0_3, %c0_4] : memref<8x2x32xf32, #tpu.memory_space<vmem>>, vector<1x2x32xf32>
    %6 = vector.shape_cast %5 : vector<1x2x32xf32> to vector<2x32xf32>
    %c0_5 = arith.constant 0 : index
    %c0_6 = arith.constant 0 : index
    %7 = vector.load %arg2[%c0_5, %c0_6] : memref<32x96xf32, #tpu.memory_space<vmem>>, vector<32x96xf32>
    %cst = arith.constant dense<0.000000e+00> : vector<2x96xf32>
    %8 = tpu.matmul %6, %7, %cst {dimension_numbers = #tpu.dot_dimension_numbers<[1], [0], [0], [1], [0, 0, 1, 1], [], []>} : vector<2x32xf32>, vector<32x96xf32>, vector<2x96xf32> -> vector<2x96xf32>
    %c0_7 = arith.constant 0 : index
    %c0_8 = arith.constant 0 : index
    %9 = vector.load %arg3[%c0_7, %c0_8] : memref<1x96xf32, #tpu.memory_space<vmem>>, vector<1x96xf32>
    %10 = vector.broadcast %9 : vector<1x96xf32> to vector<2x96xf32>
    %11 = arith.addf %8, %10 : vector<2x96xf32>
    %c0_9 = arith.constant 0 : index
    %c0_10 = arith.constant 0 : index
    %12 = vector.load %arg4[%c0_9, %c0_10] : memref<32x96xf32, #tpu.memory_space<vmem>>, vector<32x96xf32>
    %cst_11 = arith.constant dense<0.000000e+00> : vector<2x96xf32>
    %13 = tpu.matmul %3, %12, %cst_11 {dimension_numbers = #tpu.dot_dimension_numbers<[1], [0], [0], [1], [0, 0, 1, 1], [], []>} : vector<2x32xf32>, vector<32x96xf32>, vector<2x96xf32> -> vector<2x96xf32>
    %c0_12 = arith.constant 0 : index
    %c0_13 = arith.constant 0 : index
    %14 = vector.load %arg5[%c0_12, %c0_13] : memref<1x96xf32, #tpu.memory_space<vmem>>, vector<1x96xf32>
    %15 = vector.broadcast %14 : vector<1x96xf32> to vector<2x96xf32>
    %16 = arith.addf %13, %15 : vector<2x96xf32>
    %17 = vector.extract_strided_slice %11 {offsets = [0, 0], sizes = [2, 32], strides = [1, 1]} : vector<2x96xf32> to vector<2x32xf32>
    %18 = vector.extract_strided_slice %16 {offsets = [0, 0], sizes = [2, 32], strides = [1, 1]} : vector<2x96xf32> to vector<2x32xf32>
    %19 = arith.addf %17, %18 : vector<2x32xf32>
    %20 = arith.negf %19 : vector<2x32xf32>
    %21 = math.exp %20 : vector<2x32xf32>
    %cst_14 = arith.constant 1.000000e+00 : f32
    %22 = vector.broadcast %cst_14 : f32 to vector<2x32xf32>
    %23 = arith.addf %22, %21 : vector<2x32xf32>
    %24 = arith.divf %22, %23 : vector<2x32xf32>
    %25 = vector.extract_strided_slice %11 {offsets = [0, 32], sizes = [2, 32], strides = [1, 1]} : vector<2x96xf32> to vector<2x32xf32>
    %26 = vector.extract_strided_slice %16 {offsets = [0, 32], sizes = [2, 32], strides = [1, 1]} : vector<2x96xf32> to vector<2x32xf32>
    %27 = arith.addf %25, %26 : vector<2x32xf32>
    %28 = arith.negf %27 : vector<2x32xf32>
    %29 = math.exp %28 : vector<2x32xf32>
    %cst_15 = arith.constant 1.000000e+00 : f32
    %30 = vector.broadcast %cst_15 : f32 to vector<2x32xf32>
    %31 = arith.addf %30, %29 : vector<2x32xf32>
    %32 = arith.divf %30, %31 : vector<2x32xf32>
    %33 = vector.extract_strided_slice %11 {offsets = [0, 64], sizes = [2, 32], strides = [1, 1]} : vector<2x96xf32> to vector<2x32xf32>
    %34 = vector.extract_strided_slice %16 {offsets = [0, 64], sizes = [2, 32], strides = [1, 1]} : vector<2x96xf32> to vector<2x32xf32>
    %35 = arith.mulf %24, %34 : vector<2x32xf32>
    %36 = arith.addf %33, %35 : vector<2x32xf32>
    %37 = math.tanh %36 : vector<2x32xf32>
    %38 = arith.subf %3, %37 : vector<2x32xf32>
    %39 = arith.mulf %32, %38 : vector<2x32xf32>
    %40 = arith.addf %37, %39 : vector<2x32xf32>
    %41 = arith.index_cast %c0_i32_2 : i32 to index
    %c0_16 = arith.constant 0 : index
    %c0_17 = arith.constant 0 : index
    %42 = vector.load %arg6[%41, %c0_16, %c0_17] : memref<8x2x32xf32, #tpu.memory_space<vmem>>, vector<1x2x32xf32>
    %43 = vector.shape_cast %42 : vector<1x2x32xf32> to vector<2x32xf32>
    %44 = vector.shape_cast %40 : vector<2x32xf32> to vector<1x2x32xf32>
    tpu.vector_store %arg6[%41, %c0_16, %c0_17], %44 {strides = array<i32>} : memref<8x2x32xf32, #tpu.memory_space<vmem>>, vector<1x2x32xf32>,
    %c1_i32 = arith.constant 1 : i32
    %45 = arith.index_cast %c1_i32 : i32 to index
    %c0_18 = arith.constant 0 : index
    %c0_19 = arith.constant 0 : index
    %46 = vector.load %arg1[%45, %c0_18, %c0_19] : memref<8x2x32xf32, #tpu.memory_space<vmem>>, vector<1x2x32xf32>
    %47 = vector.shape_cast %46 : vector<1x2x32xf32> to vector<2x32xf32>
    %c0_20 = arith.constant 0 : index
    %c0_21 = arith.constant 0 : index
    %48 = vector.load %arg2[%c0_20, %c0_21] : memref<32x96xf32, #tpu.memory_space<vmem>>, vector<32x96xf32>
    %cst_22 = arith.constant dense<0.000000e+00> : vector<2x96xf32>
    %49 = tpu.matmul %47, %48, %cst_22 {dimension_numbers = #tpu.dot_dimension_numbers<[1], [0], [0], [1], [0, 0, 1, 1], [], []>} : vector<2x32xf32>, vector<32x96xf32>, vector<2x96xf32> -> vector<2x96xf32>
    %c0_23 = arith.constant 0 : index
    %c0_24 = arith.constant 0 : index
    %50 = vector.load %arg3[%c0_23, %c0_24] : memref<1x96xf32, #tpu.memory_space<vmem>>, vector<1x96xf32>
    %51 = vector.broadcast %50 : vector<1x96xf32> to vector<2x96xf32>
    %52 = arith.addf %49, %51 : vector<2x96xf32>
    %c0_25 = arith.constant 0 : index
    %c0_26 = arith.constant 0 : index
    %53 = vector.load %arg4[%c0_25, %c0_26] : memref<32x96xf32, #tpu.memory_space<vmem>>, vector<32x96xf32>
    %cst_27 = arith.constant dense<0.000000e+00> : vector<2x96xf32>
    %54 = tpu.matmul %40, %53, %cst_27 {dimension_numbers = #tpu.dot_dimension_numbers<[1], [0], [0], [1], [0, 0, 1, 1], [], []>} : vector<2x32xf32>, vector<32x96xf32>, vector<2x96xf32> -> vector<2x96xf32>
    %c0_28 = arith.constant 0 : index
    %c0_29 = arith.constant 0 : index
    %55 = vector.load %arg5[%c0_28, %c0_29] : memref<1x96xf32, #tpu.memory_space<vmem>>, vector<1x96xf32>
    %56 = vector.broadcast %55 : vector<1x96xf32> to vector<2x96xf32>
    %57 = arith.addf %54, %56 : vector<2x96xf32>
    %58 = vector.extract_strided_slice %52 {offsets = [0, 0], sizes = [2, 32], strides = [1, 1]} : vector<2x96xf32> to vector<2x32xf32>
    %59 = vector.extract_strided_slice %57 {offsets = [0, 0], sizes = [2, 32], strides = [1, 1]} : vector<2x96xf32> to vector<2x32xf32>
    %60 = arith.addf %58, %59 : vector<2x32xf32>
    %61 = arith.negf %60 : vector<2x32xf32>
    %62 = math.exp %61 : vector<2x32xf32>
    %cst_30 = arith.constant 1.000000e+00 : f32
    %63 = vector.broadcast %cst_30 : f32 to vector<2x32xf32>
    %64 = arith.addf %63, %62 : vector<2x32xf32>
    %65 = arith.divf %63, %64 : vector<2x32xf32>
    %66 = vector.extract_strided_slice %52 {offsets = [0, 32], sizes = [2, 32], strides = [1, 1]} : vector<2x96xf32> to vector<2x32xf32>
    %67 = vector.extract_strided_slice %57 {offsets = [0, 32], sizes = [2, 32], strides = [1, 1]} : vector<2x96xf32> to vector<2x32xf32>
    %68 = arith.addf %66, %67 : vector<2x32xf32>
    %69 = arith.negf %68 : vector<2x32xf32>
    %70 = math.exp %69 : vector<2x32xf32>
    %cst_31 = arith.constant 1.000000e+00 : f32
    %71 = vector.broadcast %cst_31 : f32 to vector<2x32xf32>
    %72 = arith.addf %71, %70 : vector<2x32xf32>
    %73 = arith.divf %71, %72 : vector<2x32xf32>
    %74 = vector.extract_strided_slice %52 {offsets = [0, 64], sizes = [2, 32], strides = [1, 1]} : vector<2x96xf32> to vector<2x32xf32>
    %75 = vector.extract_strided_slice %57 {offsets = [0, 64], sizes = [2, 32], strides = [1, 1]} : vector<2x96xf32> to vector<2x32xf32>
    %76 = arith.mulf %65, %75 : vector<2x32xf32>
    %77 = arith.addf %74, %76 : vector<2x32xf32>
    %78 = math.tanh %77 : vector<2x32xf32>
    %79 = arith.subf %40, %78 : vector<2x32xf32>
    %80 = arith.mulf %73, %79 : vector<2x32xf32>
    %81 = arith.addf %78, %80 : vector<2x32xf32>
    %82 = arith.index_cast %c1_i32 : i32 to index
    %c0_32 = arith.constant 0 : index
    %c0_33 = arith.constant 0 : index
    %83 = vector.load %arg6[%82, %c0_32, %c0_33] : memref<8x2x32xf32, #tpu.memory_space<vmem>>, vector<1x2x32xf32>
    %84 = vector.shape_cast %83 : vector<1x2x32xf32> to vector<2x32xf32>
    %85 = vector.shape_cast %81 : vector<2x32xf32> to vector<1x2x32xf32>
    tpu.vector_store %arg6[%82, %c0_32, %c0_33], %85 {strides = array<i32>} : memref<8x2x32xf32, #tpu.memory_space<vmem>>, vector<1x2x32xf32>,
    %c2_i32 = arith.constant 2 : i32
    %86 = arith.index_cast %c2_i32 : i32 to index
    %c0_34 = arith.constant 0 : index
    %c0_35 = arith.constant 0 : index
    %87 = vector.load %arg1[%86, %c0_34, %c0_35] : memref<8x2x32xf32, #tpu.memory_space<vmem>>, vector<1x2x32xf32>
    %88 = vector.shape_cast %87 : vector<1x2x32xf32> to vector<2x32xf32>
    %c0_36 = arith.constant 0 : index
    %c0_37 = arith.constant 0 : index
    %89 = vector.load %arg2[%c0_36, %c0_37] : memref<32x96xf32, #tpu.memory_space<vmem>>, vector<32x96xf32>
    %cst_38 = arith.constant dense<0.000000e+00> : vector<2x96xf32>
    %90 = tpu.matmul %88, %89, %cst_38 {dimension_numbers = #tpu.dot_dimension_numbers<[1], [0], [0], [1], [0, 0, 1, 1], [], []>} : vector<2x32xf32>, vector<32x96xf32>, vector<2x96xf32> -> vector<2x96xf32>
    %c0_39 = arith.constant 0 : index
    %c0_40 = arith.constant 0 : index
    %91 = vector.load %arg3[%c0_39, %c0_40] : memref<1x96xf32, #tpu.memory_space<vmem>>, vector<1x96xf32>
    %92 = vector.broadcast %91 : vector<1x96xf32> to vector<2x96xf32>
    %93 = arith.addf %90, %92 : vector<2x96xf32>
    %c0_41 = arith.constant 0 : index
    %c0_42 = arith.constant 0 : index
    %94 = vector.load %arg4[%c0_41, %c0_42] : memref<32x96xf32, #tpu.memory_space<vmem>>, vector<32x96xf32>
    %cst_43 = arith.constant dense<0.000000e+00> : vector<2x96xf32>
    %95 = tpu.matmul %81, %94, %cst_43 {dimension_numbers = #tpu.dot_dimension_numbers<[1], [0], [0], [1], [0, 0, 1, 1], [], []>} : vector<2x32xf32>, vector<32x96xf32>, vector<2x96xf32> -> vector<2x96xf32>
    %c0_44 = arith.constant 0 : index
    %c0_45 = arith.constant 0 : index
    %96 = vector.load %arg5[%c0_44, %c0_45] : memref<1x96xf32, #tpu.memory_space<vmem>>, vector<1x96xf32>
    %97 = vector.broadcast %96 : vector<1x96xf32> to vector<2x96xf32>
    %98 = arith.addf %95, %97 : vector<2x96xf32>
    %99 = vector.extract_strided_slice %93 {offsets = [0, 0], sizes = [2, 32], strides = [1, 1]} : vector<2x96xf32> to vector<2x32xf32>
    %100 = vector.extract_strided_slice %98 {offsets = [0, 0], sizes = [2, 32], strides = [1, 1]} : vector<2x96xf32> to vector<2x32xf32>
    %101 = arith.addf %99, %100 : vector<2x32xf32>
    %102 = arith.negf %101 : vector<2x32xf32>
    %103 = math.exp %102 : vector<2x32xf32>
    %cst_46 = arith.constant 1.000000e+00 : f32
    %104 = vector.broadcast %cst_46 : f32 to vector<2x32xf32>
    %105 = arith.addf %104, %103 : vector<2x32xf32>
    %106 = arith.divf %104, %105 : vector<2x32xf32>
    %107 = vector.extract_strided_slice %93 {offsets = [0, 32], sizes = [2, 32], strides = [1, 1]} : vector<2x96xf32> to vector<2x32xf32>
    %108 = vector.extract_strided_slice %98 {offsets = [0, 32], sizes = [2, 32], strides = [1, 1]} : vector<2x96xf32> to vector<2x32xf32>
    %109 = arith.addf %107, %108 : vector<2x32xf32>
    %110 = arith.negf %109 : vector<2x32xf32>
    %111 = math.exp %110 : vector<2x32xf32>
    %cst_47 = arith.constant 1.000000e+00 : f32
    %112 = vector.broadcast %cst_47 : f32 to vector<2x32xf32>
    %113 = arith.addf %112, %111 : vector<2x32xf32>
    %114 = arith.divf %112, %113 : vector<2x32xf32>
    %115 = vector.extract_strided_slice %93 {offsets = [0, 64], sizes = [2, 32], strides = [1, 1]} : vector<2x96xf32> to vector<2x32xf32>
    %116 = vector.extract_strided_slice %98 {offsets = [0, 64], sizes = [2, 32], strides = [1, 1]} : vector<2x96xf32> to vector<2x32xf32>
    %117 = arith.mulf %106, %116 : vector<2x32xf32>
    %118 = arith.addf %115, %117 : vector<2x32xf32>
    %119 = math.tanh %118 : vector<2x32xf32>
    %120 = arith.subf %81, %119 : vector<2x32xf32>
    %121 = arith.mulf %114, %120 : vector<2x32xf32>
    %122 = arith.addf %119, %121 : vector<2x32xf32>
    %123 = arith.index_cast %c2_i32 : i32 to index
    %c0_48 = arith.constant 0 : index
    %c0_49 = arith.constant 0 : index
    %124 = vector.load %arg6[%123, %c0_48, %c0_49] : memref<8x2x32xf32, #tpu.memory_space<vmem>>, vector<1x2x32xf32>
    %125 = vector.shape_cast %124 : vector<1x2x32xf32> to vector<2x32xf32>
    %126 = vector.shape_cast %122 : vector<2x32xf32> to vector<1x2x32xf32>
    tpu.vector_store %arg6[%123, %c0_48, %c0_49], %126 {strides = array<i32>} : memref<8x2x32xf32, #tpu.memory_space<vmem>>, vector<1x2x32xf32>,
    %c3_i32 = arith.constant 3 : i32
    %127 = arith.index_cast %c3_i32 : i32 to index
    %c0_50 = arith.constant 0 : index
    %c0_51 = arith.constant 0 : index
    %128 = vector.load %arg1[%127, %c0_50, %c0_51] : memref<8x2x32xf32, #tpu.memory_space<vmem>>, vector<1x2x32xf32>
    %129 = vector.shape_cast %128 : vector<1x2x32xf32> to vector<2x32xf32>
    %c0_52 = arith.constant 0 : index
    %c0_53 = arith.constant 0 : index
    %130 = vector.load %arg2[%c0_52, %c0_53] : memref<32x96xf32, #tpu.memory_space<vmem>>, vector<32x96xf32>
    %cst_54 = arith.constant dense<0.000000e+00> : vector<2x96xf32>
    %131 = tpu.matmul %129, %130, %cst_54 {dimension_numbers = #tpu.dot_dimension_numbers<[1], [0], [0], [1], [0, 0, 1, 1], [], []>} : vector<2x32xf32>, vector<32x96xf32>, vector<2x96xf32> -> vector<2x96xf32>
    %c0_55 = arith.constant 0 : index
    %c0_56 = arith.constant 0 : index
    %132 = vector.load %arg3[%c0_55, %c0_56] : memref<1x96xf32, #tpu.memory_space<vmem>>, vector<1x96xf32>
    %133 = vector.broadcast %132 : vector<1x96xf32> to vector<2x96xf32>
    %134 = arith.addf %131, %133 : vector<2x96xf32>
    %c0_57 = arith.constant 0 : index
    %c0_58 = arith.constant 0 : index
    %135 = vector.load %arg4[%c0_57, %c0_58] : memref<32x96xf32, #tpu.memory_space<vmem>>, vector<32x96xf32>
    %cst_59 = arith.constant dense<0.000000e+00> : vector<2x96xf32>
    %136 = tpu.matmul %122, %135, %cst_59 {dimension_numbers = #tpu.dot_dimension_numbers<[1], [0], [0], [1], [0, 0, 1, 1], [], []>} : vector<2x32xf32>, vector<32x96xf32>, vector<2x96xf32> -> vector<2x96xf32>
    %c0_60 = arith.constant 0 : index
    %c0_61 = arith.constant 0 : index
    %137 = vector.load %arg5[%c0_60, %c0_61] : memref<1x96xf32, #tpu.memory_space<vmem>>, vector<1x96xf32>
    %138 = vector.broadcast %137 : vector<1x96xf32> to vector<2x96xf32>
    %139 = arith.addf %136, %138 : vector<2x96xf32>
    %140 = vector.extract_strided_slice %134 {offsets = [0, 0], sizes = [2, 32], strides = [1, 1]} : vector<2x96xf32> to vector<2x32xf32>
    %141 = vector.extract_strided_slice %139 {offsets = [0, 0], sizes = [2, 32], strides = [1, 1]} : vector<2x96xf32> to vector<2x32xf32>
    %142 = arith.addf %140, %141 : vector<2x32xf32>
    %143 = arith.negf %142 : vector<2x32xf32>
    %144 = math.exp %143 : vector<2x32xf32>
    %cst_62 = arith.constant 1.000000e+00 : f32
    %145 = vector.broadcast %cst_62 : f32 to vector<2x32xf32>
    %146 = arith.addf %145, %144 : vector<2x32xf32>
    %147 = arith.divf %145, %146 : vector<2x32xf32>
    %148 = vector.extract_strided_slice %134 {offsets = [0, 32], sizes = [2, 32], strides = [1, 1]} : vector<2x96xf32> to vector<2x32xf32>
    %149 = vector.extract_strided_slice %139 {offsets = [0, 32], sizes = [2, 32], strides = [1, 1]} : vector<2x96xf32> to vector<2x32xf32>
    %150 = arith.addf %148, %149 : vector<2x32xf32>
    %151 = arith.negf %150 : vector<2x32xf32>
    %152 = math.exp %151 : vector<2x32xf32>
    %cst_63 = arith.constant 1.000000e+00 : f32
    %153 = vector.broadcast %cst_63 : f32 to vector<2x32xf32>
    %154 = arith.addf %153, %152 : vector<2x32xf32>
    %155 = arith.divf %153, %154 : vector<2x32xf32>
    %156 = vector.extract_strided_slice %134 {offsets = [0, 64], sizes = [2, 32], strides = [1, 1]} : vector<2x96xf32> to vector<2x32xf32>
    %157 = vector.extract_strided_slice %139 {offsets = [0, 64], sizes = [2, 32], strides = [1, 1]} : vector<2x96xf32> to vector<2x32xf32>
    %158 = arith.mulf %147, %157 : vector<2x32xf32>
    %159 = arith.addf %156, %158 : vector<2x32xf32>
    %160 = math.tanh %159 : vector<2x32xf32>
    %161 = arith.subf %122, %160 : vector<2x32xf32>
    %162 = arith.mulf %155, %161 : vector<2x32xf32>
    %163 = arith.addf %160, %162 : vector<2x32xf32>
    %164 = arith.index_cast %c3_i32 : i32 to index
    %c0_64 = arith.constant 0 : index
    %c0_65 = arith.constant 0 : index
    %165 = vector.load %arg6[%164, %c0_64, %c0_65] : memref<8x2x32xf32, #tpu.memory_space<vmem>>, vector<1x2x32xf32>
    %166 = vector.shape_cast %165 : vector<1x2x32xf32> to vector<2x32xf32>
    %167 = vector.shape_cast %163 : vector<2x32xf32> to vector<1x2x32xf32>
    tpu.vector_store %arg6[%164, %c0_64, %c0_65], %167 {strides = array<i32>} : memref<8x2x32xf32, #tpu.memory_space<vmem>>, vector<1x2x32xf32>,
    %c4_i32 = arith.constant 4 : i32
    %168 = arith.index_cast %c4_i32 : i32 to index
    %c0_66 = arith.constant 0 : index
    %c0_67 = arith.constant 0 : index
    %169 = vector.load %arg1[%168, %c0_66, %c0_67] : memref<8x2x32xf32, #tpu.memory_space<vmem>>, vector<1x2x32xf32>
    %170 = vector.shape_cast %169 : vector<1x2x32xf32> to vector<2x32xf32>
    %c0_68 = arith.constant 0 : index
    %c0_69 = arith.constant 0 : index
    %171 = vector.load %arg2[%c0_68, %c0_69] : memref<32x96xf32, #tpu.memory_space<vmem>>, vector<32x96xf32>
    %cst_70 = arith.constant dense<0.000000e+00> : vector<2x96xf32>
    %172 = tpu.matmul %170, %171, %cst_70 {dimension_numbers = #tpu.dot_dimension_numbers<[1], [0], [0], [1], [0, 0, 1, 1], [], []>} : vector<2x32xf32>, vector<32x96xf32>, vector<2x96xf32> -> vector<2x96xf32>
    %c0_71 = arith.constant 0 : index
    %c0_72 = arith.constant 0 : index
    %173 = vector.load %arg3[%c0_71, %c0_72] : memref<1x96xf32, #tpu.memory_space<vmem>>, vector<1x96xf32>
    %174 = vector.broadcast %173 : vector<1x96xf32> to vector<2x96xf32>
    %175 = arith.addf %172, %174 : vector<2x96xf32>
    %c0_73 = arith.constant 0 : index
    %c0_74 = arith.constant 0 : index
    %176 = vector.load %arg4[%c0_73, %c0_74] : memref<32x96xf32, #tpu.memory_space<vmem>>, vector<32x96xf32>
    %cst_75 = arith.constant dense<0.000000e+00> : vector<2x96xf32>
    %177 = tpu.matmul %163, %176, %cst_75 {dimension_numbers = #tpu.dot_dimension_numbers<[1], [0], [0], [1], [0, 0, 1, 1], [], []>} : vector<2x32xf32>, vector<32x96xf32>, vector<2x96xf32> -> vector<2x96xf32>
    %c0_76 = arith.constant 0 : index
    %c0_77 = arith.constant 0 : index
    %178 = vector.load %arg5[%c0_76, %c0_77] : memref<1x96xf32, #tpu.memory_space<vmem>>, vector<1x96xf32>
    %179 = vector.broadcast %178 : vector<1x96xf32> to vector<2x96xf32>
    %180 = arith.addf %177, %179 : vector<2x96xf32>
    %181 = vector.extract_strided_slice %175 {offsets = [0, 0], sizes = [2, 32], strides = [1, 1]} : vector<2x96xf32> to vector<2x32xf32>
    %182 = vector.extract_strided_slice %180 {offsets = [0, 0], sizes = [2, 32], strides = [1, 1]} : vector<2x96xf32> to vector<2x32xf32>
    %183 = arith.addf %181, %182 : vector<2x32xf32>
    %184 = arith.negf %183 : vector<2x32xf32>
    %185 = math.exp %184 : vector<2x32xf32>
    %cst_78 = arith.constant 1.000000e+00 : f32
    %186 = vector.broadcast %cst_78 : f32 to vector<2x32xf32>
    %187 = arith.addf %186, %185 : vector<2x32xf32>
    %188 = arith.divf %186, %187 : vector<2x32xf32>
    %189 = vector.extract_strided_slice %175 {offsets = [0, 32], sizes = [2, 32], strides = [1, 1]} : vector<2x96xf32> to vector<2x32xf32>
    %190 = vector.extract_strided_slice %180 {offsets = [0, 32], sizes = [2, 32], strides = [1, 1]} : vector<2x96xf32> to vector<2x32xf32>
    %191 = arith.addf %189, %190 : vector<2x32xf32>
    %192 = arith.negf %191 : vector<2x32xf32>
    %193 = math.exp %192 : vector<2x32xf32>
    %cst_79 = arith.constant 1.000000e+00 : f32
    %194 = vector.broadcast %cst_79 : f32 to vector<2x32xf32>
    %195 = arith.addf %194, %193 : vector<2x32xf32>
    %196 = arith.divf %194, %195 : vector<2x32xf32>
    %197 = vector.extract_strided_slice %175 {offsets = [0, 64], sizes = [2, 32], strides = [1, 1]} : vector<2x96xf32> to vector<2x32xf32>
    %198 = vector.extract_strided_slice %180 {offsets = [0, 64], sizes = [2, 32], strides = [1, 1]} : vector<2x96xf32> to vector<2x32xf32>
    %199 = arith.mulf %188, %198 : vector<2x32xf32>
    %200 = arith.addf %197, %199 : vector<2x32xf32>
    %201 = math.tanh %200 : vector<2x32xf32>
    %202 = arith.subf %163, %201 : vector<2x32xf32>
    %203 = arith.mulf %196, %202 : vector<2x32xf32>
    %204 = arith.addf %201, %203 : vector<2x32xf32>
    %205 = arith.index_cast %c4_i32 : i32 to index
    %c0_80 = arith.constant 0 : index
    %c0_81 = arith.constant 0 : index
    %206 = vector.load %arg6[%205, %c0_80, %c0_81] : memref<8x2x32xf32, #tpu.memory_space<vmem>>, vector<1x2x32xf32>
    %207 = vector.shape_cast %206 : vector<1x2x32xf32> to vector<2x32xf32>
    %208 = vector.shape_cast %204 : vector<2x32xf32> to vector<1x2x32xf32>
    tpu.vector_store %arg6[%205, %c0_80, %c0_81], %208 {strides = array<i32>} : memref<8x2x32xf32, #tpu.memory_space<vmem>>, vector<1x2x32xf32>,
    %c5_i32 = arith.constant 5 : i32
    %209 = arith.index_cast %c5_i32 : i32 to index
    %c0_82 = arith.constant 0 : index
    %c0_83 = arith.constant 0 : index
    %210 = vector.load %arg1[%209, %c0_82, %c0_83] : memref<8x2x32xf32, #tpu.memory_space<vmem>>, vector<1x2x32xf32>
    %211 = vector.shape_cast %210 : vector<1x2x32xf32> to vector<2x32xf32>
    %c0_84 = arith.constant 0 : index
    %c0_85 = arith.constant 0 : index
    %212 = vector.load %arg2[%c0_84, %c0_85] : memref<32x96xf32, #tpu.memory_space<vmem>>, vector<32x96xf32>
    %cst_86 = arith.constant dense<0.000000e+00> : vector<2x96xf32>
    %213 = tpu.matmul %211, %212, %cst_86 {dimension_numbers = #tpu.dot_dimension_numbers<[1], [0], [0], [1], [0, 0, 1, 1], [], []>} : vector<2x32xf32>, vector<32x96xf32>, vector<2x96xf32> -> vector<2x96xf32>
    %c0_87 = arith.constant 0 : index
    %c0_88 = arith.constant 0 : index
    %214 = vector.load %arg3[%c0_87, %c0_88] : memref<1x96xf32, #tpu.memory_space<vmem>>, vector<1x96xf32>
    %215 = vector.broadcast %214 : vector<1x96xf32> to vector<2x96xf32>
    %216 = arith.addf %213, %215 : vector<2x96xf32>
    %c0_89 = arith.constant 0 : index
    %c0_90 = arith.constant 0 : index
    %217 = vector.load %arg4[%c0_89, %c0_90] : memref<32x96xf32, #tpu.memory_space<vmem>>, vector<32x96xf32>
    %cst_91 = arith.constant dense<0.000000e+00> : vector<2x96xf32>
    %218 = tpu.matmul %204, %217, %cst_91 {dimension_numbers = #tpu.dot_dimension_numbers<[1], [0], [0], [1], [0, 0, 1, 1], [], []>} : vector<2x32xf32>, vector<32x96xf32>, vector<2x96xf32> -> vector<2x96xf32>
    %c0_92 = arith.constant 0 : index
    %c0_93 = arith.constant 0 : index
    %219 = vector.load %arg5[%c0_92, %c0_93] : memref<1x96xf32, #tpu.memory_space<vmem>>, vector<1x96xf32>
    %220 = vector.broadcast %219 : vector<1x96xf32> to vector<2x96xf32>
    %221 = arith.addf %218, %220 : vector<2x96xf32>
    %222 = vector.extract_strided_slice %216 {offsets = [0, 0], sizes = [2, 32], strides = [1, 1]} : vector<2x96xf32> to vector<2x32xf32>
    %223 = vector.extract_strided_slice %221 {offsets = [0, 0], sizes = [2, 32], strides = [1, 1]} : vector<2x96xf32> to vector<2x32xf32>
    %224 = arith.addf %222, %223 : vector<2x32xf32>
    %225 = arith.negf %224 : vector<2x32xf32>
    %226 = math.exp %225 : vector<2x32xf32>
    %cst_94 = arith.constant 1.000000e+00 : f32
    %227 = vector.broadcast %cst_94 : f32 to vector<2x32xf32>
    %228 = arith.addf %227, %226 : vector<2x32xf32>
    %229 = arith.divf %227, %228 : vector<2x32xf32>
    %230 = vector.extract_strided_slice %216 {offsets = [0, 32], sizes = [2, 32], strides = [1, 1]} : vector<2x96xf32> to vector<2x32xf32>
    %231 = vector.extract_strided_slice %221 {offsets = [0, 32], sizes = [2, 32], strides = [1, 1]} : vector<2x96xf32> to vector<2x32xf32>
    %232 = arith.addf %230, %231 : vector<2x32xf32>
    %233 = arith.negf %232 : vector<2x32xf32>
    %234 = math.exp %233 : vector<2x32xf32>
    %cst_95 = arith.constant 1.000000e+00 : f32
    %235 = vector.broadcast %cst_95 : f32 to vector<2x32xf32>
    %236 = arith.addf %235, %234 : vector<2x32xf32>
    %237 = arith.divf %235, %236 : vector<2x32xf32>
    %238 = vector.extract_strided_slice %216 {offsets = [0, 64], sizes = [2, 32], strides = [1, 1]} : vector<2x96xf32> to vector<2x32xf32>
    %239 = vector.extract_strided_slice %221 {offsets = [0, 64], sizes = [2, 32], strides = [1, 1]} : vector<2x96xf32> to vector<2x32xf32>
    %240 = arith.mulf %229, %239 : vector<2x32xf32>
    %241 = arith.addf %238, %240 : vector<2x32xf32>
    %242 = math.tanh %241 : vector<2x32xf32>
    %243 = arith.subf %204, %242 : vector<2x32xf32>
    %244 = arith.mulf %237, %243 : vector<2x32xf32>
    %245 = arith.addf %242, %244 : vector<2x32xf32>
    %246 = arith.index_cast %c5_i32 : i32 to index
    %c0_96 = arith.constant 0 : index
    %c0_97 = arith.constant 0 : index
    %247 = vector.load %arg6[%246, %c0_96, %c0_97] : memref<8x2x32xf32, #tpu.memory_space<vmem>>, vector<1x2x32xf32>
    %248 = vector.shape_cast %247 : vector<1x2x32xf32> to vector<2x32xf32>
    %249 = vector.shape_cast %245 : vector<2x32xf32> to vector<1x2x32xf32>
    tpu.vector_store %arg6[%246, %c0_96, %c0_97], %249 {strides = array<i32>} : memref<8x2x32xf32, #tpu.memory_space<vmem>>, vector<1x2x32xf32>,
    %c6_i32 = arith.constant 6 : i32
    %250 = arith.index_cast %c6_i32 : i32 to index
    %c0_98 = arith.constant 0 : index
    %c0_99 = arith.constant 0 : index
    %251 = vector.load %arg1[%250, %c0_98, %c0_99] : memref<8x2x32xf32, #tpu.memory_space<vmem>>, vector<1x2x32xf32>
    %252 = vector.shape_cast %251 : vector<1x2x32xf32> to vector<2x32xf32>
    %c0_100 = arith.constant 0 : index
    %c0_101 = arith.constant 0 : index
    %253 = vector.load %arg2[%c0_100, %c0_101] : memref<32x96xf32, #tpu.memory_space<vmem>>, vector<32x96xf32>
    %cst_102 = arith.constant dense<0.000000e+00> : vector<2x96xf32>
    %254 = tpu.matmul %252, %253, %cst_102 {dimension_numbers = #tpu.dot_dimension_numbers<[1], [0], [0], [1], [0, 0, 1, 1], [], []>} : vector<2x32xf32>, vector<32x96xf32>, vector<2x96xf32> -> vector<2x96xf32>
    %c0_103 = arith.constant 0 : index
    %c0_104 = arith.constant 0 : index
    %255 = vector.load %arg3[%c0_103, %c0_104] : memref<1x96xf32, #tpu.memory_space<vmem>>, vector<1x96xf32>
    %256 = vector.broadcast %255 : vector<1x96xf32> to vector<2x96xf32>
    %257 = arith.addf %254, %256 : vector<2x96xf32>
    %c0_105 = arith.constant 0 : index
    %c0_106 = arith.constant 0 : index
    %258 = vector.load %arg4[%c0_105, %c0_106] : memref<32x96xf32, #tpu.memory_space<vmem>>, vector<32x96xf32>
    %cst_107 = arith.constant dense<0.000000e+00> : vector<2x96xf32>
    %259 = tpu.matmul %245, %258, %cst_107 {dimension_numbers = #tpu.dot_dimension_numbers<[1], [0], [0], [1], [0, 0, 1, 1], [], []>} : vector<2x32xf32>, vector<32x96xf32>, vector<2x96xf32> -> vector<2x96xf32>
    %c0_108 = arith.constant 0 : index
    %c0_109 = arith.constant 0 : index
    %260 = vector.load %arg5[%c0_108, %c0_109] : memref<1x96xf32, #tpu.memory_space<vmem>>, vector<1x96xf32>
    %261 = vector.broadcast %260 : vector<1x96xf32> to vector<2x96xf32>
    %262 = arith.addf %259, %261 : vector<2x96xf32>
    %263 = vector.extract_strided_slice %257 {offsets = [0, 0], sizes = [2, 32], strides = [1, 1]} : vector<2x96xf32> to vector<2x32xf32>
    %264 = vector.extract_strided_slice %262 {offsets = [0, 0], sizes = [2, 32], strides = [1, 1]} : vector<2x96xf32> to vector<2x32xf32>
    %265 = arith.addf %263, %264 : vector<2x32xf32>
    %266 = arith.negf %265 : vector<2x32xf32>
    %267 = math.exp %266 : vector<2x32xf32>
    %cst_110 = arith.constant 1.000000e+00 : f32
    %268 = vector.broadcast %cst_110 : f32 to vector<2x32xf32>
    %269 = arith.addf %268, %267 : vector<2x32xf32>
    %270 = arith.divf %268, %269 : vector<2x32xf32>
    %271 = vector.extract_strided_slice %257 {offsets = [0, 32], sizes = [2, 32], strides = [1, 1]} : vector<2x96xf32> to vector<2x32xf32>
    %272 = vector.extract_strided_slice %262 {offsets = [0, 32], sizes = [2, 32], strides = [1, 1]} : vector<2x96xf32> to vector<2x32xf32>
    %273 = arith.addf %271, %272 : vector<2x32xf32>
    %274 = arith.negf %273 : vector<2x32xf32>
    %275 = math.exp %274 : vector<2x32xf32>
    %cst_111 = arith.constant 1.000000e+00 : f32
    %276 = vector.broadcast %cst_111 : f32 to vector<2x32xf32>
    %277 = arith.addf %276, %275 : vector<2x32xf32>
    %278 = arith.divf %276, %277 : vector<2x32xf32>
    %279 = vector.extract_strided_slice %257 {offsets = [0, 64], sizes = [2, 32], strides = [1, 1]} : vector<2x96xf32> to vector<2x32xf32>
    %280 = vector.extract_strided_slice %262 {offsets = [0, 64], sizes = [2, 32], strides = [1, 1]} : vector<2x96xf32> to vector<2x32xf32>
    %281 = arith.mulf %270, %280 : vector<2x32xf32>
    %282 = arith.addf %279, %281 : vector<2x32xf32>
    %283 = math.tanh %282 : vector<2x32xf32>
    %284 = arith.subf %245, %283 : vector<2x32xf32>
    %285 = arith.mulf %278, %284 : vector<2x32xf32>
    %286 = arith.addf %283, %285 : vector<2x32xf32>
    %287 = arith.index_cast %c6_i32 : i32 to index
    %c0_112 = arith.constant 0 : index
    %c0_113 = arith.constant 0 : index
    %288 = vector.load %arg6[%287, %c0_112, %c0_113] : memref<8x2x32xf32, #tpu.memory_space<vmem>>, vector<1x2x32xf32>
    %289 = vector.shape_cast %288 : vector<1x2x32xf32> to vector<2x32xf32>
    %290 = vector.shape_cast %286 : vector<2x32xf32> to vector<1x2x32xf32>
    tpu.vector_store %arg6[%287, %c0_112, %c0_113], %290 {strides = array<i32>} : memref<8x2x32xf32, #tpu.memory_space<vmem>>, vector<1x2x32xf32>,
    %c7_i32 = arith.constant 7 : i32
    %291 = arith.index_cast %c7_i32 : i32 to index
    %c0_114 = arith.constant 0 : index
    %c0_115 = arith.constant 0 : index
    %292 = vector.load %arg1[%291, %c0_114, %c0_115] : memref<8x2x32xf32, #tpu.memory_space<vmem>>, vector<1x2x32xf32>
    %293 = vector.shape_cast %292 : vector<1x2x32xf32> to vector<2x32xf32>
    %c0_116 = arith.constant 0 : index
    %c0_117 = arith.constant 0 : index
    %294 = vector.load %arg2[%c0_116, %c0_117] : memref<32x96xf32, #tpu.memory_space<vmem>>, vector<32x96xf32>
    %cst_118 = arith.constant dense<0.000000e+00> : vector<2x96xf32>
    %295 = tpu.matmul %293, %294, %cst_118 {dimension_numbers = #tpu.dot_dimension_numbers<[1], [0], [0], [1], [0, 0, 1, 1], [], []>} : vector<2x32xf32>, vector<32x96xf32>, vector<2x96xf32> -> vector<2x96xf32>
    %c0_119 = arith.constant 0 : index
    %c0_120 = arith.constant 0 : index
    %296 = vector.load %arg3[%c0_119, %c0_120] : memref<1x96xf32, #tpu.memory_space<vmem>>, vector<1x96xf32>
    %297 = vector.broadcast %296 : vector<1x96xf32> to vector<2x96xf32>
    %298 = arith.addf %295, %297 : vector<2x96xf32>
    %c0_121 = arith.constant 0 : index
    %c0_122 = arith.constant 0 : index
    %299 = vector.load %arg4[%c0_121, %c0_122] : memref<32x96xf32, #tpu.memory_space<vmem>>, vector<32x96xf32>
    %cst_123 = arith.constant dense<0.000000e+00> : vector<2x96xf32>
    %300 = tpu.matmul %286, %299, %cst_123 {dimension_numbers = #tpu.dot_dimension_numbers<[1], [0], [0], [1], [0, 0, 1, 1], [], []>} : vector<2x32xf32>, vector<32x96xf32>, vector<2x96xf32> -> vector<2x96xf32>
    %c0_124 = arith.constant 0 : index
    %c0_125 = arith.constant 0 : index
    %301 = vector.load %arg5[%c0_124, %c0_125] : memref<1x96xf32, #tpu.memory_space<vmem>>, vector<1x96xf32>
    %302 = vector.broadcast %301 : vector<1x96xf32> to vector<2x96xf32>
    %303 = arith.addf %300, %302 : vector<2x96xf32>
    %304 = vector.extract_strided_slice %298 {offsets = [0, 0], sizes = [2, 32], strides = [1, 1]} : vector<2x96xf32> to vector<2x32xf32>
    %305 = vector.extract_strided_slice %303 {offsets = [0, 0], sizes = [2, 32], strides = [1, 1]} : vector<2x96xf32> to vector<2x32xf32>
    %306 = arith.addf %304, %305 : vector<2x32xf32>
    %307 = arith.negf %306 : vector<2x32xf32>
    %308 = math.exp %307 : vector<2x32xf32>
    %cst_126 = arith.constant 1.000000e+00 : f32
    %309 = vector.broadcast %cst_126 : f32 to vector<2x32xf32>
    %310 = arith.addf %309, %308 : vector<2x32xf32>
    %311 = arith.divf %309, %310 : vector<2x32xf32>
    %312 = vector.extract_strided_slice %298 {offsets = [0, 32], sizes = [2, 32], strides = [1, 1]} : vector<2x96xf32> to vector<2x32xf32>
    %313 = vector.extract_strided_slice %303 {offsets = [0, 32], sizes = [2, 32], strides = [1, 1]} : vector<2x96xf32> to vector<2x32xf32>
    %314 = arith.addf %312, %313 : vector<2x32xf32>
    %315 = arith.negf %314 : vector<2x32xf32>
    %316 = math.exp %315 : vector<2x32xf32>
    %cst_127 = arith.constant 1.000000e+00 : f32
    %317 = vector.broadcast %cst_127 : f32 to vector<2x32xf32>
    %318 = arith.addf %317, %316 : vector<2x32xf32>
    %319 = arith.divf %317, %318 : vector<2x32xf32>
    %320 = vector.extract_strided_slice %298 {offsets = [0, 64], sizes = [2, 32], strides = [1, 1]} : vector<2x96xf32> to vector<2x32xf32>
    %321 = vector.extract_strided_slice %303 {offsets = [0, 64], sizes = [2, 32], strides = [1, 1]} : vector<2x96xf32> to vector<2x32xf32>
    %322 = arith.mulf %311, %321 : vector<2x32xf32>
    %323 = arith.addf %320, %322 : vector<2x32xf32>
    %324 = math.tanh %323 : vector<2x32xf32>
    %325 = arith.subf %286, %324 : vector<2x32xf32>
    %326 = arith.mulf %319, %325 : vector<2x32xf32>
    %327 = arith.addf %324, %326 : vector<2x32xf32>
    %328 = arith.index_cast %c7_i32 : i32 to index
    %c0_128 = arith.constant 0 : index
    %c0_129 = arith.constant 0 : index
    %329 = vector.load %arg6[%328, %c0_128, %c0_129] : memref<8x2x32xf32, #tpu.memory_space<vmem>>, vector<1x2x32xf32>
    %330 = vector.shape_cast %329 : vector<1x2x32xf32> to vector<2x32xf32>
    %331 = vector.shape_cast %327 : vector<2x32xf32> to vector<1x2x32xf32>
    tpu.vector_store %arg6[%328, %c0_128, %c0_129], %331 {strides = array<i32>} : memref<8x2x32xf32, #tpu.memory_space<vmem>>, vector<1x2x32xf32>,
    %c8_i32 = arith.constant 8 : i32
    %c0_130 = arith.constant 0 : index
    %c0_131 = arith.constant 0 : index
    %332 = vector.load %arg7[%c0_130, %c0_131] : memref<2x32xf32, #tpu.memory_space<vmem>>, vector<2x32xf32>
    tpu.vector_store %arg7[%c0_130, %c0_131], %327 {strides = array<i32>} : memref<2x32xf32, #tpu.memory_space<vmem>>, vector<2x32xf32>,
    return
  }
  func.func @transform_0(%arg0: i32) -> (i32, i32, i32) {
    %c0_i32 = arith.constant 0 : i32
    %c0_i32_0 = arith.constant 0 : i32
    %c0_i32_1 = arith.constant 0 : i32
    return %arg0, %c0_i32, %c0_i32_0 : i32, i32, i32
  }
  func.func @transform_1(%arg0: i32) -> (i32, i32) {
    %c0_i32 = arith.constant 0 : i32
    %c0_i32_0 = arith.constant 0 : i32
    %c0_i32_1 = arith.constant 0 : i32
    return %c0_i32, %c0_i32_0 : i32, i32
  }
  func.func @transform_2(%arg0: i32) -> (i32, i32) {
    %c0_i32 = arith.constant 0 : i32
    %c0_i32_0 = arith.constant 0 : i32
    %c0_i32_1 = arith.constant 0 : i32
    return %c0_i32, %c0_i32_0 : i32, i32
  }
  func.func @transform_3(%arg0: i32) -> (i32, i32) {
    %c0_i32 = arith.constant 0 : i32
    %c0_i32_0 = arith.constant 0 : i32
    %c0_i32_1 = arith.constant 0 : i32
    return %c0_i32, %c0_i32_0 : i32, i32
  }
  func.func @transform_4(%arg0: i32) -> (i32, i32) {
    %c0_i32 = arith.constant 0 : i32
    %c0_i32_0 = arith.constant 0 : i32
    %c0_i32_1 = arith.constant 0 : i32
    return %c0_i32, %c0_i32_0 : i32, i32
  }
  func.func @transform_5(%arg0: i32) -> (i32, i32, i32) {
    %c0_i32 = arith.constant 0 : i32
    %c0_i32_0 = arith.constant 0 : i32
    %c0_i32_1 = arith.constant 0 : i32
    return %arg0, %c0_i32, %c0_i32_0 : i32, i32, i32
  }
}

module attributes {stable_mosaic.version = 11 : i64} {
  func.func @_linear_kernel(%arg0: i32, %arg1: i32, %arg2: memref<16x16xf32, #tpu.memory_space<vmem>>, %arg3: memref<16x4xf32, #tpu.memory_space<vmem>>, %arg4: memref<1x4xf32, #tpu.memory_space<vmem>>, %arg5: memref<16x4xf32, #tpu.memory_space<vmem>>) attributes {dimension_semantics = [#tpu.dimension_semantics<parallel>, #tpu.dimension_semantics<parallel>], iteration_bounds = array<i64: 1, 1>, scalar_prefetch = 0 : i64, scratch_operands = 0 : i64, tpu.core_type = #tpu.core_type<tc>, window_params = [{transform_indices = @transform_0, window_bounds = array<i64: 16, 16>}, {transform_indices = @transform_1, window_bounds = array<i64: 16, 4>}, {transform_indices = @transform_2, window_bounds = array<i64: 1, 4>}, {transform_indices = @transform_3, window_bounds = array<i64: 16, 4>}]} {
    %c0 = arith.constant 0 : index
    %c0_0 = arith.constant 0 : index
    %0 = vector.load %arg2[%c0, %c0_0] : memref<16x16xf32, #tpu.memory_space<vmem>>, vector<16x16xf32>
    %c0_1 = arith.constant 0 : index
    %c0_2 = arith.constant 0 : index
    %1 = vector.load %arg3[%c0_1, %c0_2] : memref<16x4xf32, #tpu.memory_space<vmem>>, vector<16x4xf32>
    %cst = arith.constant dense<0.000000e+00> : vector<16x4xf32>
    %2 = tpu.matmul %0, %1, %cst {dimension_numbers = #tpu.dot_dimension_numbers<[1], [0], [0], [1], [0, 0, 1, 1], [], []>} : vector<16x16xf32>, vector<16x4xf32>, vector<16x4xf32> -> vector<16x4xf32>
    %c0_3 = arith.constant 0 : index
    %c0_4 = arith.constant 0 : index
    %3 = vector.load %arg4[%c0_3, %c0_4] : memref<1x4xf32, #tpu.memory_space<vmem>>, vector<1x4xf32>
    %4 = vector.broadcast %3 : vector<1x4xf32> to vector<16x4xf32>
    %5 = arith.addf %2, %4 : vector<16x4xf32>
    %c0_5 = arith.constant 0 : index
    %c0_6 = arith.constant 0 : index
    %6 = vector.load %arg5[%c0_5, %c0_6] : memref<16x4xf32, #tpu.memory_space<vmem>>, vector<16x4xf32>
    tpu.vector_store %arg5[%c0_5, %c0_6], %5 {strides = array<i32>} : memref<16x4xf32, #tpu.memory_space<vmem>>, vector<16x4xf32>,
    return
  }
  func.func @transform_0(%arg0: i32, %arg1: i32) -> (i32, i32) {
    %c0_i32 = arith.constant 0 : i32
    %c0_i32_0 = arith.constant 0 : i32
    return %arg0, %c0_i32 : i32, i32
  }
  func.func @transform_1(%arg0: i32, %arg1: i32) -> (i32, i32) {
    %c0_i32 = arith.constant 0 : i32
    %c0_i32_0 = arith.constant 0 : i32
    return %c0_i32, %arg1 : i32, i32
  }
  func.func @transform_2(%arg0: i32, %arg1: i32) -> (i32, i32) {
    %c0_i32 = arith.constant 0 : i32
    %c0_i32_0 = arith.constant 0 : i32
    return %c0_i32, %arg1 : i32, i32
  }
  func.func @transform_3(%arg0: i32, %arg1: i32) -> (i32, i32) {
    %c0_i32 = arith.constant 0 : i32
    return %arg0, %arg1 : i32, i32
  }
}

</mosaic_0001>

<llo_original>
// kernel: forward.5
$region0: #{forward.5}
  #allocation0 [shape = 'u32[]', space=smem, size = 0x4, offset = 0x4, fixed_abs, tag = 'smem constant byte address 0x4 - core index']
  #allocation1 [shape = 'u32[144,128]{1,0:T(1,128)}', space=vmem, size = 0x12000, scoped, tag = 'internal scratch']
  %s0 = inlined_call_operand.vmem [shape: f32[16,4], index: 0, kind: input, shape index: {}]
  %s1 = inlined_call_operand.vmem [shape: f32[4,16], index: 1, kind: input, shape index: {}]
  %s2 = inlined_call_operand.vmem [shape: f32[1,16], index: 2, kind: input, shape index: {}]
  %s3 = inlined_call_operand.vmem [shape: f32[16,16], index: 3, kind: output, shape index: {}]
  %s4 = sld [smem:[#allocation0]]
  $region22: #{forward.5} parent=0
    _
  %s6 = ssub.s32 1, %s4
  %s7 = scalar_select 0, %s6, %s4
  // Predicated region
  $region2: #{forward.5} parent=0 // pred_check
    _
  $region3: #{forward.5} parent=0 // pred_check_branch
    %9 = sbr.rel (0) target = $region5
  $region4: #{forward.5} parent=0 // pred_region
    _
  $region5: #{forward.5} parent=0 // pred_fallthru
    _
  // Predicated region
  $region6: #{forward.5} parent=0 // pred_check
    _
  $region7: #{forward.5} parent=0 // pred_check_branch
    %11 = sbr.rel (0) target = $region9
  $region8: #{forward.5} parent=0 // pred_region
    _
  $region9: #{forward.5} parent=0 // pred_fallthru
    _
  // Predicated region
  $region10: #{forward.5} parent=0 // pred_check
    _
  $region11: #{forward.5} parent=0 // pred_check_branch
    %13 = sbr.rel (0) target = $region13
  $region12: #{forward.5} parent=0 // pred_region
    _
  $region13: #{forward.5} parent=0 // pred_fallthru
    _
  %v14 = vld [vmem:[%s0] sm:$0xff]
  %v15 = vld [vmem:[%s0 + $0x8] sm:$0xff]
  %v16 = vld [vmem:[%s1] sm:$0xf]
  %v17 = vld [vmem:[%s2] sm:$0x1]
  %v19 = vlaneseq
  %v20 = vshrl.u32 %v19, 7
  %v21 = vsub.s32 0, %v20
  %v22 = vrot.slane %v17, %v21
  %vm24 = vcmask 31744
  %v26 = vsel %vm24, %v14, 0
  %v29 = vsel %vm24, %v15, 0
  %vm31 = vcmask 1043456
  %v33 = vsel %vm31, %v16, 0
  %35 = vmatprep.subr.mxu0 0.0
  %36 = vmatpush1.msra.mxu0 %v33
  %37 = vmatprep.subr.mxu0 0.0
  %38 = vmatpush1.msra.mxu0 0.0
  %39 = vmatprep.subr.mxu0 0.0
  %40 = vmatpush1.msra.mxu0 0.0
  %41 = vmatprep.subr.mxu0 0.0
  %42 = vmatpush1.msra.mxu0 0.0
  %43 = vmatprep.subr.mxu0 0.0
  %44 = vmatpush1.msra.mxu0 0.0
  %45 = vmatprep.subr.mxu0 0.0
  %46 = vmatpush1.msra.mxu0 0.0
  %47 = vmatprep.subr.mxu0 0.0
  %48 = vmatpush1.msra.mxu0 0.0
  %49 = vmatprep.subr.mxu0 0.0
  %50 = vmatpush1.msra.mxu0 0.0
  %51 = vmatprep.subr.mxu0 0.0
  %52 = vmatpush1.msra.mxu0 0.0
  %53 = vmatprep.subr.mxu0 0.0
  %54 = vmatpush1.msra.mxu0 0.0
  %55 = vmatprep.subr.mxu0 0.0
  %56 = vmatpush1.msra.mxu0 0.0
  %57 = vmatprep.subr.mxu0 0.0
  %58 = vmatpush1.msra.mxu0 0.0
  %59 = vmatprep.subr.mxu0 0.0
  %60 = vmatpush1.msra.mxu0 0.0
  %61 = vmatprep.subr.mxu0 0.0
  %62 = vmatpush1.msra.mxu0 0.0
  %63 = vmatprep.subr.mxu0 0.0
  %64 = vmatpush1.msra.mxu0 0.0
  %65 = vmatprep.subr.mxu0 0.0
  %66 = vmatpush1.msra.mxu0 0.0
  %67 = vmatprep.subr.mxu0 0.0
  %68 = vmatpush1.msra.mxu0 0.0
  %69 = vmatprep.subr.mxu0 0.0
  %70 = vmatpush1.msra.mxu0 0.0
  %71 = vmatprep.subr.mxu0 0.0
  %72 = vmatpush1.msra.mxu0 0.0
  %73 = vmatprep.subr.mxu0 0.0
  %74 = vmatpush1.msra.mxu0 0.0
  %75 = vmatprep.subr.mxu0 0.0
  %76 = vmatpush1.msra.mxu0 0.0
  %77 = vmatprep.subr.mxu0 0.0
  %78 = vmatpush1.msra.mxu0 0.0
  %79 = vmatprep.subr.mxu0 0.0
  %80 = vmatpush1.msra.mxu0 0.0
  %81 = vmatprep.subr.mxu0 0.0
  %82 = vmatpush1.msra.mxu0 0.0
  %83 = vmatprep.subr.mxu0 0.0
  %84 = vmatpush1.msra.mxu0 0.0
  %85 = vmatprep.subr.mxu0 0.0
  %86 = vmatpush1.msra.mxu0 0.0
  %87 = vmatprep.subr.mxu0 0.0
  %88 = vmatpush1.msra.mxu0 0.0
  %89 = vmatprep.subr.mxu0 0.0
  %90 = vmatpush1.msra.mxu0 0.0
  %91 = vmatprep.subr.mxu0 0.0
  %92 = vmatpush1.msra.mxu0 0.0
  %93 = vmatprep.subr.mxu0 0.0
  %94 = vmatpush1.msra.mxu0 0.0
  %95 = vmatprep.subr.mxu0 0.0
  %96 = vmatpush1.msra.mxu0 0.0
  %97 = vmatprep.subr.mxu0 0.0
  %98 = vmatpush1.msra.mxu0 0.0
  %99 = vmatprep.mubr.f32.mxu0 0.0
  %100 = vmatmul.mubr.f32.gmra.mrb[0].mxu0 %v26
  %v101 = vpop.f32.mrb[0].mxu0
  %v102 = vadd.f32 %v22, %v101
  %v103 = vpop.f32.mrb[0].mxu0
  %104 = vmatprep.mubr.f32.mxu0 0.0
  %105 = vmatmul.mubr.f32.gmra.mrb[0].mxu0 %v29
  %v106 = vpop.f32.mrb[0].mxu0
  %v107 = vadd.f32 %v22, %v106
  %v108 = vpop.f32.mrb[0].mxu0
  %109 = vdwg.mxu0
  %v110 = vmax.f32 %v102, 0.0
  %v111 = vmax.f32 %v107, 0.0
  %vm112 = vcmask 130048
  %113 = vst.msk [vmem:[%s3] sm:$0xff] %vm112, %v110
  %114 = vst.msk [vmem:[%s3 + $0x8] sm:$0xff] %vm112, %v111
  // Predicated region
  $region14: #{forward.5} parent=0 // pred_check
    _
  $region15: #{forward.5} parent=0 // pred_check_branch
    %116 = sbr.rel (0) target = $region17
  $region16: #{forward.5} parent=0 // pred_region
    _
  $region17: #{forward.5} parent=0 // pred_fallthru
    _
  // Predicated region
  $region18: #{forward.5} parent=0 // pred_check
    _
  $region19: #{forward.5} parent=0 // pred_check_branch
    %118 = sbr.rel (0) target = $region21
  $region20: #{forward.5} parent=0 // pred_region
    _
  $region21: #{forward.5} parent=0 // pred_fallthru
    _

// kernel: forward.8
$region0: #{forward.8}
  #allocation0 [shape = 'u32[]', space=smem, size = 0x4, offset = 0x4, fixed_abs, tag = 'smem constant byte address 0x4 - core index']
  #allocation1 [shape = 'u32[144,128]{1,0:T(1,128)}', space=vmem, size = 0x12000, scoped, tag = 'internal scratch']
  %s0 = inlined_call_operand.vmem [shape: f32[16,32], index: 0, kind: input, shape index: {}]
  %s1 = inlined_call_operand.vmem [shape: f32[32,16], index: 1, kind: input, shape index: {}]
  %s2 = inlined_call_operand.vmem [shape: f32[1,16], index: 2, kind: input, shape index: {}]
  %s3 = inlined_call_operand.vmem [shape: f32[16,16], index: 3, kind: output, shape index: {}]
  %s4 = sld [smem:[#allocation0]]
  $region22: #{forward.8} parent=0
    _
  %s6 = ssub.s32 1, %s4
  %s7 = scalar_select 0, %s6, %s4
  // Predicated region
  $region2: #{forward.8} parent=0 // pred_check
    _
  $region3: #{forward.8} parent=0 // pred_check_branch
    %9 = sbr.rel (0) target = $region5
  $region4: #{forward.8} parent=0 // pred_region
    _
  $region5: #{forward.8} parent=0 // pred_fallthru
    _
  // Predicated region
  $region6: #{forward.8} parent=0 // pred_check
    _
  $region7: #{forward.8} parent=0 // pred_check_branch
    %11 = sbr.rel (0) target = $region9
  $region8: #{forward.8} parent=0 // pred_region
    _
  $region9: #{forward.8} parent=0 // pred_fallthru
    _
  // Predicated region
  $region10: #{forward.8} parent=0 // pred_check
    _
  $region11: #{forward.8} parent=0 // pred_check_branch
    %13 = sbr.rel (0) target = $region13
  $region12: #{forward.8} parent=0 // pred_region
    _
  $region13: #{forward.8} parent=0 // pred_fallthru
    _
  %v14 = vld [vmem:[%s0] sm:$0xff]
  %v15 = vld [vmem:[%s0 + $0x8] sm:$0xff]
  %v16 = vld [vmem:[%s1] sm:$0xff]
  %v17 = vld [vmem:[%s1 + $0x8] sm:$0xff]
  %v18 = vld [vmem:[%s1 + $0x10] sm:$0xff]
  %v19 = vld [vmem:[%s1 + $0x18] sm:$0xff]
  %v20 = vld [vmem:[%s2] sm:$0x1]
  %v22 = vlaneseq
  %v23 = vshrl.u32 %v22, 7
  %v24 = vsub.s32 0, %v23
  %v25 = vrot.slane %v20, %v24
  %vm27 = vcmask 261120
  %v29 = vsel %vm27, %v14, 0
  %v32 = vsel %vm27, %v15, 0
  %34 = vmatprep.subr.mxu0 0.0
  %35 = vmatpush1.msra.mxu0 %v16
  %36 = vmatprep.subr.mxu0 0.0
  %37 = vmatpush1.msra.mxu0 %v17
  %38 = vmatprep.subr.mxu0 0.0
  %39 = vmatpush1.msra.mxu0 %v18
  %40 = vmatprep.subr.mxu0 0.0
  %41 = vmatpush1.msra.mxu0 %v19
  %42 = vmatprep.subr.mxu0 0.0
  %43 = vmatpush1.msra.mxu0 0.0
  %44 = vmatprep.subr.mxu0 0.0
  %45 = vmatpush1.msra.mxu0 0.0
  %46 = vmatprep.subr.mxu0 0.0
  %47 = vmatpush1.msra.mxu0 0.0
  %48 = vmatprep.subr.mxu0 0.0
  %49 = vmatpush1.msra.mxu0 0.0
  %50 = vmatprep.subr.mxu0 0.0
  %51 = vmatpush1.msra.mxu0 0.0
  %52 = vmatprep.subr.mxu0 0.0
  %53 = vmatpush1.msra.mxu0 0.0
  %54 = vmatprep.subr.mxu0 0.0
  %55 = vmatpush1.msra.mxu0 0.0
  %56 = vmatprep.subr.mxu0 0.0
  %57 = vmatpush1.msra.mxu0 0.0
  %58 = vmatprep.subr.mxu0 0.0
  %59 = vmatpush1.msra.mxu0 0.0
  %60 = vmatprep.subr.mxu0 0.0
  %61 = vmatpush1.msra.mxu0 0.0
  %62 = vmatprep.subr.mxu0 0.0
  %63 = vmatpush1.msra.mxu0 0.0
  %64 = vmatprep.subr.mxu0 0.0
  %65 = vmatpush1.msra.mxu0 0.0
  %66 = vmatprep.subr.mxu0 0.0
  %67 = vmatpush1.msra.mxu0 0.0
  %68 = vmatprep.subr.mxu0 0.0
  %69 = vmatpush1.msra.mxu0 0.0
  %70 = vmatprep.subr.mxu0 0.0
  %71 = vmatpush1.msra.mxu0 0.0
  %72 = vmatprep.subr.mxu0 0.0
  %73 = vmatpush1.msra.mxu0 0.0
  %74 = vmatprep.subr.mxu0 0.0
  %75 = vmatpush1.msra.mxu0 0.0
  %76 = vmatprep.subr.mxu0 0.0
  %77 = vmatpush1.msra.mxu0 0.0
  %78 = vmatprep.subr.mxu0 0.0
  %79 = vmatpush1.msra.mxu0 0.0
  %80 = vmatprep.subr.mxu0 0.0
  %81 = vmatpush1.msra.mxu0 0.0
  %82 = vmatprep.subr.mxu0 0.0
  %83 = vmatpush1.msra.mxu0 0.0
  %84 = vmatprep.subr.mxu0 0.0
  %85 = vmatpush1.msra.mxu0 0.0
  %86 = vmatprep.subr.mxu0 0.0
  %87 = vmatpush1.msra.mxu0 0.0
  %88 = vmatprep.subr.mxu0 0.0
  %89 = vmatpush1.msra.mxu0 0.0
  %90 = vmatprep.subr.mxu0 0.0
  %91 = vmatpush1.msra.mxu0 0.0
  %92 = vmatprep.subr.mxu0 0.0
  %93 = vmatpush1.msra.mxu0 0.0
  %94 = vmatprep.subr.mxu0 0.0
  %95 = vmatpush1.msra.mxu0 0.0
  %96 = vmatprep.subr.mxu0 0.0
  %97 = vmatpush1.msra.mxu0 0.0
  %98 = vmatprep.mubr.f32.mxu0 0.0
  %99 = vmatmul.mubr.f32.gmra.mrb[0].mxu0 %v29
  %v100 = vpop.f32.mrb[0].mxu0
  %v101 = vadd.f32 %v25, %v100
  %v102 = vpop.f32.mrb[0].mxu0
  %103 = vmatprep.mubr.f32.mxu0 0.0
  %104 = vmatmul.mubr.f32.gmra.mrb[0].mxu0 %v32
  %v105 = vpop.f32.mrb[0].mxu0
  %v106 = vadd.f32 %v25, %v105
  %v107 = vpop.f32.mrb[0].mxu0
  %108 = vdwg.mxu0
  %v109 = vmax.f32 %v101, 0.0
  %v110 = vmax.f32 %v106, 0.0
  %vm111 = vcmask 130048
  %112 = vst.msk [vmem:[%s3] sm:$0xff] %vm111, %v109
  %113 = vst.msk [vmem:[%s3 + $0x8] sm:$0xff] %vm111, %v110
  // Predicated region
  $region14: #{forward.8} parent=0 // pred_check
    _
  $region15: #{forward.8} parent=0 // pred_check_branch
    %115 = sbr.rel (0) target = $region17
  $region16: #{forward.8} parent=0 // pred_region
    _
  $region17: #{forward.8} parent=0 // pred_fallthru
    _
  // Predicated region
  $region18: #{forward.8} parent=0 // pred_check
    _
  $region19: #{forward.8} parent=0 // pred_check_branch
    %117 = sbr.rel (0) target = $region21
  $region20: #{forward.8} parent=0 // pred_region
    _
  $region21: #{forward.8} parent=0 // pred_fallthru
    _

// kernel: forward.9
$region0: #{forward.9}
  #allocation0 [shape = 'u32[]', space=smem, size = 0x4, offset = 0x4, fixed_abs, tag = 'smem constant byte address 0x4 - core index']
  #allocation1 [shape = 'u32[144,128]{1,0:T(1,128)}', space=vmem, size = 0x12000, scoped, tag = 'internal scratch']
  %s0 = inlined_call_operand.vmem [shape: f32[16,16], index: 0, kind: input, shape index: {}]
  %s1 = inlined_call_operand.vmem [shape: f32[16,4], index: 1, kind: input, shape index: {}]
  %s2 = inlined_call_operand.vmem [shape: f32[1,4], index: 2, kind: input, shape index: {}]
  %s3 = inlined_call_operand.vmem [shape: f32[16,4], index: 3, kind: output, shape index: {}]
  %s4 = sld [smem:[#allocation0]]
  $region22: #{forward.9} parent=0
    _
  %s6 = ssub.s32 1, %s4
  %s7 = scalar_select 0, %s6, %s4
  // Predicated region
  $region2: #{forward.9} parent=0 // pred_check
    _
  $region3: #{forward.9} parent=0 // pred_check_branch
    %9 = sbr.rel (0) target = $region5
  $region4: #{forward.9} parent=0 // pred_region
    _
  $region5: #{forward.9} parent=0 // pred_fallthru
    _
  // Predicated region
  $region6: #{forward.9} parent=0 // pred_check
    _
  $region7: #{forward.9} parent=0 // pred_check_branch
    %11 = sbr.rel (0) target = $region9
  $region8: #{forward.9} parent=0 // pred_region
    _
  $region9: #{forward.9} parent=0 // pred_fallthru
    _
  // Predicated region
  $region10: #{forward.9} parent=0 // pred_check
    _
  $region11: #{forward.9} parent=0 // pred_check_branch
    %13 = sbr.rel (0) target = $region13
  $region12: #{forward.9} parent=0 // pred_region
    _
  $region13: #{forward.9} parent=0 // pred_fallthru
    _
  %v14 = vld [vmem:[%s0] sm:$0xff]
  %v15 = vld [vmem:[%s0 + $0x8] sm:$0xff]
  %v16 = vld [vmem:[%s1] sm:$0xff]
  %v17 = vld [vmem:[%s1 + $0x8] sm:$0xff]
  %v18 = vld [vmem:[%s2] sm:$0x1]
  %v20 = vlaneseq
  %v21 = vshrl.u32 %v20, 7
  %v22 = vsub.s32 0, %v21
  %v23 = vrot.slane %v18, %v22
  %vm25 = vcmask 130048
  %v27 = vsel %vm25, %v14, 0
  %v30 = vsel %vm25, %v15, 0
  %32 = vmatprep.subr.mxu0 0.0
  %33 = vmatpush1.msra.mxu0 %v16
  %34 = vmatprep.subr.mxu0 0.0
  %35 = vmatpush1.msra.mxu0 %v17
  %36 = vmatprep.subr.mxu0 0.0
  %37 = vmatpush1.msra.mxu0 0.0
  %38 = vmatprep.subr.mxu0 0.0
  %39 = vmatpush1.msra.mxu0 0.0
  %40 = vmatprep.subr.mxu0 0.0
  %41 = vmatpush1.msra.mxu0 0.0
  %42 = vmatprep.subr.mxu0 0.0
  %43 = vmatpush1.msra.mxu0 0.0
  %44 = vmatprep.subr.mxu0 0.0
  %45 = vmatpush1.msra.mxu0 0.0
  %46 = vmatprep.subr.mxu0 0.0
  %47 = vmatpush1.msra.mxu0 0.0
  %48 = vmatprep.subr.mxu0 0.0
  %49 = vmatpush1.msra.mxu0 0.0
  %50 = vmatprep.subr.mxu0 0.0
  %51 = vmatpush1.msra.mxu0 0.0
  %52 = vmatprep.subr.mxu0 0.0
  %53 = vmatpush1.msra.mxu0 0.0
  %54 = vmatprep.subr.mxu0 0.0
  %55 = vmatpush1.msra.mxu0 0.0
  %56 = vmatprep.subr.mxu0 0.0
  %57 = vmatpush1.msra.mxu0 0.0
  %58 = vmatprep.subr.mxu0 0.0
  %59 = vmatpush1.msra.mxu0 0.0
  %60 = vmatprep.subr.mxu0 0.0
  %61 = vmatpush1.msra.mxu0 0.0
  %62 = vmatprep.subr.mxu0 0.0
  %63 = vmatpush1.msra.mxu0 0.0
  %64 = vmatprep.subr.mxu0 0.0
  %65 = vmatpush1.msra.mxu0 0.0
  %66 = vmatprep.subr.mxu0 0.0
  %67 = vmatpush1.msra.mxu0 0.0
  %68 = vmatprep.subr.mxu0 0.0
  %69 = vmatpush1.msra.mxu0 0.0
  %70 = vmatprep.subr.mxu0 0.0
  %71 = vmatpush1.msra.mxu0 0.0
  %72 = vmatprep.subr.mxu0 0.0
  %73 = vmatpush1.msra.mxu0 0.0
  %74 = vmatprep.subr.mxu0 0.0
  %75 = vmatpush1.msra.mxu0 0.0
  %76 = vmatprep.subr.mxu0 0.0
  %77 = vmatpush1.msra.mxu0 0.0
  %78 = vmatprep.subr.mxu0 0.0
  %79 = vmatpush1.msra.mxu0 0.0
  %80 = vmatprep.subr.mxu0 0.0
  %81 = vmatpush1.msra.mxu0 0.0
  %82 = vmatprep.subr.mxu0 0.0
  %83 = vmatpush1.msra.mxu0 0.0
  %84 = vmatprep.subr.mxu0 0.0
  %85 = vmatpush1.msra.mxu0 0.0
  %86 = vmatprep.subr.mxu0 0.0
  %87 = vmatpush1.msra.mxu0 0.0
  %88 = vmatprep.subr.mxu0 0.0
  %89 = vmatpush1.msra.mxu0 0.0
  %90 = vmatprep.subr.mxu0 0.0
  %91 = vmatpush1.msra.mxu0 0.0
  %92 = vmatprep.subr.mxu0 0.0
  %93 = vmatpush1.msra.mxu0 0.0
  %94 = vmatprep.subr.mxu0 0.0
  %95 = vmatpush1.msra.mxu0 0.0
  %96 = vmatprep.mubr.f32.mxu0 0.0
  %97 = vmatmul.mubr.f32.gmra.mrb[0].mxu0 %v27
  %v98 = vpop.f32.mrb[0].mxu0
  %v99 = vadd.f32 %v23, %v98
  %v100 = vpop.f32.mrb[0].mxu0
  %101 = vmatprep.mubr.f32.mxu0 0.0
  %102 = vmatmul.mubr.f32.gmra.mrb[0].mxu0 %v30
  %v103 = vpop.f32.mrb[0].mxu0
  %v104 = vadd.f32 %v23, %v103
  %v105 = vpop.f32.mrb[0].mxu0
  %106 = vdwg.mxu0
  %vm107 = vcmask 31744
  %108 = vst.msk [vmem:[%s3] sm:$0xff] %vm107, %v99
  %109 = vst.msk [vmem:[%s3 + $0x8] sm:$0xff] %vm107, %v104
  // Predicated region
  $region14: #{forward.9} parent=0 // pred_check
    _
  $region15: #{forward.9} parent=0 // pred_check_branch
    %111 = sbr.rel (0) target = $region17
  $region16: #{forward.9} parent=0 // pred_region
    _
  $region17: #{forward.9} parent=0 // pred_fallthru
    _
  // Predicated region
  $region18: #{forward.9} parent=0 // pred_check
    _
  $region19: #{forward.9} parent=0 // pred_check_branch
    %113 = sbr.rel (0) target = $region21
  $region20: #{forward.9} parent=0 // pred_region
    _
  $region21: #{forward.9} parent=0 // pred_fallthru
    _

// kernel: forward.6
$region0: #{forward.6}
  #allocation0 [shape = 'u32[]', space=smem, size = 0x4, offset = 0x4, fixed_abs, tag = 'smem constant byte address 0x4 - core index']
  #allocation1 [shape = 'u32[144,128]{1,0:T(1,128)}', space=vmem, size = 0x12000, scoped, tag = 'internal scratch']
  #allocation2 [shape = 'f32[2,32]{1,0:T(2,128)}', space=vmem, size = 0x400, scoped, tag = 'scratch operand']
  %s0 = inlined_call_operand.vmem [shape: f32[8,2,16], index: 0, kind: input, shape index: {}]
  %s1 = inlined_call_operand.vmem [shape: f32[16,96], index: 1, kind: input, shape index: {}]
  %s2 = inlined_call_operand.vmem [shape: f32[1,96], index: 2, kind: input, shape index: {}, may-alias: {2,4}]
  %s3 = inlined_call_operand.vmem [shape: f32[32,96], index: 3, kind: input, shape index: {}]
  %s4 = inlined_call_operand.vmem [shape: f32[1,96], index: 4, kind: input, shape index: {}, may-alias: {2,4}]
  %s5 = inlined_call_operand.vmem [shape: f32[8,2,32], index: 5, kind: output, shape index: {}]
  %s6 = sld [smem:[#allocation0]]
  $region34: #{forward.6} parent=0
    _
  %s8 = ssub.s32 1, %s6
  %s9 = scalar_select 0, %s8, %s6
  // Predicated region
  $region2: #{forward.6} parent=0 // pred_check
    _
  $region3: #{forward.6} parent=0 // pred_check_branch
    %11 = sbr.rel (0) target = $region5
  $region4: #{forward.6} parent=0 // pred_region
    _
  $region5: #{forward.6} parent=0 // pred_fallthru
    _
  // Predicated region
  $region6: #{forward.6} parent=0 // pred_check
    _
  $region7: #{forward.6} parent=0 // pred_check_branch
    %13 = sbr.rel (0) target = $region9
  $region8: #{forward.6} parent=0 // pred_region
    _
  $region9: #{forward.6} parent=0 // pred_fallthru
    _
  // Predicated region
  $region10: #{forward.6} parent=0 // pred_check
    _
  $region11: #{forward.6} parent=0 // pred_check_branch
    %15 = sbr.rel (0) target = $region13
  $region12: #{forward.6} parent=0 // pred_region
    _
  $region13: #{forward.6} parent=0 // pred_fallthru
    _
  // Predicated region
  $region14: #{forward.6} parent=0 // pred_check
    _
  $region15: #{forward.6} parent=0 // pred_check_branch
    %17 = sbr.rel (0) target = $region17
  $region16: #{forward.6} parent=0 // pred_region
    _
  $region17: #{forward.6} parent=0 // pred_fallthru
    _
  // Predicated region
  $region18: #{forward.6} parent=0 // pred_check
    _
  $region19: #{forward.6} parent=0 // pred_check_branch
    %19 = sbr.rel (0) target = $region21
  $region20: #{forward.6} parent=0 // pred_region
    _
  $region21: #{forward.6} parent=0 // pred_fallthru
    _
  %p20 = scmp.eq.s32.totalorder 0, 0
  // Predicated region
  $region22: #{forward.6} parent=0 // pred_check
    %p21 = pneg %p20
  $region23: #{forward.6} parent=0 // pred_check_branch
    %23 = sbr.rel (%p21) target = $region25
  $region24: #{forward.6} parent=0 // pred_region
    %vm24 = vcmask 254976
    %25 = vst.msk [vmem:[#allocation2] sm:$0x3] %vm24, 0.0
  $region25: #{forward.6} parent=0 // pred_fallthru
    _
  %v26 = vld [vmem:[#allocation2] sm:$0x3]
  %v27 = vld [vmem:[%s0] sm:$0x3]
  %v28 = vld [vmem:[%s1] sm:$0xff]
  %v29 = vld [vmem:[%s1 + $0x8] sm:$0xff]
  %v30 = vld [vmem:[%s2] sm:$0x1]
  %v32 = vlaneseq
  %v33 = vshrl.u32 %v32, 7
  %v34 = vsub.s32 0, %v33
  %v35 = vrot.slane %v30, %v34
  %vm37 = vcmask 130048
  %v39 = vsel %vm37, %v27, 0
  %41 = vmatprep.subr.mxu0 0.0
  %42 = vmatpush1.msra.mxu0 %v28
  %43 = vmatprep.subr.mxu0 0.0
  %44 = vmatpush1.msra.mxu0 %v29
  %45 = vmatprep.subr.mxu0 0.0
  %46 = vmatpush1.msra.mxu0 0.0
  %47 = vmatprep.subr.mxu0 0.0
  %48 = vmatpush1.msra.mxu0 0.0
  %49 = vmatprep.subr.mxu0 0.0
  %50 = vmatpush1.msra.mxu0 0.0
  %51 = vmatprep.subr.mxu0 0.0
  %52 = vmatpush1.msra.mxu0 0.0
  %53 = vmatprep.subr.mxu0 0.0
  %54 = vmatpush1.msra.mxu0 0.0
  %55 = vmatprep.subr.mxu0 0.0
  %56 = vmatpush1.msra.mxu0 0.0
  %57 = vmatprep.subr.mxu0 0.0
  %58 = vmatpush1.msra.mxu0 0.0
  %59 = vmatprep.subr.mxu0 0.0
  %60 = vmatpush1.msra.mxu0 0.0
  %61 = vmatprep.subr.mxu0 0.0
  %62 = vmatpush1.msra.mxu0 0.0
  %63 = vmatprep.subr.mxu0 0.0
  %64 = vmatpush1.msra.mxu0 0.0
  %65 = vmatprep.subr.mxu0 0.0
  %66 = vmatpush1.msra.mxu0 0.0
  %67 = vmatprep.subr.mxu0 0.0
  %68 = vmatpush1.msra.mxu0 0.0
  %69 = vmatprep.subr.mxu0 0.0
  %70 = vmatpush1.msra.mxu0 0.0
  %71 = vmatprep.subr.mxu0 0.0
  %72 = vmatpush1.msra.mxu0 0.0
  %73 = vmatprep.subr.mxu0 0.0
  %74 = vmatpush1.msra.mxu0 0.0
  %75 = vmatprep.subr.mxu0 0.0
  %76 = vmatpush1.msra.mxu0 0.0
  %77 = vmatprep.subr.mxu0 0.0
  %78 = vmatpush1.msra.mxu0 0.0
  %79 = vmatprep.subr.mxu0 0.0
  %80 = vmatpush1.msra.mxu0 0.0
  %81 = vmatprep.subr.mxu0 0.0
  %82 = vmatpush1.msra.mxu0 0.0
  %83 = vmatprep.subr.mxu0 0.0
  %84 = vmatpush1.msra.mxu0 0.0
  %85 = vmatprep.subr.mxu0 0.0
  %86 = vmatpush1.msra.mxu0 0.0
  %87 = vmatprep.subr.mxu0 0.0
  %88 = vmatpush1.msra.mxu0 0.0
  %89 = vmatprep.subr.mxu0 0.0
  %90 = vmatpush1.msra.mxu0 0.0
  %91 = vmatprep.subr.mxu0 0.0
  %92 = vmatpush1.msra.mxu0 0.0
  %93 = vmatprep.subr.mxu0 0.0
  %94 = vmatpush1.msra.mxu0 0.0
  %95 = vmatprep.subr.mxu0 0.0
  %96 = vmatpush1.msra.mxu0 0.0
  %97 = vmatprep.subr.mxu0 0.0
  %98 = vmatpush1.msra.mxu0 0.0
  %99 = vmatprep.subr.mxu0 0.0
  %100 = vmatpush1.msra.mxu0 0.0
  %101 = vmatprep.subr.mxu0 0.0
  %102 = vmatpush1.msra.mxu0 0.0
  %103 = vmatprep.subr.mxu0 0.0
  %104 = vmatpush1.msra.mxu0 0.0
  %105 = vmatprep.mubr.f32.mxu0 0.0
  %106 = vmatmul.mubr.f32.gmra.mrb[0].mxu0 %v39
  %v107 = vpop.f32.mrb[0].mxu0
  %v108 = vadd.f32 %v35, %v107
  %v109 = vpop.f32.mrb[0].mxu0
  %110 = vdwg.mxu0
  %v111 = vld [vmem:[%s3] sm:$0xff]
  %v112 = vld [vmem:[%s3 + $0x8] sm:$0xff]
  %v113 = vld [vmem:[%s3 + $0x10] sm:$0xff]
  %v114 = vld [vmem:[%s3 + $0x18] sm:$0xff]
  %v115 = vld [vmem:[%s4] sm:$0x1]
  %v117 = vlaneseq
  %v118 = vshrl.u32 %v117, 7
  %v119 = vsub.s32 0, %v118
  %v120 = vrot.slane %v115, %v119
  %vm122 = vcmask 261120
  %v124 = vsel %vm122, %v26, 0
  %126 = vmatprep.subr.mxu0 0.0
  %127 = vmatpush1.msra.mxu0 %v111
  %128 = vmatprep.subr.mxu0 0.0
  %129 = vmatpush1.msra.mxu0 %v112
  %130 = vmatprep.subr.mxu0 0.0
  %131 = vmatpush1.msra.mxu0 %v113
  %132 = vmatprep.subr.mxu0 0.0
  %133 = vmatpush1.msra.mxu0 %v114
  %134 = vmatprep.subr.mxu0 0.0
  %135 = vmatpush1.msra.mxu0 0.0
  %136 = vmatprep.subr.mxu0 0.0
  %137 = vmatpush1.msra.mxu0 0.0
  %138 = vmatprep.subr.mxu0 0.0
  %139 = vmatpush1.msra.mxu0 0.0
  %140 = vmatprep.subr.mxu0 0.0
  %141 = vmatpush1.msra.mxu0 0.0
  %142 = vmatprep.subr.mxu0 0.0
  %143 = vmatpush1.msra.mxu0 0.0
  %144 = vmatprep.subr.mxu0 0.0
  %145 = vmatpush1.msra.mxu0 0.0
  %146 = vmatprep.subr.mxu0 0.0
  %147 = vmatpush1.msra.mxu0 0.0
  %148 = vmatprep.subr.mxu0 0.0
  %149 = vmatpush1.msra.mxu0 0.0
  %150 = vmatprep.subr.mxu0 0.0
  %151 = vmatpush1.msra.mxu0 0.0
  %152 = vmatprep.subr.mxu0 0.0
  %153 = vmatpush1.msra.mxu0 0.0
  %154 = vmatprep.subr.mxu0 0.0
  %155 = vmatpush1.msra.mxu0 0.0
  %156 = vmatprep.subr.mxu0 0.0
  %157 = vmatpush1.msra.mxu0 0.0
  %158 = vmatprep.subr.mxu0 0.0
  %159 = vmatpush1.msra.mxu0 0.0
  %160 = vmatprep.subr.mxu0 0.0
  %161 = vmatpush1.msra.mxu0 0.0
  %162 = vmatprep.subr.mxu0 0.0
  %163 = vmatpush1.msra.mxu0 0.0
  %164 = vmatprep.subr.mxu0 0.0
  %165 = vmatpush1.msra.mxu0 0.0
  %166 = vmatprep.subr.mxu0 0.0
  %167 = vmatpush1.msra.mxu0 0.0
  %168 = vmatprep.subr.mxu0 0.0
  %169 = vmatpush1.msra.mxu0 0.0
  %170 = vmatprep.subr.mxu0 0.0
  %171 = vmatpush1.msra.mxu0 0.0
  %172 = vmatprep.subr.mxu0 0.0
  %173 = vmatpush1.msra.mxu0 0.0
  %174 = vmatprep.subr.mxu0 0.0
  %175 = vmatpush1.msra.mxu0 0.0
  %176 = vmatprep.subr.mxu0 0.0
  %177 = vmatpush1.msra.mxu0 0.0
  %178 = vmatprep.subr.mxu0 0.0
  %179 = vmatpush1.msra.mxu0 0.0
  %180 = vmatprep.subr.mxu0 0.0
  %181 = vmatpush1.msra.mxu0 0.0
  %182 = vmatprep.subr.mxu0 0.0
  %183 = vmatpush1.msra.mxu0 0.0
  %184 = vmatprep.subr.mxu0 0.0
  %185 = vmatpush1.msra.mxu0 0.0
  %186 = vmatprep.subr.mxu0 0.0
  %187 = vmatpush1.msra.mxu0 0.0
  %188 = vmatprep.subr.mxu0 0.0
  %189 = vmatpush1.msra.mxu0 0.0
  %190 = vmatprep.mubr.f32.mxu0 0.0
  %191 = vmatmul.mubr.f32.gmra.mrb[0].mxu0 %v124
  %v192 = vpop.f32.mrb[0].mxu0
  %v193 = vadd.f32 %v120, %v192
  %v194 = vpop.f32.mrb[0].mxu0
  %195 = vdwg.mxu0
  %v196 = vadd.f32 %v108, %v193
  %v197 = vxor.u32 %v196, 2147483648
  %v198 = vmul.f32 %v197, 1.442695
  %v199 = vpow.pop %v198
  %v200 = vadd.f32 %v199, 1.0
  %v201 = vrcp.pop %v200
  %v202 = vmul.f32 1.0, %v201
  %204 = vrot.lane.b32.xlu0 %v193, 64
  %v205 = vpop.permute.xlu0 %204
  %v207 = vmul.f32 %v202, %v205
  %209 = vrot.lane.b32.xlu0 %v207, 64
  %v210 = vpop.permute.xlu0 %209
  %v212 = vadd.f32 %v108, %v210
  %v213 = vtanh.pop %v212
  %215 = vrot.lane.b32.xlu0 %v213, 64
  %v216 = vpop.permute.xlu0 %215
  %v218 = vsub.f32 %v26, %v216
  %220 = vrot.lane.b32.xlu0 %v218, 32
  %v221 = vpop.permute.xlu0 %220
  %v223 = vmul.f32 %v202, %v221
  %225 = vrot.lane.b32.xlu0 %v223, 32
  %v226 = vpop.permute.xlu0 %225
  %v228 = vadd.f32 %v213, %v226
  %230 = vrot.lane.b32.xlu0 %v228, 64
  %v231 = vpop.permute.xlu0 %230
  %vm233 = vcmask 254976
  %234 = vst.msk [vmem:[%s5] sm:$0x3] %vm233, %v231
  %s235 = scalar_lea.vmem %s0, 2
  %v236 = vld [vmem:[%s235] sm:$0x3]
  %v237 = vld [vmem:[%s1] sm:$0xff]
  %v238 = vld [vmem:[%s1 + $0x8] sm:$0xff]
  %v239 = vld [vmem:[%s2] sm:$0x1]
  %v241 = vlaneseq
  %v242 = vshrl.u32 %v241, 7
  %v243 = vsub.s32 0, %v242
  %v244 = vrot.slane %v239, %v243
  %v247 = vsel %vm37, %v236, 0
  %249 = vmatprep.subr.mxu0 0.0
  %250 = vmatpush1.msra.mxu0 %v237
  %251 = vmatprep.subr.mxu0 0.0
  %252 = vmatpush1.msra.mxu0 %v238
  %253 = vmatprep.subr.mxu0 0.0
  %254 = vmatpush1.msra.mxu0 0.0
  %255 = vmatprep.subr.mxu0 0.0
  %256 = vmatpush1.msra.mxu0 0.0
  %257 = vmatprep.subr.mxu0 0.0
  %258 = vmatpush1.msra.mxu0 0.0
  %259 = vmatprep.subr.mxu0 0.0
  %260 = vmatpush1.msra.mxu0 0.0
  %261 = vmatprep.subr.mxu0 0.0
  %262 = vmatpush1.msra.mxu0 0.0
  %263 = vmatprep.subr.mxu0 0.0
  %264 = vmatpush1.msra.mxu0 0.0
  %265 = vmatprep.subr.mxu0 0.0
  %266 = vmatpush1.msra.mxu0 0.0
  %267 = vmatprep.subr.mxu0 0.0
  %268 = vmatpush1.msra.mxu0 0.0
  %269 = vmatprep.subr.mxu0 0.0
  %270 = vmatpush1.msra.mxu0 0.0
  %271 = vmatprep.subr.mxu0 0.0
  %272 = vmatpush1.msra.mxu0 0.0
  %273 = vmatprep.subr.mxu0 0.0
  %274 = vmatpush1.msra.mxu0 0.0
  %275 = vmatprep.subr.mxu0 0.0
  %276 = vmatpush1.msra.mxu0 0.0
  %277 = vmatprep.subr.mxu0 0.0
  %278 = vmatpush1.msra.mxu0 0.0
  %279 = vmatprep.subr.mxu0 0.0
  %280 = vmatpush1.msra.mxu0 0.0
  %281 = vmatprep.subr.mxu0 0.0
  %282 = vmatpush1.msra.mxu0 0.0
  %283 = vmatprep.subr.mxu0 0.0
  %284 = vmatpush1.msra.mxu0 0.0
  %285 = vmatprep.subr.mxu0 0.0
  %286 = vmatpush1.msra.mxu0 0.0
  %287 = vmatprep.subr.mxu0 0.0
  %288 = vmatpush1.msra.mxu0 0.0
  %289 = vmatprep.subr.mxu0 0.0
  %290 = vmatpush1.msra.mxu0 0.0
  %291 = vmatprep.subr.mxu0 0.0
  %292 = vmatpush1.msra.mxu0 0.0
  %293 = vmatprep.subr.mxu0 0.0
  %294 = vmatpush1.msra.mxu0 0.0
  %295 = vmatprep.subr.mxu0 0.0
  %296 = vmatpush1.msra.mxu0 0.0
  %297 = vmatprep.subr.mxu0 0.0
  %298 = vmatpush1.msra.mxu0 0.0
  %299 = vmatprep.subr.mxu0 0.0
  %300 = vmatpush1.msra.mxu0 0.0
  %301 = vmatprep.subr.mxu0 0.0
  %302 = vmatpush1.msra.mxu0 0.0
  %303 = vmatprep.subr.mxu0 0.0
  %304 = vmatpush1.msra.mxu0 0.0
  %305 = vmatprep.subr.mxu0 0.0
  %306 = vmatpush1.msra.mxu0 0.0
  %307 = vmatprep.subr.mxu0 0.0
  %308 = vmatpush1.msra.mxu0 0.0
  %309 = vmatprep.subr.mxu0 0.0
  %310 = vmatpush1.msra.mxu0 0.0
  %311 = vmatprep.subr.mxu0 0.0
  %312 = vmatpush1.msra.mxu0 0.0
  %313 = vmatprep.mubr.f32.mxu0 0.0
  %314 = vmatmul.mubr.f32.gmra.mrb[0].mxu0 %v247
  %v315 = vpop.f32.mrb[0].mxu0
  %v316 = vadd.f32 %v244, %v315
  %v317 = vpop.f32.mrb[0].mxu0
  %318 = vdwg.mxu0
  %v319 = vld [vmem:[%s3] sm:$0xff]
  %v320 = vld [vmem:[%s3 + $0x8] sm:$0xff]
  %v321 = vld [vmem:[%s3 + $0x10] sm:$0xff]
  %v322 = vld [vmem:[%s3 + $0x18] sm:$0xff]
  %v323 = vld [vmem:[%s4] sm:$0x1]
  %v325 = vlaneseq
  %v326 = vshrl.u32 %v325, 7
  %v327 = vsub.s32 0, %v326
  %v328 = vrot.slane %v323, %v327
  %v330 = vsel %vm122, %v231, 0
  %332 = vmatprep.subr.mxu0 0.0
  %333 = vmatpush1.msra.mxu0 %v319
  %334 = vmatprep.subr.mxu0 0.0
  %335 = vmatpush1.msra.mxu0 %v320
  %336 = vmatprep.subr.mxu0 0.0
  %337 = vmatpush1.msra.mxu0 %v321
  %338 = vmatprep.subr.mxu0 0.0
  %339 = vmatpush1.msra.mxu0 %v322
  %340 = vmatprep.subr.mxu0 0.0
  %341 = vmatpush1.msra.mxu0 0.0
  %342 = vmatprep.subr.mxu0 0.0
  %343 = vmatpush1.msra.mxu0 0.0
  %344 = vmatprep.subr.mxu0 0.0
  %345 = vmatpush1.msra.mxu0 0.0
  %346 = vmatprep.subr.mxu0 0.0
  %347 = vmatpush1.msra.mxu0 0.0
  %348 = vmatprep.subr.mxu0 0.0
  %349 = vmatpush1.msra.mxu0 0.0
  %350 = vmatprep.subr.mxu0 0.0
  %351 = vmatpush1.msra.mxu0 0.0
  %352 = vmatprep.subr.mxu0 0.0
  %353 = vmatpush1.msra.mxu0 0.0
  %354 = vmatprep.subr.mxu0 0.0
  %355 = vmatpush1.msra.mxu0 0.0
  %356 = vmatprep.subr.mxu0 0.0
  %357 = vmatpush1.msra.mxu0 0.0
  %358 = vmatprep.subr.mxu0 0.0
  %359 = vmatpush1.msra.mxu0 0.0
  %360 = vmatprep.subr.mxu0 0.0
  %361 = vmatpush1.msra.mxu0 0.0
  %362 = vmatprep.subr.mxu0 0.0
  %363 = vmatpush1.msra.mxu0 0.0
  %364 = vmatprep.subr.mxu0 0.0
  %365 = vmatpush1.msra.mxu0 0.0
  %366 = vmatprep.subr.mxu0 0.0
  %367 = vmatpush1.msra.mxu0 0.0
  %368 = vmatprep.subr.mxu0 0.0
  %369 = vmatpush1.msra.mxu0 0.0
  %370 = vmatprep.subr.mxu0 0.0
  %371 = vmatpush1.msra.mxu0 0.0
  %372 = vmatprep.subr.mxu0 0.0
  %373 = vmatpush1.msra.mxu0 0.0
  %374 = vmatprep.subr.mxu0 0.0
  %375 = vmatpush1.msra.mxu0 0.0
  %376 = vmatprep.subr.mxu0 0.0
  %377 = vmatpush1.msra.mxu0 0.0
  %378 = vmatprep.subr.mxu0 0.0
  %379 = vmatpush1.msra.mxu0 0.0
  %380 = vmatprep.subr.mxu0 0.0
  %381 = vmatpush1.msra.mxu0 0.0
  %382 = vmatprep.subr.mxu0 0.0
  %383 = vmatpush1.msra.mxu0 0.0
  %384 = vmatprep.subr.mxu0 0.0
  %385 = vmatpush1.msra.mxu0 0.0
  %386 = vmatprep.subr.mxu0 0.0
  %387 = vmatpush1.msra.mxu0 0.0
  %388 = vmatprep.subr.mxu0 0.0
  %389 = vmatpush1.msra.mxu0 0.0
  %390 = vmatprep.subr.mxu0 0.0
  %391 = vmatpush1.msra.mxu0 0.0
  %392 = vmatprep.subr.mxu0 0.0
  %393 = vmatpush1.msra.mxu0 0.0
  %394 = vmatprep.subr.mxu0 0.0
  %395 = vmatpush1.msra.mxu0 0.0
  %396 = vmatprep.mubr.f32.mxu0 0.0
  %397 = vmatmul.mubr.f32.gmra.mrb[0].mxu0 %v330
  %v398 = vpop.f32.mrb[0].mxu0
  %v399 = vadd.f32 %v328, %v398
  %v400 = vpop.f32.mrb[0].mxu0
  %401 = vdwg.mxu0
  %v402 = vadd.f32 %v316, %v399
  %v403 = vxor.u32 %v402, 2147483648
  %v404 = vmul.f32 %v403, 1.442695
  %v405 = vpow.pop %v404
  %v406 = vadd.f32 %v405, 1.0
  %v407 = vrcp.pop %v406
  %v408 = vmul.f32 1.0, %v407
  %410 = vrot.lane.b32.xlu0 %v399, 64
  %v411 = vpop.permute.xlu0 %410
  %v413 = vmul.f32 %v408, %v411
  %415 = vrot.lane.b32.xlu0 %v413, 64
  %v416 = vpop.permute.xlu0 %415
  %v418 = vadd.f32 %v316, %v416
  %v419 = vtanh.pop %v418
  %v420 = vsub.f32 %v228, %v419
  %422 = vrot.lane.b32.xlu0 %v420, 96
  %v423 = vpop.permute.xlu0 %422
  %v425 = vmul.f32 %v408, %v423
  %427 = vrot.lane.b32.xlu0 %v425, 32
  %v428 = vpop.permute.xlu0 %427
  %v430 = vadd.f32 %v419, %v428
  %432 = vrot.lane.b32.xlu0 %v430, 64
  %v433 = vpop.permute.xlu0 %432
  %s435 = scalar_lea.vmem %s5, 2
  %436 = vst.msk [vmem:[%s435] sm:$0x3] %vm233, %v433
  %s437 = scalar_lea.vmem %s0, 4
  %v438 = vld [vmem:[%s437] sm:$0x3]
  %v439 = vld [vmem:[%s1] sm:$0xff]
  %v440 = vld [vmem:[%s1 + $0x8] sm:$0xff]
  %v441 = vld [vmem:[%s2] sm:$0x1]
  %v443 = vlaneseq
  %v444 = vshrl.u32 %v443, 7
  %v445 = vsub.s32 0, %v444
  %v446 = vrot.slane %v441, %v445
  %v449 = vsel %vm37, %v438, 0
  %451 = vmatprep.subr.mxu0 0.0
  %452 = vmatpush1.msra.mxu0 %v439
  %453 = vmatprep.subr.mxu0 0.0
  %454 = vmatpush1.msra.mxu0 %v440
  %455 = vmatprep.subr.mxu0 0.0
  %456 = vmatpush1.msra.mxu0 0.0
  %457 = vmatprep.subr.mxu0 0.0
  %458 = vmatpush1.msra.mxu0 0.0
  %459 = vmatprep.subr.mxu0 0.0
  %460 = vmatpush1.msra.mxu0 0.0
  %461 = vmatprep.subr.mxu0 0.0
  %462 = vmatpush1.msra.mxu0 0.0
  %463 = vmatprep.subr.mxu0 0.0
  %464 = vmatpush1.msra.mxu0 0.0
  %465 = vmatprep.subr.mxu0 0.0
  %466 = vmatpush1.msra.mxu0 0.0
  %467 = vmatprep.subr.mxu0 0.0
  %468 = vmatpush1.msra.mxu0 0.0
  %469 = vmatprep.subr.mxu0 0.0
  %470 = vmatpush1.msra.mxu0 0.0
  %471 = vmatprep.subr.mxu0 0.0
  %472 = vmatpush1.msra.mxu0 0.0
  %473 = vmatprep.subr.mxu0 0.0
  %474 = vmatpush1.msra.mxu0 0.0
  %475 = vmatprep.subr.mxu0 0.0
  %476 = vmatpush1.msra.mxu0 0.0
  %477 = vmatprep.subr.mxu0 0.0
  %478 = vmatpush1.msra.mxu0 0.0
  %479 = vmatprep.subr.mxu0 0.0
  %480 = vmatpush1.msra.mxu0 0.0
  %481 = vmatprep.subr.mxu0 0.0
  %482 = vmatpush1.msra.mxu0 0.0
  %483 = vmatprep.subr.mxu0 0.0
  %484 = vmatpush1.msra.mxu0 0.0
  %485 = vmatprep.subr.mxu0 0.0
  %486 = vmatpush1.msra.mxu0 0.0
  %487 = vmatprep.subr.mxu0 0.0
  %488 = vmatpush1.msra.mxu0 0.0
  %489 = vmatprep.subr.mxu0 0.0
  %490 = vmatpush1.msra.mxu0 0.0
  %491 = vmatprep.subr.mxu0 0.0
  %492 = vmatpush1.msra.mxu0 0.0
  %493 = vmatprep.subr.mxu0 0.0
  %494 = vmatpush1.msra.mxu0 0.0
  %495 = vmatprep.subr.mxu0 0.0
  %496 = vmatpush1.msra.mxu0 0.0
  %497 = vmatprep.subr.mxu0 0.0
  %498 = vmatpush1.msra.mxu0 0.0
  %499 = vmatprep.subr.mxu0 0.0
  %500 = vmatpush1.msra.mxu0 0.0
  %501 = vmatprep.subr.mxu0 0.0
  %502 = vmatpush1.msra.mxu0 0.0
  %503 = vmatprep.subr.mxu0 0.0
  %504 = vmatpush1.msra.mxu0 0.0
  %505 = vmatprep.subr.mxu0 0.0
  %506 = vmatpush1.msra.mxu0 0.0
  %507 = vmatprep.subr.mxu0 0.0
  %508 = vmatpush1.msra.mxu0 0.0
  %509 = vmatprep.subr.mxu0 0.0
  %510 = vmatpush1.msra.mxu0 0.0
  %511 = vmatprep.subr.mxu0 0.0
  %512 = vmatpush1.msra.mxu0 0.0
  %513 = vmatprep.subr.mxu0 0.0
  %514 = vmatpush1.msra.mxu0 0.0
  %515 = vmatprep.mubr.f32.mxu0 0.0
  %516 = vmatmul.mubr.f32.gmra.mrb[0].mxu0 %v449
  %v517 = vpop.f32.mrb[0].mxu0
  %v518 = vadd.f32 %v446, %v517
  %v519 = vpop.f32.mrb[0].mxu0
  %520 = vdwg.mxu0
  %v521 = vld [vmem:[%s3] sm:$0xff]
  %v522 = vld [vmem:[%s3 + $0x8] sm:$0xff]
  %v523 = vld [vmem:[%s3 + $0x10] sm:$0xff]
  %v524 = vld [vmem:[%s3 + $0x18] sm:$0xff]
  %v525 = vld [vmem:[%s4] sm:$0x1]
  %v527 = vlaneseq
  %v528 = vshrl.u32 %v527, 7
  %v529 = vsub.s32 0, %v528
  %v530 = vrot.slane %v525, %v529
  %v532 = vsel %vm122, %v433, 0
  %534 = vmatprep.subr.mxu0 0.0
  %535 = vmatpush1.msra.mxu0 %v521
  %536 = vmatprep.subr.mxu0 0.0
  %537 = vmatpush1.msra.mxu0 %v522
  %538 = vmatprep.subr.mxu0 0.0
  %539 = vmatpush1.msra.mxu0 %v523
  %540 = vmatprep.subr.mxu0 0.0
  %541 = vmatpush1.msra.mxu0 %v524
  %542 = vmatprep.subr.mxu0 0.0
  %543 = vmatpush1.msra.mxu0 0.0
  %544 = vmatprep.subr.mxu0 0.0
  %545 = vmatpush1.msra.mxu0 0.0
  %546 = vmatprep.subr.mxu0 0.0
  %547 = vmatpush1.msra.mxu0 0.0
  %548 = vmatprep.subr.mxu0 0.0
  %549 = vmatpush1.msra.mxu0 0.0
  %550 = vmatprep.subr.mxu0 0.0
  %551 = vmatpush1.msra.mxu0 0.0
  %552 = vmatprep.subr.mxu0 0.0
  %553 = vmatpush1.msra.mxu0 0.0
  %554 = vmatprep.subr.mxu0 0.0
  %555 = vmatpush1.msra.mxu0 0.0
  %556 = vmatprep.subr.mxu0 0.0
  %557 = vmatpush1.msra.mxu0 0.0
  %558 = vmatprep.subr.mxu0 0.0
  %559 = vmatpush1.msra.mxu0 0.0
  %560 = vmatprep.subr.mxu0 0.0
  %561 = vmatpush1.msra.mxu0 0.0
  %562 = vmatprep.subr.mxu0 0.0
  %563 = vmatpush1.msra.mxu0 0.0
  %564 = vmatprep.subr.mxu0 0.0
  %565 = vmatpush1.msra.mxu0 0.0
  %566 = vmatprep.subr.mxu0 0.0
  %567 = vmatpush1.msra.mxu0 0.0
  %568 = vmatprep.subr.mxu0 0.0
  %569 = vmatpush1.msra.mxu0 0.0
  %570 = vmatprep.subr.mxu0 0.0
  %571 = vmatpush1.msra.mxu0 0.0
  %572 = vmatprep.subr.mxu0 0.0
  %573 = vmatpush1.msra.mxu0 0.0
  %574 = vmatprep.subr.mxu0 0.0
  %575 = vmatpush1.msra.mxu0 0.0
  %576 = vmatprep.subr.mxu0 0.0
  %577 = vmatpush1.msra.mxu0 0.0
  %578 = vmatprep.subr.mxu0 0.0
  %579 = vmatpush1.msra.mxu0 0.0
  %580 = vmatprep.subr.mxu0 0.0
  %581 = vmatpush1.msra.mxu0 0.0
  %582 = vmatprep.subr.mxu0 0.0
  %583 = vmatpush1.msra.mxu0 0.0
  %584 = vmatprep.subr.mxu0 0.0
  %585 = vmatpush1.msra.mxu0 0.0
  %586 = vmatprep.subr.mxu0 0.0
  %587 = vmatpush1.msra.mxu0 0.0
  %588 = vmatprep.subr.mxu0 0.0
  %589 = vmatpush1.msra.mxu0 0.0
  %590 = vmatprep.subr.mxu0 0.0
  %591 = vmatpush1.msra.mxu0 0.0
  %592 = vmatprep.subr.mxu0 0.0
  %593 = vmatpush1.msra.mxu0 0.0
  %594 = vmatprep.subr.mxu0 0.0
  %595 = vmatpush1.msra.mxu0 0.0
  %596 = vmatprep.subr.mxu0 0.0
  %597 = vmatpush1.msra.mxu0 0.0
  %598 = vmatprep.mubr.f32.mxu0 0.0
  %599 = vmatmul.mubr.f32.gmra.mrb[0].mxu0 %v532
  %v600 = vpop.f32.mrb[0].mxu0
  %v601 = vadd.f32 %v530, %v600
  %v602 = vpop.f32.mrb[0].mxu0
  %603 = vdwg.mxu0
  %v604 = vadd.f32 %v518, %v601
  %v605 = vxor.u32 %v604, 2147483648
  %v606 = vmul.f32 %v605, 1.442695
  %v607 = vpow.pop %v606
  %v608 = vadd.f32 %v607, 1.0
  %v609 = vrcp.pop %v608
  %v610 = vmul.f32 1.0, %v609
  %612 = vrot.lane.b32.xlu0 %v601, 64
  %v613 = vpop.permute.xlu0 %612
  %v615 = vmul.f32 %v610, %v613
  %617 = vrot.lane.b32.xlu0 %v615, 64
  %v618 = vpop.permute.xlu0 %617
  %v620 = vadd.f32 %v518, %v618
  %v621 = vtanh.pop %v620
  %v622 = vsub.f32 %v430, %v621
  %624 = vrot.lane.b32.xlu0 %v622, 96
  %v625 = vpop.permute.xlu0 %624
  %v627 = vmul.f32 %v610, %v625
  %629 = vrot.lane.b32.xlu0 %v627, 32
  %v630 = vpop.permute.xlu0 %629
  %v632 = vadd.f32 %v621, %v630
  %634 = vrot.lane.b32.xlu0 %v632, 64
  %v635 = vpop.permute.xlu0 %634
  %s637 = scalar_lea.vmem %s5, 4
  %638 = vst.msk [vmem:[%s637] sm:$0x3] %vm233, %v635
  %s639 = scalar_lea.vmem %s0, 6
  %v640 = vld [vmem:[%s639] sm:$0x3]
  %v641 = vld [vmem:[%s1] sm:$0xff]
  %v642 = vld [vmem:[%s1 + $0x8] sm:$0xff]
  %v643 = vld [vmem:[%s2] sm:$0x1]
  %v645 = vlaneseq
  %v646 = vshrl.u32 %v645, 7
  %v647 = vsub.s32 0, %v646
  %v648 = vrot.slane %v643, %v647
  %v651 = vsel %vm37, %v640, 0
  %653 = vmatprep.subr.mxu0 0.0
  %654 = vmatpush1.msra.mxu0 %v641
  %655 = vmatprep.subr.mxu0 0.0
  %656 = vmatpush1.msra.mxu0 %v642
  %657 = vmatprep.subr.mxu0 0.0
  %658 = vmatpush1.msra.mxu0 0.0
  %659 = vmatprep.subr.mxu0 0.0
  %660 = vmatpush1.msra.mxu0 0.0
  %661 = vmatprep.subr.mxu0 0.0
  %662 = vmatpush1.msra.mxu0 0.0
  %663 = vmatprep.subr.mxu0 0.0
  %664 = vmatpush1.msra.mxu0 0.0
  %665 = vmatprep.subr.mxu0 0.0
  %666 = vmatpush1.msra.mxu0 0.0
  %667 = vmatprep.subr.mxu0 0.0
  %668 = vmatpush1.msra.mxu0 0.0
  %669 = vmatprep.subr.mxu0 0.0
  %670 = vmatpush1.msra.mxu0 0.0
  %671 = vmatprep.subr.mxu0 0.0
  %672 = vmatpush1.msra.mxu0 0.0
  %673 = vmatprep.subr.mxu0 0.0
  %674 = vmatpush1.msra.mxu0 0.0
  %675 = vmatprep.subr.mxu0 0.0
  %676 = vmatpush1.msra.mxu0 0.0
  %677 = vmatprep.subr.mxu0 0.0
  %678 = vmatpush1.msra.mxu0 0.0
  %679 = vmatprep.subr.mxu0 0.0
  %680 = vmatpush1.msra.mxu0 0.0
  %681 = vmatprep.subr.mxu0 0.0
  %682 = vmatpush1.msra.mxu0 0.0
  %683 = vmatprep.subr.mxu0 0.0
  %684 = vmatpush1.msra.mxu0 0.0
  %685 = vmatprep.subr.mxu0 0.0
  %686 = vmatpush1.msra.mxu0 0.0
  %687 = vmatprep.subr.mxu0 0.0
  %688 = vmatpush1.msra.mxu0 0.0
  %689 = vmatprep.subr.mxu0 0.0
  %690 = vmatpush1.msra.mxu0 0.0
  %691 = vmatprep.subr.mxu0 0.0
  %692 = vmatpush1.msra.mxu0 0.0
  %693 = vmatprep.subr.mxu0 0.0
  %694 = vmatpush1.msra.mxu0 0.0
  %695 = vmatprep.subr.mxu0 0.0
  %696 = vmatpush1.msra.mxu0 0.0
  %697 = vmatprep.subr.mxu0 0.0
  %698 = vmatpush1.msra.mxu0 0.0
  %699 = vmatprep.subr.mxu0 0.0
  %700 = vmatpush1.msra.mxu0 0.0
  %701 = vmatprep.subr.mxu0 0.0
  %702 = vmatpush1.msra.mxu0 0.0
  %703 = vmatprep.subr.mxu0 0.0
  %704 = vmatpush1.msra.mxu0 0.0
  %705 = vmatprep.subr.mxu0 0.0
  %706 = vmatpush1.msra.mxu0 0.0
  %707 = vmatprep.subr.mxu0 0.0
  %708 = vmatpush1.msra.mxu0 0.0
  %709 = vmatprep.subr.mxu0 0.0
  %710 = vmatpush1.msra.mxu0 0.0
  %711 = vmatprep.subr.mxu0 0.0
  %712 = vmatpush1.msra.mxu0 0.0
  %713 = vmatprep.subr.mxu0 0.0
  %714 = vmatpush1.msra.mxu0 0.0
  %715 = vmatprep.subr.mxu0 0.0
  %716 = vmatpush1.msra.mxu0 0.0
  %717 = vmatprep.mubr.f32.mxu0 0.0
  %718 = vmatmul.mubr.f32.gmra.mrb[0].mxu0 %v651
  %v719 = vpop.f32.mrb[0].mxu0
  %v720 = vadd.f32 %v648, %v719
  %v721 = vpop.f32.mrb[0].mxu0
  %722 = vdwg.mxu0
  %v723 = vld [vmem:[%s3] sm:$0xff]
  %v724 = vld [vmem:[%s3 + $0x8] sm:$0xff]
  %v725 = vld [vmem:[%s3 + $0x10] sm:$0xff]
  %v726 = vld [vmem:[%s3 + $0x18] sm:$0xff]
  %v727 = vld [vmem:[%s4] sm:$0x1]
  %v729 = vlaneseq
  %v730 = vshrl.u32 %v729, 7
  %v731 = vsub.s32 0, %v730
  %v732 = vrot.slane %v727, %v731
  %v734 = vsel %vm122, %v635, 0
  %736 = vmatprep.subr.mxu0 0.0
  %737 = vmatpush1.msra.mxu0 %v723
  %738 = vmatprep.subr.mxu0 0.0
  %739 = vmatpush1.msra.mxu0 %v724
  %740 = vmatprep.subr.mxu0 0.0
  %741 = vmatpush1.msra.mxu0 %v725
  %742 = vmatprep.subr.mxu0 0.0
  %743 = vmatpush1.msra.mxu0 %v726
  %744 = vmatprep.subr.mxu0 0.0
  %745 = vmatpush1.msra.mxu0 0.0
  %746 = vmatprep.subr.mxu0 0.0
  %747 = vmatpush1.msra.mxu0 0.0
  %748 = vmatprep.subr.mxu0 0.0
  %749 = vmatpush1.msra.mxu0 0.0
  %750 = vmatprep.subr.mxu0 0.0
  %751 = vmatpush1.msra.mxu0 0.0
  %752 = vmatprep.subr.mxu0 0.0
  %753 = vmatpush1.msra.mxu0 0.0
  %754 = vmatprep.subr.mxu0 0.0
  %755 = vmatpush1.msra.mxu0 0.0
  %756 = vmatprep.subr.mxu0 0.0
  %757 = vmatpush1.msra.mxu0 0.0
  %758 = vmatprep.subr.mxu0 0.0
  %759 = vmatpush1.msra.mxu0 0.0
  %760 = vmatprep.subr.mxu0 0.0
  %761 = vmatpush1.msra.mxu0 0.0
  %762 = vmatprep.subr.mxu0 0.0
  %763 = vmatpush1.msra.mxu0 0.0
  %764 = vmatprep.subr.mxu0 0.0
  %765 = vmatpush1.msra.mxu0 0.0
  %766 = vmatprep.subr.mxu0 0.0
  %767 = vmatpush1.msra.mxu0 0.0
  %768 = vmatprep.subr.mxu0 0.0
  %769 = vmatpush1.msra.mxu0 0.0
  %770 = vmatprep.subr.mxu0 0.0
  %771 = vmatpush1.msra.mxu0 0.0
  %772 = vmatprep.subr.mxu0 0.0
  %773 = vmatpush1.msra.mxu0 0.0
  %774 = vmatprep.subr.mxu0 0.0
  %775 = vmatpush1.msra.mxu0 0.0
  %776 = vmatprep.subr.mxu0 0.0
  %777 = vmatpush1.msra.mxu0 0.0
  %778 = vmatprep.subr.mxu0 0.0
  %779 = vmatpush1.msra.mxu0 0.0
  %780 = vmatprep.subr.mxu0 0.0
  %781 = vmatpush1.msra.mxu0 0.0
  %782 = vmatprep.subr.mxu0 0.0
  %783 = vmatpush1.msra.mxu0 0.0
  %784 = vmatprep.subr.mxu0 0.0
  %785 = vmatpush1.msra.mxu0 0.0
  %786 = vmatprep.subr.mxu0 0.0
  %787 = vmatpush1.msra.mxu0 0.0
  %788 = vmatprep.subr.mxu0 0.0
  %789 = vmatpush1.msra.mxu0 0.0
  %790 = vmatprep.subr.mxu0 0.0
  %791 = vmatpush1.msra.mxu0 0.0
  %792 = vmatprep.subr.mxu0 0.0
  %793 = vmatpush1.msra.mxu0 0.0
  %794 = vmatprep.subr.mxu0 0.0
  %795 = vmatpush1.msra.mxu0 0.0
  %796 = vmatprep.subr.mxu0 0.0
  %797 = vmatpush1.msra.mxu0 0.0
  %798 = vmatprep.subr.mxu0 0.0
  %799 = vmatpush1.msra.mxu0 0.0
  %800 = vmatprep.mubr.f32.mxu0 0.0
  %801 = vmatmul.mubr.f32.gmra.mrb[0].mxu0 %v734
  %v802 = vpop.f32.mrb[0].mxu0
  %v803 = vadd.f32 %v732, %v802
  %v804 = vpop.f32.mrb[0].mxu0
  %805 = vdwg.mxu0
  %v806 = vadd.f32 %v720, %v803
  %v807 = vxor.u32 %v806, 2147483648
  %v808 = vmul.f32 %v807, 1.442695
  %v809 = vpow.pop %v808
  %v810 = vadd.f32 %v809, 1.0
  %v811 = vrcp.pop %v810
  %v812 = vmul.f32 1.0, %v811
  %814 = vrot.lane.b32.xlu0 %v803, 64
  %v815 = vpop.permute.xlu0 %814
  %v817 = vmul.f32 %v812, %v815
  %819 = vrot.lane.b32.xlu0 %v817, 64
  %v820 = vpop.permute.xlu0 %819
  %v822 = vadd.f32 %v720, %v820
  %v823 = vtanh.pop %v822
  %v824 = vsub.f32 %v632, %v823
  %826 = vrot.lane.b32.xlu0 %v824, 96
  %v827 = vpop.permute.xlu0 %826
  %v829 = vmul.f32 %v812, %v827
  %831 = vrot.lane.b32.xlu0 %v829, 32
  %v832 = vpop.permute.xlu0 %831
  %v834 = vadd.f32 %v823, %v832
  %836 = vrot.lane.b32.xlu0 %v834, 64
  %v837 = vpop.permute.xlu0 %836
  %s839 = scalar_lea.vmem %s5, 6
  %840 = vst.msk [vmem:[%s839] sm:$0x3] %vm233, %v837
  %s841 = scalar_lea.vmem %s0, 8
  %v842 = vld [vmem:[%s841] sm:$0x3]
  %v843 = vld [vmem:[%s1] sm:$0xff]
  %v844 = vld [vmem:[%s1 + $0x8] sm:$0xff]
  %v845 = vld [vmem:[%s2] sm:$0x1]
  %v847 = vlaneseq
  %v848 = vshrl.u32 %v847, 7
  %v849 = vsub.s32 0, %v848
  %v850 = vrot.slane %v845, %v849
  %v853 = vsel %vm37, %v842, 0
  %855 = vmatprep.subr.mxu0 0.0
  %856 = vmatpush1.msra.mxu0 %v843
  %857 = vmatprep.subr.mxu0 0.0
  %858 = vmatpush1.msra.mxu0 %v844
  %859 = vmatprep.subr.mxu0 0.0
  %860 = vmatpush1.msra.mxu0 0.0
  %861 = vmatprep.subr.mxu0 0.0
  %862 = vmatpush1.msra.mxu0 0.0
  %863 = vmatprep.subr.mxu0 0.0
  %864 = vmatpush1.msra.mxu0 0.0
  %865 = vmatprep.subr.mxu0 0.0
  %866 = vmatpush1.msra.mxu0 0.0
  %867 = vmatprep.subr.mxu0 0.0
  %868 = vmatpush1.msra.mxu0 0.0
  %869 = vmatprep.subr.mxu0 0.0
  %870 = vmatpush1.msra.mxu0 0.0
  %871 = vmatprep.subr.mxu0 0.0
  %872 = vmatpush1.msra.mxu0 0.0
  %873 = vmatprep.subr.mxu0 0.0
  %874 = vmatpush1.msra.mxu0 0.0
  %875 = vmatprep.subr.mxu0 0.0
  %876 = vmatpush1.msra.mxu0 0.0
  %877 = vmatprep.subr.mxu0 0.0
  %878 = vmatpush1.msra.mxu0 0.0
  %879 = vmatprep.subr.mxu0 0.0
  %880 = vmatpush1.msra.mxu0 0.0
  %881 = vmatprep.subr.mxu0 0.0
  %882 = vmatpush1.msra.mxu0 0.0
  %883 = vmatprep.subr.mxu0 0.0
  %884 = vmatpush1.msra.mxu0 0.0
  %885 = vmatprep.subr.mxu0 0.0
  %886 = vmatpush1.msra.mxu0 0.0
  %887 = vmatprep.subr.mxu0 0.0
  %888 = vmatpush1.msra.mxu0 0.0
  %889 = vmatprep.subr.mxu0 0.0
  %890 = vmatpush1.msra.mxu0 0.0
  %891 = vmatprep.subr.mxu0 0.0
  %892 = vmatpush1.msra.mxu0 0.0
  %893 = vmatprep.subr.mxu0 0.0
  %894 = vmatpush1.msra.mxu0 0.0
  %895 = vmatprep.subr.mxu0 0.0
  %896 = vmatpush1.msra.mxu0 0.0
  %897 = vmatprep.subr.mxu0 0.0
  %898 = vmatpush1.msra.mxu0 0.0
  %899 = vmatprep.subr.mxu0 0.0
  %900 = vmatpush1.msra.mxu0 0.0
  %901 = vmatprep.subr.mxu0 0.0
  %902 = vmatpush1.msra.mxu0 0.0
  %903 = vmatprep.subr.mxu0 0.0
  %904 = vmatpush1.msra.mxu0 0.0
  %905 = vmatprep.subr.mxu0 0.0
  %906 = vmatpush1.msra.mxu0 0.0
  %907 = vmatprep.subr.mxu0 0.0
  %908 = vmatpush1.msra.mxu0 0.0
  %909 = vmatprep.subr.mxu0 0.0
  %910 = vmatpush1.msra.mxu0 0.0
  %911 = vmatprep.subr.mxu0 0.0
  %912 = vmatpush1.msra.mxu0 0.0
  %913 = vmatprep.subr.mxu0 0.0
  %914 = vmatpush1.msra.mxu0 0.0
  %915 = vmatprep.subr.mxu0 0.0
  %916 = vmatpush1.msra.mxu0 0.0
  %917 = vmatprep.subr.mxu0 0.0
  %918 = vmatpush1.msra.mxu0 0.0
  %919 = vmatprep.mubr.f32.mxu0 0.0
  %920 = vmatmul.mubr.f32.gmra.mrb[0].mxu0 %v853
  %v921 = vpop.f32.mrb[0].mxu0
  %v922 = vadd.f32 %v850, %v921
  %v923 = vpop.f32.mrb[0].mxu0
  %924 = vdwg.mxu0
  %v925 = vld [vmem:[%s3] sm:$0xff]
  %v926 = vld [vmem:[%s3 + $0x8] sm:$0xff]
  %v927 = vld [vmem:[%s3 + $0x10] sm:$0xff]
  %v928 = vld [vmem:[%s3 + $0x18] sm:$0xff]
  %v929 = vld [vmem:[%s4] sm:$0x1]
  %v931 = vlaneseq
  %v932 = vshrl.u32 %v931, 7
  %v933 = vsub.s32 0, %v932
  %v934 = vrot.slane %v929, %v933
  %v936 = vsel %vm122, %v837, 0
  %938 = vmatprep.subr.mxu0 0.0
  %939 = vmatpush1.msra.mxu0 %v925
  %940 = vmatprep.subr.mxu0 0.0
  %941 = vmatpush1.msra.mxu0 %v926
  %942 = vmatprep.subr.mxu0 0.0
  %943 = vmatpush1.msra.mxu0 %v927
  %944 = vmatprep.subr.mxu0 0.0
  %945 = vmatpush1.msra.mxu0 %v928
  %946 = vmatprep.subr.mxu0 0.0
  %947 = vmatpush1.msra.mxu0 0.0
  %948 = vmatprep.subr.mxu0 0.0
  %949 = vmatpush1.msra.mxu0 0.0
  %950 = vmatprep.subr.mxu0 0.0
  %951 = vmatpush1.msra.mxu0 0.0
  %952 = vmatprep.subr.mxu0 0.0
  %953 = vmatpush1.msra.mxu0 0.0
  %954 = vmatprep.subr.mxu0 0.0
  %955 = vmatpush1.msra.mxu0 0.0
  %956 = vmatprep.subr.mxu0 0.0
  %957 = vmatpush1.msra.mxu0 0.0
  %958 = vmatprep.subr.mxu0 0.0
  %959 = vmatpush1.msra.mxu0 0.0
  %960 = vmatprep.subr.mxu0 0.0
  %961 = vmatpush1.msra.mxu0 0.0
  %962 = vmatprep.subr.mxu0 0.0
  %963 = vmatpush1.msra.mxu0 0.0
  %964 = vmatprep.subr.mxu0 0.0
  %965 = vmatpush1.msra.mxu0 0.0
  %966 = vmatprep.subr.mxu0 0.0
  %967 = vmatpush1.msra.mxu0 0.0
  %968 = vmatprep.subr.mxu0 0.0
  %969 = vmatpush1.msra.mxu0 0.0
  %970 = vmatprep.subr.mxu0 0.0
  %971 = vmatpush1.msra.mxu0 0.0
  %972 = vmatprep.subr.mxu0 0.0
  %973 = vmatpush1.msra.mxu0 0.0
  %974 = vmatprep.subr.mxu0 0.0
  %975 = vmatpush1.msra.mxu0 0.0
  %976 = vmatprep.subr.mxu0 0.0
  %977 = vmatpush1.msra.mxu0 0.0
  %978 = vmatprep.subr.mxu0 0.0
  %979 = vmatpush1.msra.mxu0 0.0
  %980 = vmatprep.subr.mxu0 0.0
  %981 = vmatpush1.msra.mxu0 0.0
  %982 = vmatprep.subr.mxu0 0.0
  %983 = vmatpush1.msra.mxu0 0.0
  %984 = vmatprep.subr.mxu0 0.0
  %985 = vmatpush1.msra.mxu0 0.0
  %986 = vmatprep.subr.mxu0 0.0
  %987 = vmatpush1.msra.mxu0 0.0
  %988 = vmatprep.subr.mxu0 0.0
  %989 = vmatpush1.msra.mxu0 0.0
  %990 = vmatprep.subr.mxu0 0.0
  %991 = vmatpush1.msra.mxu0 0.0
  %992 = vmatprep.subr.mxu0 0.0
  %993 = vmatpush1.msra.mxu0 0.0
  %994 = vmatprep.subr.mxu0 0.0
  %995 = vmatpush1.msra.mxu0 0.0
  %996 = vmatprep.subr.mxu0 0.0
  %997 = vmatpush1.msra.mxu0 0.0
  %998 = vmatprep.subr.mxu0 0.0
  %999 = vmatpush1.msra.mxu0 0.0
  %1000 = vmatprep.subr.mxu0 0.0
  %1001 = vmatpush1.msra.mxu0 0.0
  %1002 = vmatprep.mubr.f32.mxu0 0.0
  %1003 = vmatmul.mubr.f32.gmra.mrb[0].mxu0 %v936
  %v1004 = vpop.f32.mrb[0].mxu0
  %v1005 = vadd.f32 %v934, %v1004
  %v1006 = vpop.f32.mrb[0].mxu0
  %1007 = vdwg.mxu0
  %v1008 = vadd.f32 %v922, %v1005
  %v1009 = vxor.u32 %v1008, 2147483648
  %v1010 = vmul.f32 %v1009, 1.442695
  %v1011 = vpow.pop %v1010
  %v1012 = vadd.f32 %v1011, 1.0
  %v1013 = vrcp.pop %v1012
  %v1014 = vmul.f32 1.0, %v1013
  %1016 = vrot.lane.b32.xlu0 %v1005, 64
  %v1017 = vpop.permute.xlu0 %1016
  %v1019 = vmul.f32 %v1014, %v1017
  %1021 = vrot.lane.b32.xlu0 %v1019, 64
  %v1022 = vpop.permute.xlu0 %1021
  %v1024 = vadd.f32 %v922, %v1022
  %v1025 = vtanh.pop %v1024
  %v1026 = vsub.f32 %v834, %v1025
  %1028 = vrot.lane.b32.xlu0 %v1026, 96
  %v1029 = vpop.permute.xlu0 %1028
  %v1031 = vmul.f32 %v1014, %v1029
  %1033 = vrot.lane.b32.xlu0 %v1031, 32
  %v1034 = vpop.permute.xlu0 %1033
  %v1036 = vadd.f32 %v1025, %v1034
  %1038 = vrot.lane.b32.xlu0 %v1036, 64
  %v1039 = vpop.permute.xlu0 %1038
  %s1041 = scalar_lea.vmem %s5, 8
  %1042 = vst.msk [vmem:[%s1041] sm:$0x3] %vm233, %v1039
  %s1043 = scalar_lea.vmem %s0, 10
  %v1044 = vld [vmem:[%s1043] sm:$0x3]
  %v1045 = vld [vmem:[%s1] sm:$0xff]
  %v1046 = vld [vmem:[%s1 + $0x8] sm:$0xff]
  %v1047 = vld [vmem:[%s2] sm:$0x1]
  %v1049 = vlaneseq
  %v1050 = vshrl.u32 %v1049, 7
  %v1051 = vsub.s32 0, %v1050
  %v1052 = vrot.slane %v1047, %v1051
  %v1055 = vsel %vm37, %v1044, 0
  %1057 = vmatprep.subr.mxu0 0.0
  %1058 = vmatpush1.msra.mxu0 %v1045
  %1059 = vmatprep.subr.mxu0 0.0
  %1060 = vmatpush1.msra.mxu0 %v1046
  %1061 = vmatprep.subr.mxu0 0.0
  %1062 = vmatpush1.msra.mxu0 0.0
  %1063 = vmatprep.subr.mxu0 0.0
  %1064 = vmatpush1.msra.mxu0 0.0
  %1065 = vmatprep.subr.mxu0 0.0
  %1066 = vmatpush1.msra.mxu0 0.0
  %1067 = vmatprep.subr.mxu0 0.0
  %1068 = vmatpush1.msra.mxu0 0.0
  %1069 = vmatprep.subr.mxu0 0.0
  %1070 = vmatpush1.msra.mxu0 0.0
  %1071 = vmatprep.subr.mxu0 0.0
  %1072 = vmatpush1.msra.mxu0 0.0
  %1073 = vmatprep.subr.mxu0 0.0
  %1074 = vmatpush1.msra.mxu0 0.0
  %1075 = vmatprep.subr.mxu0 0.0
  %1076 = vmatpush1.msra.mxu0 0.0
  %1077 = vmatprep.subr.mxu0 0.0
  %1078 = vmatpush1.msra.mxu0 0.0
  %1079 = vmatprep.subr.mxu0 0.0
  %1080 = vmatpush1.msra.mxu0 0.0
  %1081 = vmatprep.subr.mxu0 0.0
  %1082 = vmatpush1.msra.mxu0 0.0
  %1083 = vmatprep.subr.mxu0 0.0
  %1084 = vmatpush1.msra.mxu0 0.0
  %1085 = vmatprep.subr.mxu0 0.0
  %1086 = vmatpush1.msra.mxu0 0.0
  %1087 = vmatprep.subr.mxu0 0.0
  %1088 = vmatpush1.msra.mxu0 0.0
  %1089 = vmatprep.subr.mxu0 0.0
  %1090 = vmatpush1.msra.mxu0 0.0
  %1091 = vmatprep.subr.mxu0 0.0
  %1092 = vmatpush1.msra.mxu0 0.0
  %1093 = vmatprep.subr.mxu0 0.0
  %1094 = vmatpush1.msra.mxu0 0.0
  %1095 = vmatprep.subr.mxu0 0.0
  %1096 = vmatpush1.msra.mxu0 0.0
  %1097 = vmatprep.subr.mxu0 0.0
  %1098 = vmatpush1.msra.mxu0 0.0
  %1099 = vmatprep.subr.mxu0 0.0
  %1100 = vmatpush1.msra.mxu0 0.0
  %1101 = vmatprep.subr.mxu0 0.0
  %1102 = vmatpush1.msra.mxu0 0.0
  %1103 = vmatprep.subr.mxu0 0.0
  %1104 = vmatpush1.msra.mxu0 0.0
  %1105 = vmatprep.subr.mxu0 0.0
  %1106 = vmatpush1.msra.mxu0 0.0
  %1107 = vmatprep.subr.mxu0 0.0
  %1108 = vmatpush1.msra.mxu0 0.0
  %1109 = vmatprep.subr.mxu0 0.0
  %1110 = vmatpush1.msra.mxu0 0.0
  %1111 = vmatprep.subr.mxu0 0.0
  %1112 = vmatpush1.msra.mxu0 0.0
  %1113 = vmatprep.subr.mxu0 0.0
  %1114 = vmatpush1.msra.mxu0 0.0
  %1115 = vmatprep.subr.mxu0 0.0
  %1116 = vmatpush1.msra.mxu0 0.0
  %1117 = vmatprep.subr.mxu0 0.0
  %1118 = vmatpush1.msra.mxu0 0.0
  %1119 = vmatprep.subr.mxu0 0.0
  %1120 = vmatpush1.msra.mxu0 0.0
  %1121 = vmatprep.mubr.f32.mxu0 0.0
  %1122 = vmatmul.mubr.f32.gmra.mrb[0].mxu0 %v1055
  %v1123 = vpop.f32.mrb[0].mxu0
  %v1124 = vadd.f32 %v1052, %v1123
  %v1125 = vpop.f32.mrb[0].mxu0
  %1126 = vdwg.mxu0
  %v1127 = vld [vmem:[%s3] sm:$0xff]
  %v1128 = vld [vmem:[%s3 + $0x8] sm:$0xff]
  %v1129 = vld [vmem:[%s3 + $0x10] sm:$0xff]
  %v1130 = vld [vmem:[%s3 + $0x18] sm:$0xff]
  %v1131 = vld [vmem:[%s4] sm:$0x1]
  %v1133 = vlaneseq
  %v1134 = vshrl.u32 %v1133, 7
  %v1135 = vsub.s32 0, %v1134
  %v1136 = vrot.slane %v1131, %v1135
  %v1138 = vsel %vm122, %v1039, 0
  %1140 = vmatprep.subr.mxu0 0.0
  %1141 = vmatpush1.msra.mxu0 %v1127
  %1142 = vmatprep.subr.mxu0 0.0
  %1143 = vmatpush1.msra.mxu0 %v1128
  %1144 = vmatprep.subr.mxu0 0.0
  %1145 = vmatpush1.msra.mxu0 %v1129
  %1146 = vmatprep.subr.mxu0 0.0
  %1147 = vmatpush1.msra.mxu0 %v1130
  %1148 = vmatprep.subr.mxu0 0.0
  %1149 = vmatpush1.msra.mxu0 0.0
  %1150 = vmatprep.subr.mxu0 0.0
  %1151 = vmatpush1.msra.mxu0 0.0
  %1152 = vmatprep.subr.mxu0 0.0
  %1153 = vmatpush1.msra.mxu0 0.0
  %1154 = vmatprep.subr.mxu0 0.0
  %1155 = vmatpush1.msra.mxu0 0.0
  %1156 = vmatprep.subr.mxu0 0.0
  %1157 = vmatpush1.msra.mxu0 0.0
  %1158 = vmatprep.subr.mxu0 0.0
  %1159 = vmatpush1.msra.mxu0 0.0
  %1160 = vmatprep.subr.mxu0 0.0
  %1161 = vmatpush1.msra.mxu0 0.0
  %1162 = vmatprep.subr.mxu0 0.0
  %1163 = vmatpush1.msra.mxu0 0.0
  %1164 = vmatprep.subr.mxu0 0.0
  %1165 = vmatpush1.msra.mxu0 0.0
  %1166 = vmatprep.subr.mxu0 0.0
  %1167 = vmatpush1.msra.mxu0 0.0
  %1168 = vmatprep.subr.mxu0 0.0
  %1169 = vmatpush1.msra.mxu0 0.0
  %1170 = vmatprep.subr.mxu0 0.0
  %1171 = vmatpush1.msra.mxu0 0.0
  %1172 = vmatprep.subr.mxu0 0.0
  %1173 = vmatpush1.msra.mxu0 0.0
  %1174 = vmatprep.subr.mxu0 0.0
  %1175 = vmatpush1.msra.mxu0 0.0
  %1176 = vmatprep.subr.mxu0 0.0
  %1177 = vmatpush1.msra.mxu0 0.0
  %1178 = vmatprep.subr.mxu0 0.0
  %1179 = vmatpush1.msra.mxu0 0.0
  %1180 = vmatprep.subr.mxu0 0.0
  %1181 = vmatpush1.msra.mxu0 0.0
  %1182 = vmatprep.subr.mxu0 0.0
  %1183 = vmatpush1.msra.mxu0 0.0
  %1184 = vmatprep.subr.mxu0 0.0
  %1185 = vmatpush1.msra.mxu0 0.0
  %1186 = vmatprep.subr.mxu0 0.0
  %1187 = vmatpush1.msra.mxu0 0.0
  %1188 = vmatprep.subr.mxu0 0.0
  %1189 = vmatpush1.msra.mxu0 0.0
  %1190 = vmatprep.subr.mxu0 0.0
  %1191 = vmatpush1.msra.mxu0 0.0
  %1192 = vmatprep.subr.mxu0 0.0
  %1193 = vmatpush1.msra.mxu0 0.0
  %1194 = vmatprep.subr.mxu0 0.0
  %1195 = vmatpush1.msra.mxu0 0.0
  %1196 = vmatprep.subr.mxu0 0.0
  %1197 = vmatpush1.msra.mxu0 0.0
  %1198 = vmatprep.subr.mxu0 0.0
  %1199 = vmatpush1.msra.mxu0 0.0
  %1200 = vmatprep.subr.mxu0 0.0
  %1201 = vmatpush1.msra.mxu0 0.0
  %1202 = vmatprep.subr.mxu0 0.0
  %1203 = vmatpush1.msra.mxu0 0.0
  %1204 = vmatprep.mubr.f32.mxu0 0.0
  %1205 = vmatmul.mubr.f32.gmra.mrb[0].mxu0 %v1138
  %v1206 = vpop.f32.mrb[0].mxu0
  %v1207 = vadd.f32 %v1136, %v1206
  %v1208 = vpop.f32.mrb[0].mxu0
  %1209 = vdwg.mxu0
  %v1210 = vadd.f32 %v1124, %v1207
  %v1211 = vxor.u32 %v1210, 2147483648
  %v1212 = vmul.f32 %v1211, 1.442695
  %v1213 = vpow.pop %v1212
  %v1214 = vadd.f32 %v1213, 1.0
  %v1215 = vrcp.pop %v1214
  %v1216 = vmul.f32 1.0, %v1215
  %1218 = vrot.lane.b32.xlu0 %v1207, 64
  %v1219 = vpop.permute.xlu0 %1218
  %v1221 = vmul.f32 %v1216, %v1219
  %1223 = vrot.lane.b32.xlu0 %v1221, 64
  %v1224 = vpop.permute.xlu0 %1223
  %v1226 = vadd.f32 %v1124, %v1224
  %v1227 = vtanh.pop %v1226
  %v1228 = vsub.f32 %v1036, %v1227
  %1230 = vrot.lane.b32.xlu0 %v1228, 96
  %v1231 = vpop.permute.xlu0 %1230
  %v1233 = vmul.f32 %v1216, %v1231
  %1235 = vrot.lane.b32.xlu0 %v1233, 32
  %v1236 = vpop.permute.xlu0 %1235
  %v1238 = vadd.f32 %v1227, %v1236
  %1240 = vrot.lane.b32.xlu0 %v1238, 64
  %v1241 = vpop.permute.xlu0 %1240
  %s1243 = scalar_lea.vmem %s5, 10
  %1244 = vst.msk [vmem:[%s1243] sm:$0x3] %vm233, %v1241
  %s1245 = scalar_lea.vmem %s0, 12
  %v1246 = vld [vmem:[%s1245] sm:$0x3]
  %v1247 = vld [vmem:[%s1] sm:$0xff]
  %v1248 = vld [vmem:[%s1 + $0x8] sm:$0xff]
  %v1249 = vld [vmem:[%s2] sm:$0x1]
  %v1251 = vlaneseq
  %v1252 = vshrl.u32 %v1251, 7
  %v1253 = vsub.s32 0, %v1252
  %v1254 = vrot.slane %v1249, %v1253
  %v1257 = vsel %vm37, %v1246, 0
  %1259 = vmatprep.subr.mxu0 0.0
  %1260 = vmatpush1.msra.mxu0 %v1247
  %1261 = vmatprep.subr.mxu0 0.0
  %1262 = vmatpush1.msra.mxu0 %v1248
  %1263 = vmatprep.subr.mxu0 0.0
  %1264 = vmatpush1.msra.mxu0 0.0
  %1265 = vmatprep.subr.mxu0 0.0
  %1266 = vmatpush1.msra.mxu0 0.0
  %1267 = vmatprep.subr.mxu0 0.0
  %1268 = vmatpush1.msra.mxu0 0.0
  %1269 = vmatprep.subr.mxu0 0.0
  %1270 = vmatpush1.msra.mxu0 0.0
  %1271 = vmatprep.subr.mxu0 0.0
  %1272 = vmatpush1.msra.mxu0 0.0
  %1273 = vmatprep.subr.mxu0 0.0
  %1274 = vmatpush1.msra.mxu0 0.0
  %1275 = vmatprep.subr.mxu0 0.0
  %1276 = vmatpush1.msra.mxu0 0.0
  %1277 = vmatprep.subr.mxu0 0.0
  %1278 = vmatpush1.msra.mxu0 0.0
  %1279 = vmatprep.subr.mxu0 0.0
  %1280 = vmatpush1.msra.mxu0 0.0
  %1281 = vmatprep.subr.mxu0 0.0
  %1282 = vmatpush1.msra.mxu0 0.0
  %1283 = vmatprep.subr.mxu0 0.0
  %1284 = vmatpush1.msra.mxu0 0.0
  %1285 = vmatprep.subr.mxu0 0.0
  %1286 = vmatpush1.msra.mxu0 0.0
  %1287 = vmatprep.subr.mxu0 0.0
  %1288 = vmatpush1.msra.mxu0 0.0
  %1289 = vmatprep.subr.mxu0 0.0
  %1290 = vmatpush1.msra.mxu0 0.0
  %1291 = vmatprep.subr.mxu0 0.0
  %1292 = vmatpush1.msra.mxu0 0.0
  %1293 = vmatprep.subr.mxu0 0.0
  %1294 = vmatpush1.msra.mxu0 0.0
  %1295 = vmatprep.subr.mxu0 0.0
  %1296 = vmatpush1.msra.mxu0 0.0
  %1297 = vmatprep.subr.mxu0 0.0
  %1298 = vmatpush1.msra.mxu0 0.0
  %1299 = vmatprep.subr.mxu0 0.0
  %1300 = vmatpush1.msra.mxu0 0.0
  %1301 = vmatprep.subr.mxu0 0.0
  %1302 = vmatpush1.msra.mxu0 0.0
  %1303 = vmatprep.subr.mxu0 0.0
  %1304 = vmatpush1.msra.mxu0 0.0
  %1305 = vmatprep.subr.mxu0 0.0
  %1306 = vmatpush1.msra.mxu0 0.0
  %1307 = vmatprep.subr.mxu0 0.0
  %1308 = vmatpush1.msra.mxu0 0.0
  %1309 = vmatprep.subr.mxu0 0.0
  %1310 = vmatpush1.msra.mxu0 0.0
  %1311 = vmatprep.subr.mxu0 0.0
  %1312 = vmatpush1.msra.mxu0 0.0
  %1313 = vmatprep.subr.mxu0 0.0
  %1314 = vmatpush1.msra.mxu0 0.0
  %1315 = vmatprep.subr.mxu0 0.0
  %1316 = vmatpush1.msra.mxu0 0.0
  %1317 = vmatprep.subr.mxu0 0.0
  %1318 = vmatpush1.msra.mxu0 0.0
  %1319 = vmatprep.subr.mxu0 0.0
  %1320 = vmatpush1.msra.mxu0 0.0
  %1321 = vmatprep.subr.mxu0 0.0
  %1322 = vmatpush1.msra.mxu0 0.0
  %1323 = vmatprep.mubr.f32.mxu0 0.0
  %1324 = vmatmul.mubr.f32.gmra.mrb[0].mxu0 %v1257
  %v1325 = vpop.f32.mrb[0].mxu0
  %v1326 = vadd.f32 %v1254, %v1325
  %v1327 = vpop.f32.mrb[0].mxu0
  %1328 = vdwg.mxu0
  %v1329 = vld [vmem:[%s3] sm:$0xff]
  %v1330 = vld [vmem:[%s3 + $0x8] sm:$0xff]
  %v1331 = vld [vmem:[%s3 + $0x10] sm:$0xff]
  %v1332 = vld [vmem:[%s3 + $0x18] sm:$0xff]
  %v1333 = vld [vmem:[%s4] sm:$0x1]
  %v1335 = vlaneseq
  %v1336 = vshrl.u32 %v1335, 7
  %v1337 = vsub.s32 0, %v1336
  %v1338 = vrot.slane %v1333, %v1337
  %v1340 = vsel %vm122, %v1241, 0
  %1342 = vmatprep.subr.mxu0 0.0
  %1343 = vmatpush1.msra.mxu0 %v1329
  %1344 = vmatprep.subr.mxu0 0.0
  %1345 = vmatpush1.msra.mxu0 %v1330
  %1346 = vmatprep.subr.mxu0 0.0
  %1347 = vmatpush1.msra.mxu0 %v1331
  %1348 = vmatprep.subr.mxu0 0.0
  %1349 = vmatpush1.msra.mxu0 %v1332
  %1350 = vmatprep.subr.mxu0 0.0
  %1351 = vmatpush1.msra.mxu0 0.0
  %1352 = vmatprep.subr.mxu0 0.0
  %1353 = vmatpush1.msra.mxu0 0.0
  %1354 = vmatprep.subr.mxu0 0.0
  %1355 = vmatpush1.msra.mxu0 0.0
  %1356 = vmatprep.subr.mxu0 0.0
  %1357 = vmatpush1.msra.mxu0 0.0
  %1358 = vmatprep.subr.mxu0 0.0
  %1359 = vmatpush1.msra.mxu0 0.0
  %1360 = vmatprep.subr.mxu0 0.0
  %1361 = vmatpush1.msra.mxu0 0.0
  %1362 = vmatprep.subr.mxu0 0.0
  %1363 = vmatpush1.msra.mxu0 0.0
  %1364 = vmatprep.subr.mxu0 0.0
  %1365 = vmatpush1.msra.mxu0 0.0
  %1366 = vmatprep.subr.mxu0 0.0
  %1367 = vmatpush1.msra.mxu0 0.0
  %1368 = vmatprep.subr.mxu0 0.0
  %1369 = vmatpush1.msra.mxu0 0.0
  %1370 = vmatprep.subr.mxu0 0.0
  %1371 = vmatpush1.msra.mxu0 0.0
  %1372 = vmatprep.subr.mxu0 0.0
  %1373 = vmatpush1.msra.mxu0 0.0
  %1374 = vmatprep.subr.mxu0 0.0
  %1375 = vmatpush1.msra.mxu0 0.0
  %1376 = vmatprep.subr.mxu0 0.0
  %1377 = vmatpush1.msra.mxu0 0.0
  %1378 = vmatprep.subr.mxu0 0.0
  %1379 = vmatpush1.msra.mxu0 0.0
  %1380 = vmatprep.subr.mxu0 0.0
  %1381 = vmatpush1.msra.mxu0 0.0
  %1382 = vmatprep.subr.mxu0 0.0
  %1383 = vmatpush1.msra.mxu0 0.0
  %1384 = vmatprep.subr.mxu0 0.0
  %1385 = vmatpush1.msra.mxu0 0.0
  %1386 = vmatprep.subr.mxu0 0.0
  %1387 = vmatpush1.msra.mxu0 0.0
  %1388 = vmatprep.subr.mxu0 0.0
  %1389 = vmatpush1.msra.mxu0 0.0
  %1390 = vmatprep.subr.mxu0 0.0
  %1391 = vmatpush1.msra.mxu0 0.0
  %1392 = vmatprep.subr.mxu0 0.0
  %1393 = vmatpush1.msra.mxu0 0.0
  %1394 = vmatprep.subr.mxu0 0.0
  %1395 = vmatpush1.msra.mxu0 0.0
  %1396 = vmatprep.subr.mxu0 0.0
  %1397 = vmatpush1.msra.mxu0 0.0
  %1398 = vmatprep.subr.mxu0 0.0
  %1399 = vmatpush1.msra.mxu0 0.0
  %1400 = vmatprep.subr.mxu0 0.0
  %1401 = vmatpush1.msra.mxu0 0.0
  %1402 = vmatprep.subr.mxu0 0.0
  %1403 = vmatpush1.msra.mxu0 0.0
  %1404 = vmatprep.subr.mxu0 0.0
  %1405 = vmatpush1.msra.mxu0 0.0
  %1406 = vmatprep.mubr.f32.mxu0 0.0
  %1407 = vmatmul.mubr.f32.gmra.mrb[0].mxu0 %v1340
  %v1408 = vpop.f32.mrb[0].mxu0
  %v1409 = vadd.f32 %v1338, %v1408
  %v1410 = vpop.f32.mrb[0].mxu0
  %1411 = vdwg.mxu0
  %v1412 = vadd.f32 %v1326, %v1409
  %v1413 = vxor.u32 %v1412, 2147483648
  %v1414 = vmul.f32 %v1413, 1.442695
  %v1415 = vpow.pop %v1414
  %v1416 = vadd.f32 %v1415, 1.0
  %v1417 = vrcp.pop %v1416
  %v1418 = vmul.f32 1.0, %v1417
  %1420 = vrot.lane.b32.xlu0 %v1409, 64
  %v1421 = vpop.permute.xlu0 %1420
  %v1423 = vmul.f32 %v1418, %v1421
  %1425 = vrot.lane.b32.xlu0 %v1423, 64
  %v1426 = vpop.permute.xlu0 %1425
  %v1428 = vadd.f32 %v1326, %v1426
  %v1429 = vtanh.pop %v1428
  %v1430 = vsub.f32 %v1238, %v1429
  %1432 = vrot.lane.b32.xlu0 %v1430, 96
  %v1433 = vpop.permute.xlu0 %1432
  %v1435 = vmul.f32 %v1418, %v1433
  %1437 = vrot.lane.b32.xlu0 %v1435, 32
  %v1438 = vpop.permute.xlu0 %1437
  %v1440 = vadd.f32 %v1429, %v1438
  %1442 = vrot.lane.b32.xlu0 %v1440, 64
  %v1443 = vpop.permute.xlu0 %1442
  %s1445 = scalar_lea.vmem %s5, 12
  %1446 = vst.msk [vmem:[%s1445] sm:$0x3] %vm233, %v1443
  %s1447 = scalar_lea.vmem %s0, 14
  %v1448 = vld [vmem:[%s1447] sm:$0x3]
  %v1449 = vld [vmem:[%s1] sm:$0xff]
  %v1450 = vld [vmem:[%s1 + $0x8] sm:$0xff]
  %v1451 = vld [vmem:[%s2] sm:$0x1]
  %v1453 = vlaneseq
  %v1454 = vshrl.u32 %v1453, 7
  %v1455 = vsub.s32 0, %v1454
  %v1456 = vrot.slane %v1451, %v1455
  %v1459 = vsel %vm37, %v1448, 0
  %1461 = vmatprep.subr.mxu0 0.0
  %1462 = vmatpush1.msra.mxu0 %v1449
  %1463 = vmatprep.subr.mxu0 0.0
  %1464 = vmatpush1.msra.mxu0 %v1450
  %1465 = vmatprep.subr.mxu0 0.0
  %1466 = vmatpush1.msra.mxu0 0.0
  %1467 = vmatprep.subr.mxu0 0.0
  %1468 = vmatpush1.msra.mxu0 0.0
  %1469 = vmatprep.subr.mxu0 0.0
  %1470 = vmatpush1.msra.mxu0 0.0
  %1471 = vmatprep.subr.mxu0 0.0
  %1472 = vmatpush1.msra.mxu0 0.0
  %1473 = vmatprep.subr.mxu0 0.0
  %1474 = vmatpush1.msra.mxu0 0.0
  %1475 = vmatprep.subr.mxu0 0.0
  %1476 = vmatpush1.msra.mxu0 0.0
  %1477 = vmatprep.subr.mxu0 0.0
  %1478 = vmatpush1.msra.mxu0 0.0
  %1479 = vmatprep.subr.mxu0 0.0
  %1480 = vmatpush1.msra.mxu0 0.0
  %1481 = vmatprep.subr.mxu0 0.0
  %1482 = vmatpush1.msra.mxu0 0.0
  %1483 = vmatprep.subr.mxu0 0.0
  %1484 = vmatpush1.msra.mxu0 0.0
  %1485 = vmatprep.subr.mxu0 0.0
  %1486 = vmatpush1.msra.mxu0 0.0
  %1487 = vmatprep.subr.mxu0 0.0
  %1488 = vmatpush1.msra.mxu0 0.0
  %1489 = vmatprep.subr.mxu0 0.0
  %1490 = vmatpush1.msra.mxu0 0.0
  %1491 = vmatprep.subr.mxu0 0.0
  %1492 = vmatpush1.msra.mxu0 0.0
  %1493 = vmatprep.subr.mxu0 0.0
  %1494 = vmatpush1.msra.mxu0 0.0
  %1495 = vmatprep.subr.mxu0 0.0
  %1496 = vmatpush1.msra.mxu0 0.0
  %1497 = vmatprep.subr.mxu0 0.0
  %1498 = vmatpush1.msra.mxu0 0.0
  %1499 = vmatprep.subr.mxu0 0.0
  %1500 = vmatpush1.msra.mxu0 0.0
  %1501 = vmatprep.subr.mxu0 0.0
  %1502 = vmatpush1.msra.mxu0 0.0
  %1503 = vmatprep.subr.mxu0 0.0
  %1504 = vmatpush1.msra.mxu0 0.0
  %1505 = vmatprep.subr.mxu0 0.0
  %1506 = vmatpush1.msra.mxu0 0.0
  %1507 = vmatprep.subr.mxu0 0.0
  %1508 = vmatpush1.msra.mxu0 0.0
  %1509 = vmatprep.subr.mxu0 0.0
  %1510 = vmatpush1.msra.mxu0 0.0
  %1511 = vmatprep.subr.mxu0 0.0
  %1512 = vmatpush1.msra.mxu0 0.0
  %1513 = vmatprep.subr.mxu0 0.0
  %1514 = vmatpush1.msra.mxu0 0.0
  %1515 = vmatprep.subr.mxu0 0.0
  %1516 = vmatpush1.msra.mxu0 0.0
  %1517 = vmatprep.subr.mxu0 0.0
  %1518 = vmatpush1.msra.mxu0 0.0
  %1519 = vmatprep.subr.mxu0 0.0
  %1520 = vmatpush1.msra.mxu0 0.0
  %1521 = vmatprep.subr.mxu0 0.0
  %1522 = vmatpush1.msra.mxu0 0.0
  %1523 = vmatprep.subr.mxu0 0.0
  %1524 = vmatpush1.msra.mxu0 0.0
  %1525 = vmatprep.mubr.f32.mxu0 0.0
  %1526 = vmatmul.mubr.f32.gmra.mrb[0].mxu0 %v1459
  %v1527 = vpop.f32.mrb[0].mxu0
  %v1528 = vadd.f32 %v1456, %v1527
  %v1529 = vpop.f32.mrb[0].mxu0
  %1530 = vdwg.mxu0
  %v1531 = vld [vmem:[%s3] sm:$0xff]
  %v1532 = vld [vmem:[%s3 + $0x8] sm:$0xff]
  %v1533 = vld [vmem:[%s3 + $0x10] sm:$0xff]
  %v1534 = vld [vmem:[%s3 + $0x18] sm:$0xff]
  %v1535 = vld [vmem:[%s4] sm:$0x1]
  %v1537 = vlaneseq
  %v1538 = vshrl.u32 %v1537, 7
  %v1539 = vsub.s32 0, %v1538
  %v1540 = vrot.slane %v1535, %v1539
  %v1542 = vsel %vm122, %v1443, 0
  %1544 = vmatprep.subr.mxu0 0.0
  %1545 = vmatpush1.msra.mxu0 %v1531
  %1546 = vmatprep.subr.mxu0 0.0
  %1547 = vmatpush1.msra.mxu0 %v1532
  %1548 = vmatprep.subr.mxu0 0.0
  %1549 = vmatpush1.msra.mxu0 %v1533
  %1550 = vmatprep.subr.mxu0 0.0
  %1551 = vmatpush1.msra.mxu0 %v1534
  %1552 = vmatprep.subr.mxu0 0.0
  %1553 = vmatpush1.msra.mxu0 0.0
  %1554 = vmatprep.subr.mxu0 0.0
  %1555 = vmatpush1.msra.mxu0 0.0
  %1556 = vmatprep.subr.mxu0 0.0
  %1557 = vmatpush1.msra.mxu0 0.0
  %1558 = vmatprep.subr.mxu0 0.0
  %1559 = vmatpush1.msra.mxu0 0.0
  %1560 = vmatprep.subr.mxu0 0.0
  %1561 = vmatpush1.msra.mxu0 0.0
  %1562 = vmatprep.subr.mxu0 0.0
  %1563 = vmatpush1.msra.mxu0 0.0
  %1564 = vmatprep.subr.mxu0 0.0
  %1565 = vmatpush1.msra.mxu0 0.0
  %1566 = vmatprep.subr.mxu0 0.0
  %1567 = vmatpush1.msra.mxu0 0.0
  %1568 = vmatprep.subr.mxu0 0.0
  %1569 = vmatpush1.msra.mxu0 0.0
  %1570 = vmatprep.subr.mxu0 0.0
  %1571 = vmatpush1.msra.mxu0 0.0
  %1572 = vmatprep.subr.mxu0 0.0
  %1573 = vmatpush1.msra.mxu0 0.0
  %1574 = vmatprep.subr.mxu0 0.0
  %1575 = vmatpush1.msra.mxu0 0.0
  %1576 = vmatprep.subr.mxu0 0.0
  %1577 = vmatpush1.msra.mxu0 0.0
  %1578 = vmatprep.subr.mxu0 0.0
  %1579 = vmatpush1.msra.mxu0 0.0
  %1580 = vmatprep.subr.mxu0 0.0
  %1581 = vmatpush1.msra.mxu0 0.0
  %1582 = vmatprep.subr.mxu0 0.0
  %1583 = vmatpush1.msra.mxu0 0.0
  %1584 = vmatprep.subr.mxu0 0.0
  %1585 = vmatpush1.msra.mxu0 0.0
  %1586 = vmatprep.subr.mxu0 0.0
  %1587 = vmatpush1.msra.mxu0 0.0
  %1588 = vmatprep.subr.mxu0 0.0
  %1589 = vmatpush1.msra.mxu0 0.0
  %1590 = vmatprep.subr.mxu0 0.0
  %1591 = vmatpush1.msra.mxu0 0.0
  %1592 = vmatprep.subr.mxu0 0.0
  %1593 = vmatpush1.msra.mxu0 0.0
  %1594 = vmatprep.subr.mxu0 0.0
  %1595 = vmatpush1.msra.mxu0 0.0
  %1596 = vmatprep.subr.mxu0 0.0
  %1597 = vmatpush1.msra.mxu0 0.0
  %1598 = vmatprep.subr.mxu0 0.0
  %1599 = vmatpush1.msra.mxu0 0.0
  %1600 = vmatprep.subr.mxu0 0.0
  %1601 = vmatpush1.msra.mxu0 0.0
  %1602 = vmatprep.subr.mxu0 0.0
  %1603 = vmatpush1.msra.mxu0 0.0
  %1604 = vmatprep.subr.mxu0 0.0
  %1605 = vmatpush1.msra.mxu0 0.0
  %1606 = vmatprep.subr.mxu0 0.0
  %1607 = vmatpush1.msra.mxu0 0.0
  %1608 = vmatprep.mubr.f32.mxu0 0.0
  %1609 = vmatmul.mubr.f32.gmra.mrb[0].mxu0 %v1542
  %v1610 = vpop.f32.mrb[0].mxu0
  %v1611 = vadd.f32 %v1540, %v1610
  %v1612 = vpop.f32.mrb[0].mxu0
  %1613 = vdwg.mxu0
  %v1614 = vadd.f32 %v1528, %v1611
  %v1615 = vxor.u32 %v1614, 2147483648
  %v1616 = vmul.f32 %v1615, 1.442695
  %v1617 = vpow.pop %v1616
  %v1618 = vadd.f32 %v1617, 1.0
  %v1619 = vrcp.pop %v1618
  %v1620 = vmul.f32 1.0, %v1619
  %1622 = vrot.lane.b32.xlu0 %v1611, 64
  %v1623 = vpop.permute.xlu0 %1622
  %v1625 = vmul.f32 %v1620, %v1623
  %1627 = vrot.lane.b32.xlu0 %v1625, 64
  %v1628 = vpop.permute.xlu0 %1627
  %v1630 = vadd.f32 %v1528, %v1628
  %v1631 = vtanh.pop %v1630
  %v1632 = vsub.f32 %v1440, %v1631
  %1634 = vrot.lane.b32.xlu0 %v1632, 96
  %v1635 = vpop.permute.xlu0 %1634
  %v1637 = vmul.f32 %v1620, %v1635
  %1639 = vrot.lane.b32.xlu0 %v1637, 32
  %v1640 = vpop.permute.xlu0 %1639
  %v1642 = vadd.f32 %v1631, %v1640
  %1644 = vrot.lane.b32.xlu0 %v1642, 64
  %v1645 = vpop.permute.xlu0 %1644
  %s1647 = scalar_lea.vmem %s5, 14
  %1648 = vst.msk [vmem:[%s1647] sm:$0x3] %vm233, %v1645
  %1649 = vst.msk [vmem:[#allocation2] sm:$0x3] %vm233, %v1645
  // Predicated region
  $region26: #{forward.6} parent=0 // pred_check
    _
  $region27: #{forward.6} parent=0 // pred_check_branch
    %1651 = sbr.rel (0) target = $region29
  $region28: #{forward.6} parent=0 // pred_region
    _
  $region29: #{forward.6} parent=0 // pred_fallthru
    _
  // Predicated region
  $region30: #{forward.6} parent=0 // pred_check
    _
  $region31: #{forward.6} parent=0 // pred_check_branch
    %1653 = sbr.rel (0) target = $region33
  $region32: #{forward.6} parent=0 // pred_region
    _
  $region33: #{forward.6} parent=0 // pred_fallthru
    _

// kernel: forward.7
$region0: #{forward.7}
  #allocation0 [shape = 'u32[]', space=smem, size = 0x4, offset = 0x4, fixed_abs, tag = 'smem constant byte address 0x4 - core index']
  #allocation1 [shape = 'u32[144,128]{1,0:T(1,128)}', space=vmem, size = 0x12000, scoped, tag = 'internal scratch']
  #allocation2 [shape = 'f32[2,32]{1,0:T(2,128)}', space=vmem, size = 0x400, scoped, tag = 'scratch operand']
  %s0 = inlined_call_operand.vmem [shape: f32[8,2,32], index: 0, kind: input, shape index: {}]
  %s1 = inlined_call_operand.vmem [shape: f32[32,96], index: 1, kind: input, shape index: {}]
  %s2 = inlined_call_operand.vmem [shape: f32[1,96], index: 2, kind: input, shape index: {}, may-alias: {2,4}]
  %s3 = inlined_call_operand.vmem [shape: f32[32,96], index: 3, kind: input, shape index: {}]
  %s4 = inlined_call_operand.vmem [shape: f32[1,96], index: 4, kind: input, shape index: {}, may-alias: {2,4}]
  %s5 = inlined_call_operand.vmem [shape: f32[8,2,32], index: 5, kind: output, shape index: {}]
  %s6 = sld [smem:[#allocation0]]
  $region34: #{forward.7} parent=0
    _
  %s8 = ssub.s32 1, %s6
  %s9 = scalar_select 0, %s8, %s6
  // Predicated region
  $region2: #{forward.7} parent=0 // pred_check
    _
  $region3: #{forward.7} parent=0 // pred_check_branch
    %11 = sbr.rel (0) target = $region5
  $region4: #{forward.7} parent=0 // pred_region
    _
  $region5: #{forward.7} parent=0 // pred_fallthru
    _
  // Predicated region
  $region6: #{forward.7} parent=0 // pred_check
    _
  $region7: #{forward.7} parent=0 // pred_check_branch
    %13 = sbr.rel (0) target = $region9
  $region8: #{forward.7} parent=0 // pred_region
    _
  $region9: #{forward.7} parent=0 // pred_fallthru
    _
  // Predicated region
  $region10: #{forward.7} parent=0 // pred_check
    _
  $region11: #{forward.7} parent=0 // pred_check_branch
    %15 = sbr.rel (0) target = $region13
  $region12: #{forward.7} parent=0 // pred_region
    _
  $region13: #{forward.7} parent=0 // pred_fallthru
    _
  // Predicated region
  $region14: #{forward.7} parent=0 // pred_check
    _
  $region15: #{forward.7} parent=0 // pred_check_branch
    %17 = sbr.rel (0) target = $region17
  $region16: #{forward.7} parent=0 // pred_region
    _
  $region17: #{forward.7} parent=0 // pred_fallthru
    _
  // Predicated region
  $region18: #{forward.7} parent=0 // pred_check
    _
  $region19: #{forward.7} parent=0 // pred_check_branch
    %19 = sbr.rel (0) target = $region21
  $region20: #{forward.7} parent=0 // pred_region
    _
  $region21: #{forward.7} parent=0 // pred_fallthru
    _
  %p20 = scmp.eq.s32.totalorder 0, 0
  // Predicated region
  $region22: #{forward.7} parent=0 // pred_check
    %p21 = pneg %p20
  $region23: #{forward.7} parent=0 // pred_check_branch
    %23 = sbr.rel (%p21) target = $region25
  $region24: #{forward.7} parent=0 // pred_region
    %vm24 = vcmask 254976
    %25 = vst.msk [vmem:[#allocation2] sm:$0x3] %vm24, 0.0
  $region25: #{forward.7} parent=0 // pred_fallthru
    _
  %v26 = vld [vmem:[#allocation2] sm:$0x3]
  %v27 = vld [vmem:[%s0] sm:$0x3]
  %v28 = vld [vmem:[%s1] sm:$0xff]
  %v29 = vld [vmem:[%s1 + $0x8] sm:$0xff]
  %v30 = vld [vmem:[%s1 + $0x10] sm:$0xff]
  %v31 = vld [vmem:[%s1 + $0x18] sm:$0xff]
  %v32 = vld [vmem:[%s2] sm:$0x1]
  %v34 = vlaneseq
  %v35 = vshrl.u32 %v34, 7
  %v36 = vsub.s32 0, %v35
  %v37 = vrot.slane %v32, %v36
  %vm39 = vcmask 261120
  %v41 = vsel %vm39, %v27, 0
  %43 = vmatprep.subr.mxu0 0.0
  %44 = vmatpush1.msra.mxu0 %v28
  %45 = vmatprep.subr.mxu0 0.0
  %46 = vmatpush1.msra.mxu0 %v29
  %47 = vmatprep.subr.mxu0 0.0
  %48 = vmatpush1.msra.mxu0 %v30
  %49 = vmatprep.subr.mxu0 0.0
  %50 = vmatpush1.msra.mxu0 %v31
  %51 = vmatprep.subr.mxu0 0.0
  %52 = vmatpush1.msra.mxu0 0.0
  %53 = vmatprep.subr.mxu0 0.0
  %54 = vmatpush1.msra.mxu0 0.0
  %55 = vmatprep.subr.mxu0 0.0
  %56 = vmatpush1.msra.mxu0 0.0
  %57 = vmatprep.subr.mxu0 0.0
  %58 = vmatpush1.msra.mxu0 0.0
  %59 = vmatprep.subr.mxu0 0.0
  %60 = vmatpush1.msra.mxu0 0.0
  %61 = vmatprep.subr.mxu0 0.0
  %62 = vmatpush1.msra.mxu0 0.0
  %63 = vmatprep.subr.mxu0 0.0
  %64 = vmatpush1.msra.mxu0 0.0
  %65 = vmatprep.subr.mxu0 0.0
  %66 = vmatpush1.msra.mxu0 0.0
  %67 = vmatprep.subr.mxu0 0.0
  %68 = vmatpush1.msra.mxu0 0.0
  %69 = vmatprep.subr.mxu0 0.0
  %70 = vmatpush1.msra.mxu0 0.0
  %71 = vmatprep.subr.mxu0 0.0
  %72 = vmatpush1.msra.mxu0 0.0
  %73 = vmatprep.subr.mxu0 0.0
  %74 = vmatpush1.msra.mxu0 0.0
  %75 = vmatprep.subr.mxu0 0.0
  %76 = vmatpush1.msra.mxu0 0.0
  %77 = vmatprep.subr.mxu0 0.0
  %78 = vmatpush1.msra.mxu0 0.0
  %79 = vmatprep.subr.mxu0 0.0
  %80 = vmatpush1.msra.mxu0 0.0
  %81 = vmatprep.subr.mxu0 0.0
  %82 = vmatpush1.msra.mxu0 0.0
  %83 = vmatprep.subr.mxu0 0.0
  %84 = vmatpush1.msra.mxu0 0.0
  %85 = vmatprep.subr.mxu0 0.0
  %86 = vmatpush1.msra.mxu0 0.0
  %87 = vmatprep.subr.mxu0 0.0
  %88 = vmatpush1.msra.mxu0 0.0
  %89 = vmatprep.subr.mxu0 0.0
  %90 = vmatpush1.msra.mxu0 0.0
  %91 = vmatprep.subr.mxu0 0.0
  %92 = vmatpush1.msra.mxu0 0.0
  %93 = vmatprep.subr.mxu0 0.0
  %94 = vmatpush1.msra.mxu0 0.0
  %95 = vmatprep.subr.mxu0 0.0
  %96 = vmatpush1.msra.mxu0 0.0
  %97 = vmatprep.subr.mxu0 0.0
  %98 = vmatpush1.msra.mxu0 0.0
  %99 = vmatprep.subr.mxu0 0.0
  %100 = vmatpush1.msra.mxu0 0.0
  %101 = vmatprep.subr.mxu0 0.0
  %102 = vmatpush1.msra.mxu0 0.0
  %103 = vmatprep.subr.mxu0 0.0
  %104 = vmatpush1.msra.mxu0 0.0
  %105 = vmatprep.subr.mxu0 0.0
  %106 = vmatpush1.msra.mxu0 0.0
  %107 = vmatprep.mubr.f32.mxu0 0.0
  %108 = vmatmul.mubr.f32.gmra.mrb[0].mxu0 %v41
  %v109 = vpop.f32.mrb[0].mxu0
  %v110 = vadd.f32 %v37, %v109
  %v111 = vpop.f32.mrb[0].mxu0
  %112 = vdwg.mxu0
  %v113 = vld [vmem:[%s3] sm:$0xff]
  %v114 = vld [vmem:[%s3 + $0x8] sm:$0xff]
  %v115 = vld [vmem:[%s3 + $0x10] sm:$0xff]
  %v116 = vld [vmem:[%s3 + $0x18] sm:$0xff]
  %v117 = vld [vmem:[%s4] sm:$0x1]
  %v119 = vlaneseq
  %v120 = vshrl.u32 %v119, 7
  %v121 = vsub.s32 0, %v120
  %v122 = vrot.slane %v117, %v121
  %v125 = vsel %vm39, %v26, 0
  %127 = vmatprep.subr.mxu0 0.0
  %128 = vmatpush1.msra.mxu0 %v113
  %129 = vmatprep.subr.mxu0 0.0
  %130 = vmatpush1.msra.mxu0 %v114
  %131 = vmatprep.subr.mxu0 0.0
  %132 = vmatpush1.msra.mxu0 %v115
  %133 = vmatprep.subr.mxu0 0.0
  %134 = vmatpush1.msra.mxu0 %v116
  %135 = vmatprep.subr.mxu0 0.0
  %136 = vmatpush1.msra.mxu0 0.0
  %137 = vmatprep.subr.mxu0 0.0
  %138 = vmatpush1.msra.mxu0 0.0
  %139 = vmatprep.subr.mxu0 0.0
  %140 = vmatpush1.msra.mxu0 0.0
  %141 = vmatprep.subr.mxu0 0.0
  %142 = vmatpush1.msra.mxu0 0.0
  %143 = vmatprep.subr.mxu0 0.0
  %144 = vmatpush1.msra.mxu0 0.0
  %145 = vmatprep.subr.mxu0 0.0
  %146 = vmatpush1.msra.mxu0 0.0
  %147 = vmatprep.subr.mxu0 0.0
  %148 = vmatpush1.msra.mxu0 0.0
  %149 = vmatprep.subr.mxu0 0.0
  %150 = vmatpush1.msra.mxu0 0.0
  %151 = vmatprep.subr.mxu0 0.0
  %152 = vmatpush1.msra.mxu0 0.0
  %153 = vmatprep.subr.mxu0 0.0
  %154 = vmatpush1.msra.mxu0 0.0
  %155 = vmatprep.subr.mxu0 0.0
  %156 = vmatpush1.msra.mxu0 0.0
  %157 = vmatprep.subr.mxu0 0.0
  %158 = vmatpush1.msra.mxu0 0.0
  %159 = vmatprep.subr.mxu0 0.0
  %160 = vmatpush1.msra.mxu0 0.0
  %161 = vmatprep.subr.mxu0 0.0
  %162 = vmatpush1.msra.mxu0 0.0
  %163 = vmatprep.subr.mxu0 0.0
  %164 = vmatpush1.msra.mxu0 0.0
  %165 = vmatprep.subr.mxu0 0.0
  %166 = vmatpush1.msra.mxu0 0.0
  %167 = vmatprep.subr.mxu0 0.0
  %168 = vmatpush1.msra.mxu0 0.0
  %169 = vmatprep.subr.mxu0 0.0
  %170 = vmatpush1.msra.mxu0 0.0
  %171 = vmatprep.subr.mxu0 0.0
  %172 = vmatpush1.msra.mxu0 0.0
  %173 = vmatprep.subr.mxu0 0.0
  %174 = vmatpush1.msra.mxu0 0.0
  %175 = vmatprep.subr.mxu0 0.0
  %176 = vmatpush1.msra.mxu0 0.0
  %177 = vmatprep.subr.mxu0 0.0
  %178 = vmatpush1.msra.mxu0 0.0
  %179 = vmatprep.subr.mxu0 0.0
  %180 = vmatpush1.msra.mxu0 0.0
  %181 = vmatprep.subr.mxu0 0.0
  %182 = vmatpush1.msra.mxu0 0.0
  %183 = vmatprep.subr.mxu0 0.0
  %184 = vmatpush1.msra.mxu0 0.0
  %185 = vmatprep.subr.mxu0 0.0
  %186 = vmatpush1.msra.mxu0 0.0
  %187 = vmatprep.subr.mxu0 0.0
  %188 = vmatpush1.msra.mxu0 0.0
  %189 = vmatprep.subr.mxu0 0.0
  %190 = vmatpush1.msra.mxu0 0.0
  %191 = vmatprep.mubr.f32.mxu0 0.0
  %192 = vmatmul.mubr.f32.gmra.mrb[0].mxu0 %v125
  %v193 = vpop.f32.mrb[0].mxu0
  %v194 = vadd.f32 %v122, %v193
  %v195 = vpop.f32.mrb[0].mxu0
  %196 = vdwg.mxu0
  %v197 = vadd.f32 %v110, %v194
  %v198 = vxor.u32 %v197, 2147483648
  %v199 = vmul.f32 %v198, 1.442695
  %v200 = vpow.pop %v199
  %v201 = vadd.f32 %v200, 1.0
  %v202 = vrcp.pop %v201
  %v203 = vmul.f32 1.0, %v202
  %205 = vrot.lane.b32.xlu0 %v194, 64
  %v206 = vpop.permute.xlu0 %205
  %v208 = vmul.f32 %v203, %v206
  %210 = vrot.lane.b32.xlu0 %v208, 64
  %v211 = vpop.permute.xlu0 %210
  %v213 = vadd.f32 %v110, %v211
  %v214 = vtanh.pop %v213
  %216 = vrot.lane.b32.xlu0 %v214, 64
  %v217 = vpop.permute.xlu0 %216
  %v219 = vsub.f32 %v26, %v217
  %221 = vrot.lane.b32.xlu0 %v219, 32
  %v222 = vpop.permute.xlu0 %221
  %v224 = vmul.f32 %v203, %v222
  %226 = vrot.lane.b32.xlu0 %v224, 32
  %v227 = vpop.permute.xlu0 %226
  %v229 = vadd.f32 %v214, %v227
  %231 = vrot.lane.b32.xlu0 %v229, 64
  %v232 = vpop.permute.xlu0 %231
  %vm234 = vcmask 254976
  %235 = vst.msk [vmem:[%s5] sm:$0x3] %vm234, %v232
  %s236 = scalar_lea.vmem %s0, 2
  %v237 = vld [vmem:[%s236] sm:$0x3]
  %v238 = vld [vmem:[%s1] sm:$0xff]
  %v239 = vld [vmem:[%s1 + $0x8] sm:$0xff]
  %v240 = vld [vmem:[%s1 + $0x10] sm:$0xff]
  %v241 = vld [vmem:[%s1 + $0x18] sm:$0xff]
  %v242 = vld [vmem:[%s2] sm:$0x1]
  %v244 = vlaneseq
  %v245 = vshrl.u32 %v244, 7
  %v246 = vsub.s32 0, %v245
  %v247 = vrot.slane %v242, %v246
  %v250 = vsel %vm39, %v237, 0
  %252 = vmatprep.subr.mxu0 0.0
  %253 = vmatpush1.msra.mxu0 %v238
  %254 = vmatprep.subr.mxu0 0.0
  %255 = vmatpush1.msra.mxu0 %v239
  %256 = vmatprep.subr.mxu0 0.0
  %257 = vmatpush1.msra.mxu0 %v240
  %258 = vmatprep.subr.mxu0 0.0
  %259 = vmatpush1.msra.mxu0 %v241
  %260 = vmatprep.subr.mxu0 0.0
  %261 = vmatpush1.msra.mxu0 0.0
  %262 = vmatprep.subr.mxu0 0.0
  %263 = vmatpush1.msra.mxu0 0.0
  %264 = vmatprep.subr.mxu0 0.0
  %265 = vmatpush1.msra.mxu0 0.0
  %266 = vmatprep.subr.mxu0 0.0
  %267 = vmatpush1.msra.mxu0 0.0
  %268 = vmatprep.subr.mxu0 0.0
  %269 = vmatpush1.msra.mxu0 0.0
  %270 = vmatprep.subr.mxu0 0.0
  %271 = vmatpush1.msra.mxu0 0.0
  %272 = vmatprep.subr.mxu0 0.0
  %273 = vmatpush1.msra.mxu0 0.0
  %274 = vmatprep.subr.mxu0 0.0
  %275 = vmatpush1.msra.mxu0 0.0
  %276 = vmatprep.subr.mxu0 0.0
  %277 = vmatpush1.msra.mxu0 0.0
  %278 = vmatprep.subr.mxu0 0.0
  %279 = vmatpush1.msra.mxu0 0.0
  %280 = vmatprep.subr.mxu0 0.0
  %281 = vmatpush1.msra.mxu0 0.0
  %282 = vmatprep.subr.mxu0 0.0
  %283 = vmatpush1.msra.mxu0 0.0
  %284 = vmatprep.subr.mxu0 0.0
  %285 = vmatpush1.msra.mxu0 0.0
  %286 = vmatprep.subr.mxu0 0.0
  %287 = vmatpush1.msra.mxu0 0.0
  %288 = vmatprep.subr.mxu0 0.0
  %289 = vmatpush1.msra.mxu0 0.0
  %290 = vmatprep.subr.mxu0 0.0
  %291 = vmatpush1.msra.mxu0 0.0
  %292 = vmatprep.subr.mxu0 0.0
  %293 = vmatpush1.msra.mxu0 0.0
  %294 = vmatprep.subr.mxu0 0.0
  %295 = vmatpush1.msra.mxu0 0.0
  %296 = vmatprep.subr.mxu0 0.0
  %297 = vmatpush1.msra.mxu0 0.0
  %298 = vmatprep.subr.mxu0 0.0
  %299 = vmatpush1.msra.mxu0 0.0
  %300 = vmatprep.subr.mxu0 0.0
  %301 = vmatpush1.msra.mxu0 0.0
  %302 = vmatprep.subr.mxu0 0.0
  %303 = vmatpush1.msra.mxu0 0.0
  %304 = vmatprep.subr.mxu0 0.0
  %305 = vmatpush1.msra.mxu0 0.0
  %306 = vmatprep.subr.mxu0 0.0
  %307 = vmatpush1.msra.mxu0 0.0
  %308 = vmatprep.subr.mxu0 0.0
  %309 = vmatpush1.msra.mxu0 0.0
  %310 = vmatprep.subr.mxu0 0.0
  %311 = vmatpush1.msra.mxu0 0.0
  %312 = vmatprep.subr.mxu0 0.0
  %313 = vmatpush1.msra.mxu0 0.0
  %314 = vmatprep.subr.mxu0 0.0
  %315 = vmatpush1.msra.mxu0 0.0
  %316 = vmatprep.mubr.f32.mxu0 0.0
  %317 = vmatmul.mubr.f32.gmra.mrb[0].mxu0 %v250
  %v318 = vpop.f32.mrb[0].mxu0
  %v319 = vadd.f32 %v247, %v318
  %v320 = vpop.f32.mrb[0].mxu0
  %321 = vdwg.mxu0
  %v322 = vld [vmem:[%s3] sm:$0xff]
  %v323 = vld [vmem:[%s3 + $0x8] sm:$0xff]
  %v324 = vld [vmem:[%s3 + $0x10] sm:$0xff]
  %v325 = vld [vmem:[%s3 + $0x18] sm:$0xff]
  %v326 = vld [vmem:[%s4] sm:$0x1]
  %v328 = vlaneseq
  %v329 = vshrl.u32 %v328, 7
  %v330 = vsub.s32 0, %v329
  %v331 = vrot.slane %v326, %v330
  %v333 = vsel %vm39, %v232, 0
  %335 = vmatprep.subr.mxu0 0.0
  %336 = vmatpush1.msra.mxu0 %v322
  %337 = vmatprep.subr.mxu0 0.0
  %338 = vmatpush1.msra.mxu0 %v323
  %339 = vmatprep.subr.mxu0 0.0
  %340 = vmatpush1.msra.mxu0 %v324
  %341 = vmatprep.subr.mxu0 0.0
  %342 = vmatpush1.msra.mxu0 %v325
  %343 = vmatprep.subr.mxu0 0.0
  %344 = vmatpush1.msra.mxu0 0.0
  %345 = vmatprep.subr.mxu0 0.0
  %346 = vmatpush1.msra.mxu0 0.0
  %347 = vmatprep.subr.mxu0 0.0
  %348 = vmatpush1.msra.mxu0 0.0
  %349 = vmatprep.subr.mxu0 0.0
  %350 = vmatpush1.msra.mxu0 0.0
  %351 = vmatprep.subr.mxu0 0.0
  %352 = vmatpush1.msra.mxu0 0.0
  %353 = vmatprep.subr.mxu0 0.0
  %354 = vmatpush1.msra.mxu0 0.0
  %355 = vmatprep.subr.mxu0 0.0
  %356 = vmatpush1.msra.mxu0 0.0
  %357 = vmatprep.subr.mxu0 0.0
  %358 = vmatpush1.msra.mxu0 0.0
  %359 = vmatprep.subr.mxu0 0.0
  %360 = vmatpush1.msra.mxu0 0.0
  %361 = vmatprep.subr.mxu0 0.0
  %362 = vmatpush1.msra.mxu0 0.0
  %363 = vmatprep.subr.mxu0 0.0
  %364 = vmatpush1.msra.mxu0 0.0
  %365 = vmatprep.subr.mxu0 0.0
  %366 = vmatpush1.msra.mxu0 0.0
  %367 = vmatprep.subr.mxu0 0.0
  %368 = vmatpush1.msra.mxu0 0.0
  %369 = vmatprep.subr.mxu0 0.0
  %370 = vmatpush1.msra.mxu0 0.0
  %371 = vmatprep.subr.mxu0 0.0
  %372 = vmatpush1.msra.mxu0 0.0
  %373 = vmatprep.subr.mxu0 0.0
  %374 = vmatpush1.msra.mxu0 0.0
  %375 = vmatprep.subr.mxu0 0.0
  %376 = vmatpush1.msra.mxu0 0.0
  %377 = vmatprep.subr.mxu0 0.0
  %378 = vmatpush1.msra.mxu0 0.0
  %379 = vmatprep.subr.mxu0 0.0
  %380 = vmatpush1.msra.mxu0 0.0
  %381 = vmatprep.subr.mxu0 0.0
  %382 = vmatpush1.msra.mxu0 0.0
  %383 = vmatprep.subr.mxu0 0.0
  %384 = vmatpush1.msra.mxu0 0.0
  %385 = vmatprep.subr.mxu0 0.0
  %386 = vmatpush1.msra.mxu0 0.0
  %387 = vmatprep.subr.mxu0 0.0
  %388 = vmatpush1.msra.mxu0 0.0
  %389 = vmatprep.subr.mxu0 0.0
  %390 = vmatpush1.msra.mxu0 0.0
  %391 = vmatprep.subr.mxu0 0.0
  %392 = vmatpush1.msra.mxu0 0.0
  %393 = vmatprep.subr.mxu0 0.0
  %394 = vmatpush1.msra.mxu0 0.0
  %395 = vmatprep.subr.mxu0 0.0
  %396 = vmatpush1.msra.mxu0 0.0
  %397 = vmatprep.subr.mxu0 0.0
  %398 = vmatpush1.msra.mxu0 0.0
  %399 = vmatprep.mubr.f32.mxu0 0.0
  %400 = vmatmul.mubr.f32.gmra.mrb[0].mxu0 %v333
  %v401 = vpop.f32.mrb[0].mxu0
  %v402 = vadd.f32 %v331, %v401
  %v403 = vpop.f32.mrb[0].mxu0
  %404 = vdwg.mxu0
  %v405 = vadd.f32 %v319, %v402
  %v406 = vxor.u32 %v405, 2147483648
  %v407 = vmul.f32 %v406, 1.442695
  %v408 = vpow.pop %v407
  %v409 = vadd.f32 %v408, 1.0
  %v410 = vrcp.pop %v409
  %v411 = vmul.f32 1.0, %v410
  %413 = vrot.lane.b32.xlu0 %v402, 64
  %v414 = vpop.permute.xlu0 %413
  %v416 = vmul.f32 %v411, %v414
  %418 = vrot.lane.b32.xlu0 %v416, 64
  %v419 = vpop.permute.xlu0 %418
  %v421 = vadd.f32 %v319, %v419
  %v422 = vtanh.pop %v421
  %v423 = vsub.f32 %v229, %v422
  %425 = vrot.lane.b32.xlu0 %v423, 96
  %v426 = vpop.permute.xlu0 %425
  %v428 = vmul.f32 %v411, %v426
  %430 = vrot.lane.b32.xlu0 %v428, 32
  %v431 = vpop.permute.xlu0 %430
  %v433 = vadd.f32 %v422, %v431
  %435 = vrot.lane.b32.xlu0 %v433, 64
  %v436 = vpop.permute.xlu0 %435
  %s438 = scalar_lea.vmem %s5, 2
  %439 = vst.msk [vmem:[%s438] sm:$0x3] %vm234, %v436
  %s440 = scalar_lea.vmem %s0, 4
  %v441 = vld [vmem:[%s440] sm:$0x3]
  %v442 = vld [vmem:[%s1] sm:$0xff]
  %v443 = vld [vmem:[%s1 + $0x8] sm:$0xff]
  %v444 = vld [vmem:[%s1 + $0x10] sm:$0xff]
  %v445 = vld [vmem:[%s1 + $0x18] sm:$0xff]
  %v446 = vld [vmem:[%s2] sm:$0x1]
  %v448 = vlaneseq
  %v449 = vshrl.u32 %v448, 7
  %v450 = vsub.s32 0, %v449
  %v451 = vrot.slane %v446, %v450
  %v454 = vsel %vm39, %v441, 0
  %456 = vmatprep.subr.mxu0 0.0
  %457 = vmatpush1.msra.mxu0 %v442
  %458 = vmatprep.subr.mxu0 0.0
  %459 = vmatpush1.msra.mxu0 %v443
  %460 = vmatprep.subr.mxu0 0.0
  %461 = vmatpush1.msra.mxu0 %v444
  %462 = vmatprep.subr.mxu0 0.0
  %463 = vmatpush1.msra.mxu0 %v445
  %464 = vmatprep.subr.mxu0 0.0
  %465 = vmatpush1.msra.mxu0 0.0
  %466 = vmatprep.subr.mxu0 0.0
  %467 = vmatpush1.msra.mxu0 0.0
  %468 = vmatprep.subr.mxu0 0.0
  %469 = vmatpush1.msra.mxu0 0.0
  %470 = vmatprep.subr.mxu0 0.0
  %471 = vmatpush1.msra.mxu0 0.0
  %472 = vmatprep.subr.mxu0 0.0
  %473 = vmatpush1.msra.mxu0 0.0
  %474 = vmatprep.subr.mxu0 0.0
  %475 = vmatpush1.msra.mxu0 0.0
  %476 = vmatprep.subr.mxu0 0.0
  %477 = vmatpush1.msra.mxu0 0.0
  %478 = vmatprep.subr.mxu0 0.0
  %479 = vmatpush1.msra.mxu0 0.0
  %480 = vmatprep.subr.mxu0 0.0
  %481 = vmatpush1.msra.mxu0 0.0
  %482 = vmatprep.subr.mxu0 0.0
  %483 = vmatpush1.msra.mxu0 0.0
  %484 = vmatprep.subr.mxu0 0.0
  %485 = vmatpush1.msra.mxu0 0.0
  %486 = vmatprep.subr.mxu0 0.0
  %487 = vmatpush1.msra.mxu0 0.0
  %488 = vmatprep.subr.mxu0 0.0
  %489 = vmatpush1.msra.mxu0 0.0
  %490 = vmatprep.subr.mxu0 0.0
  %491 = vmatpush1.msra.mxu0 0.0
  %492 = vmatprep.subr.mxu0 0.0
  %493 = vmatpush1.msra.mxu0 0.0
  %494 = vmatprep.subr.mxu0 0.0
  %495 = vmatpush1.msra.mxu0 0.0
  %496 = vmatprep.subr.mxu0 0.0
  %497 = vmatpush1.msra.mxu0 0.0
  %498 = vmatprep.subr.mxu0 0.0
  %499 = vmatpush1.msra.mxu0 0.0
  %500 = vmatprep.subr.mxu0 0.0
  %501 = vmatpush1.msra.mxu0 0.0
  %502 = vmatprep.subr.mxu0 0.0
  %503 = vmatpush1.msra.mxu0 0.0
  %504 = vmatprep.subr.mxu0 0.0
  %505 = vmatpush1.msra.mxu0 0.0
  %506 = vmatprep.subr.mxu0 0.0
  %507 = vmatpush1.msra.mxu0 0.0
  %508 = vmatprep.subr.mxu0 0.0
  %509 = vmatpush1.msra.mxu0 0.0
  %510 = vmatprep.subr.mxu0 0.0
  %511 = vmatpush1.msra.mxu0 0.0
  %512 = vmatprep.subr.mxu0 0.0
  %513 = vmatpush1.msra.mxu0 0.0
  %514 = vmatprep.subr.mxu0 0.0
  %515 = vmatpush1.msra.mxu0 0.0
  %516 = vmatprep.subr.mxu0 0.0
  %517 = vmatpush1.msra.mxu0 0.0
  %518 = vmatprep.subr.mxu0 0.0
  %519 = vmatpush1.msra.mxu0 0.0
  %520 = vmatprep.mubr.f32.mxu0 0.0
  %521 = vmatmul.mubr.f32.gmra.mrb[0].mxu0 %v454
  %v522 = vpop.f32.mrb[0].mxu0
  %v523 = vadd.f32 %v451, %v522
  %v524 = vpop.f32.mrb[0].mxu0
  %525 = vdwg.mxu0
  %v526 = vld [vmem:[%s3] sm:$0xff]
  %v527 = vld [vmem:[%s3 + $0x8] sm:$0xff]
  %v528 = vld [vmem:[%s3 + $0x10] sm:$0xff]
  %v529 = vld [vmem:[%s3 + $0x18] sm:$0xff]
  %v530 = vld [vmem:[%s4] sm:$0x1]
  %v532 = vlaneseq
  %v533 = vshrl.u32 %v532, 7
  %v534 = vsub.s32 0, %v533
  %v535 = vrot.slane %v530, %v534
  %v537 = vsel %vm39, %v436, 0
  %539 = vmatprep.subr.mxu0 0.0
  %540 = vmatpush1.msra.mxu0 %v526
  %541 = vmatprep.subr.mxu0 0.0
  %542 = vmatpush1.msra.mxu0 %v527
  %543 = vmatprep.subr.mxu0 0.0
  %544 = vmatpush1.msra.mxu0 %v528
  %545 = vmatprep.subr.mxu0 0.0
  %546 = vmatpush1.msra.mxu0 %v529
  %547 = vmatprep.subr.mxu0 0.0
  %548 = vmatpush1.msra.mxu0 0.0
  %549 = vmatprep.subr.mxu0 0.0
  %550 = vmatpush1.msra.mxu0 0.0
  %551 = vmatprep.subr.mxu0 0.0
  %552 = vmatpush1.msra.mxu0 0.0
  %553 = vmatprep.subr.mxu0 0.0
  %554 = vmatpush1.msra.mxu0 0.0
  %555 = vmatprep.subr.mxu0 0.0
  %556 = vmatpush1.msra.mxu0 0.0
  %557 = vmatprep.subr.mxu0 0.0
  %558 = vmatpush1.msra.mxu0 0.0
  %559 = vmatprep.subr.mxu0 0.0
  %560 = vmatpush1.msra.mxu0 0.0
  %561 = vmatprep.subr.mxu0 0.0
  %562 = vmatpush1.msra.mxu0 0.0
  %563 = vmatprep.subr.mxu0 0.0
  %564 = vmatpush1.msra.mxu0 0.0
  %565 = vmatprep.subr.mxu0 0.0
  %566 = vmatpush1.msra.mxu0 0.0
  %567 = vmatprep.subr.mxu0 0.0
  %568 = vmatpush1.msra.mxu0 0.0
  %569 = vmatprep.subr.mxu0 0.0
  %570 = vmatpush1.msra.mxu0 0.0
  %571 = vmatprep.subr.mxu0 0.0
  %572 = vmatpush1.msra.mxu0 0.0
  %573 = vmatprep.subr.mxu0 0.0
  %574 = vmatpush1.msra.mxu0 0.0
  %575 = vmatprep.subr.mxu0 0.0
  %576 = vmatpush1.msra.mxu0 0.0
  %577 = vmatprep.subr.mxu0 0.0
  %578 = vmatpush1.msra.mxu0 0.0
  %579 = vmatprep.subr.mxu0 0.0
  %580 = vmatpush1.msra.mxu0 0.0
  %581 = vmatprep.subr.mxu0 0.0
  %582 = vmatpush1.msra.mxu0 0.0
  %583 = vmatprep.subr.mxu0 0.0
  %584 = vmatpush1.msra.mxu0 0.0
  %585 = vmatprep.subr.mxu0 0.0
  %586 = vmatpush1.msra.mxu0 0.0
  %587 = vmatprep.subr.mxu0 0.0
  %588 = vmatpush1.msra.mxu0 0.0
  %589 = vmatprep.subr.mxu0 0.0
  %590 = vmatpush1.msra.mxu0 0.0
  %591 = vmatprep.subr.mxu0 0.0
  %592 = vmatpush1.msra.mxu0 0.0
  %593 = vmatprep.subr.mxu0 0.0
  %594 = vmatpush1.msra.mxu0 0.0
  %595 = vmatprep.subr.mxu0 0.0
  %596 = vmatpush1.msra.mxu0 0.0
  %597 = vmatprep.subr.mxu0 0.0
  %598 = vmatpush1.msra.mxu0 0.0
  %599 = vmatprep.subr.mxu0 0.0
  %600 = vmatpush1.msra.mxu0 0.0
  %601 = vmatprep.subr.mxu0 0.0
  %602 = vmatpush1.msra.mxu0 0.0
  %603 = vmatprep.mubr.f32.mxu0 0.0
  %604 = vmatmul.mubr.f32.gmra.mrb[0].mxu0 %v537
  %v605 = vpop.f32.mrb[0].mxu0
  %v606 = vadd.f32 %v535, %v605
  %v607 = vpop.f32.mrb[0].mxu0
  %608 = vdwg.mxu0
  %v609 = vadd.f32 %v523, %v606
  %v610 = vxor.u32 %v609, 2147483648
  %v611 = vmul.f32 %v610, 1.442695
  %v612 = vpow.pop %v611
  %v613 = vadd.f32 %v612, 1.0
  %v614 = vrcp.pop %v613
  %v615 = vmul.f32 1.0, %v614
  %617 = vrot.lane.b32.xlu0 %v606, 64
  %v618 = vpop.permute.xlu0 %617
  %v620 = vmul.f32 %v615, %v618
  %622 = vrot.lane.b32.xlu0 %v620, 64
  %v623 = vpop.permute.xlu0 %622
  %v625 = vadd.f32 %v523, %v623
  %v626 = vtanh.pop %v625
  %v627 = vsub.f32 %v433, %v626
  %629 = vrot.lane.b32.xlu0 %v627, 96
  %v630 = vpop.permute.xlu0 %629
  %v632 = vmul.f32 %v615, %v630
  %634 = vrot.lane.b32.xlu0 %v632, 32
  %v635 = vpop.permute.xlu0 %634
  %v637 = vadd.f32 %v626, %v635
  %639 = vrot.lane.b32.xlu0 %v637, 64
  %v640 = vpop.permute.xlu0 %639
  %s642 = scalar_lea.vmem %s5, 4
  %643 = vst.msk [vmem:[%s642] sm:$0x3] %vm234, %v640
  %s644 = scalar_lea.vmem %s0, 6
  %v645 = vld [vmem:[%s644] sm:$0x3]
  %v646 = vld [vmem:[%s1] sm:$0xff]
  %v647 = vld [vmem:[%s1 + $0x8] sm:$0xff]
  %v648 = vld [vmem:[%s1 + $0x10] sm:$0xff]
  %v649 = vld [vmem:[%s1 + $0x18] sm:$0xff]
  %v650 = vld [vmem:[%s2] sm:$0x1]
  %v652 = vlaneseq
  %v653 = vshrl.u32 %v652, 7
  %v654 = vsub.s32 0, %v653
  %v655 = vrot.slane %v650, %v654
  %v658 = vsel %vm39, %v645, 0
  %660 = vmatprep.subr.mxu0 0.0
  %661 = vmatpush1.msra.mxu0 %v646
  %662 = vmatprep.subr.mxu0 0.0
  %663 = vmatpush1.msra.mxu0 %v647
  %664 = vmatprep.subr.mxu0 0.0
  %665 = vmatpush1.msra.mxu0 %v648
  %666 = vmatprep.subr.mxu0 0.0
  %667 = vmatpush1.msra.mxu0 %v649
  %668 = vmatprep.subr.mxu0 0.0
  %669 = vmatpush1.msra.mxu0 0.0
  %670 = vmatprep.subr.mxu0 0.0
  %671 = vmatpush1.msra.mxu0 0.0
  %672 = vmatprep.subr.mxu0 0.0
  %673 = vmatpush1.msra.mxu0 0.0
  %674 = vmatprep.subr.mxu0 0.0
  %675 = vmatpush1.msra.mxu0 0.0
  %676 = vmatprep.subr.mxu0 0.0
  %677 = vmatpush1.msra.mxu0 0.0
  %678 = vmatprep.subr.mxu0 0.0
  %679 = vmatpush1.msra.mxu0 0.0
  %680 = vmatprep.subr.mxu0 0.0
  %681 = vmatpush1.msra.mxu0 0.0
  %682 = vmatprep.subr.mxu0 0.0
  %683 = vmatpush1.msra.mxu0 0.0
  %684 = vmatprep.subr.mxu0 0.0
  %685 = vmatpush1.msra.mxu0 0.0
  %686 = vmatprep.subr.mxu0 0.0
  %687 = vmatpush1.msra.mxu0 0.0
  %688 = vmatprep.subr.mxu0 0.0
  %689 = vmatpush1.msra.mxu0 0.0
  %690 = vmatprep.subr.mxu0 0.0
  %691 = vmatpush1.msra.mxu0 0.0
  %692 = vmatprep.subr.mxu0 0.0
  %693 = vmatpush1.msra.mxu0 0.0
  %694 = vmatprep.subr.mxu0 0.0
  %695 = vmatpush1.msra.mxu0 0.0
  %696 = vmatprep.subr.mxu0 0.0
  %697 = vmatpush1.msra.mxu0 0.0
  %698 = vmatprep.subr.mxu0 0.0
  %699 = vmatpush1.msra.mxu0 0.0
  %700 = vmatprep.subr.mxu0 0.0
  %701 = vmatpush1.msra.mxu0 0.0
  %702 = vmatprep.subr.mxu0 0.0
  %703 = vmatpush1.msra.mxu0 0.0
  %704 = vmatprep.subr.mxu0 0.0
  %705 = vmatpush1.msra.mxu0 0.0
  %706 = vmatprep.subr.mxu0 0.0
  %707 = vmatpush1.msra.mxu0 0.0
  %708 = vmatprep.subr.mxu0 0.0
  %709 = vmatpush1.msra.mxu0 0.0
  %710 = vmatprep.subr.mxu0 0.0
  %711 = vmatpush1.msra.mxu0 0.0
  %712 = vmatprep.subr.mxu0 0.0
  %713 = vmatpush1.msra.mxu0 0.0
  %714 = vmatprep.subr.mxu0 0.0
  %715 = vmatpush1.msra.mxu0 0.0
  %716 = vmatprep.subr.mxu0 0.0
  %717 = vmatpush1.msra.mxu0 0.0
  %718 = vmatprep.subr.mxu0 0.0
  %719 = vmatpush1.msra.mxu0 0.0
  %720 = vmatprep.subr.mxu0 0.0
  %721 = vmatpush1.msra.mxu0 0.0
  %722 = vmatprep.subr.mxu0 0.0
  %723 = vmatpush1.msra.mxu0 0.0
  %724 = vmatprep.mubr.f32.mxu0 0.0
  %725 = vmatmul.mubr.f32.gmra.mrb[0].mxu0 %v658
  %v726 = vpop.f32.mrb[0].mxu0
  %v727 = vadd.f32 %v655, %v726
  %v728 = vpop.f32.mrb[0].mxu0
  %729 = vdwg.mxu0
  %v730 = vld [vmem:[%s3] sm:$0xff]
  %v731 = vld [vmem:[%s3 + $0x8] sm:$0xff]
  %v732 = vld [vmem:[%s3 + $0x10] sm:$0xff]
  %v733 = vld [vmem:[%s3 + $0x18] sm:$0xff]
  %v734 = vld [vmem:[%s4] sm:$0x1]
  %v736 = vlaneseq
  %v737 = vshrl.u32 %v736, 7
  %v738 = vsub.s32 0, %v737
  %v739 = vrot.slane %v734, %v738
  %v741 = vsel %vm39, %v640, 0
  %743 = vmatprep.subr.mxu0 0.0
  %744 = vmatpush1.msra.mxu0 %v730
  %745 = vmatprep.subr.mxu0 0.0
  %746 = vmatpush1.msra.mxu0 %v731
  %747 = vmatprep.subr.mxu0 0.0
  %748 = vmatpush1.msra.mxu0 %v732
  %749 = vmatprep.subr.mxu0 0.0
  %750 = vmatpush1.msra.mxu0 %v733
  %751 = vmatprep.subr.mxu0 0.0
  %752 = vmatpush1.msra.mxu0 0.0
  %753 = vmatprep.subr.mxu0 0.0
  %754 = vmatpush1.msra.mxu0 0.0
  %755 = vmatprep.subr.mxu0 0.0
  %756 = vmatpush1.msra.mxu0 0.0
  %757 = vmatprep.subr.mxu0 0.0
  %758 = vmatpush1.msra.mxu0 0.0
  %759 = vmatprep.subr.mxu0 0.0
  %760 = vmatpush1.msra.mxu0 0.0
  %761 = vmatprep.subr.mxu0 0.0
  %762 = vmatpush1.msra.mxu0 0.0
  %763 = vmatprep.subr.mxu0 0.0
  %764 = vmatpush1.msra.mxu0 0.0
  %765 = vmatprep.subr.mxu0 0.0
  %766 = vmatpush1.msra.mxu0 0.0
  %767 = vmatprep.subr.mxu0 0.0
  %768 = vmatpush1.msra.mxu0 0.0
  %769 = vmatprep.subr.mxu0 0.0
  %770 = vmatpush1.msra.mxu0 0.0
  %771 = vmatprep.subr.mxu0 0.0
  %772 = vmatpush1.msra.mxu0 0.0
  %773 = vmatprep.subr.mxu0 0.0
  %774 = vmatpush1.msra.mxu0 0.0
  %775 = vmatprep.subr.mxu0 0.0
  %776 = vmatpush1.msra.mxu0 0.0
  %777 = vmatprep.subr.mxu0 0.0
  %778 = vmatpush1.msra.mxu0 0.0
  %779 = vmatprep.subr.mxu0 0.0
  %780 = vmatpush1.msra.mxu0 0.0
  %781 = vmatprep.subr.mxu0 0.0
  %782 = vmatpush1.msra.mxu0 0.0
  %783 = vmatprep.subr.mxu0 0.0
  %784 = vmatpush1.msra.mxu0 0.0
  %785 = vmatprep.subr.mxu0 0.0
  %786 = vmatpush1.msra.mxu0 0.0
  %787 = vmatprep.subr.mxu0 0.0
  %788 = vmatpush1.msra.mxu0 0.0
  %789 = vmatprep.subr.mxu0 0.0
  %790 = vmatpush1.msra.mxu0 0.0
  %791 = vmatprep.subr.mxu0 0.0
  %792 = vmatpush1.msra.mxu0 0.0
  %793 = vmatprep.subr.mxu0 0.0
  %794 = vmatpush1.msra.mxu0 0.0
  %795 = vmatprep.subr.mxu0 0.0
  %796 = vmatpush1.msra.mxu0 0.0
  %797 = vmatprep.subr.mxu0 0.0
  %798 = vmatpush1.msra.mxu0 0.0
  %799 = vmatprep.subr.mxu0 0.0
  %800 = vmatpush1.msra.mxu0 0.0
  %801 = vmatprep.subr.mxu0 0.0
  %802 = vmatpush1.msra.mxu0 0.0
  %803 = vmatprep.subr.mxu0 0.0
  %804 = vmatpush1.msra.mxu0 0.0
  %805 = vmatprep.subr.mxu0 0.0
  %806 = vmatpush1.msra.mxu0 0.0
  %807 = vmatprep.mubr.f32.mxu0 0.0
  %808 = vmatmul.mubr.f32.gmra.mrb[0].mxu0 %v741
  %v809 = vpop.f32.mrb[0].mxu0
  %v810 = vadd.f32 %v739, %v809
  %v811 = vpop.f32.mrb[0].mxu0
  %812 = vdwg.mxu0
  %v813 = vadd.f32 %v727, %v810
  %v814 = vxor.u32 %v813, 2147483648
  %v815 = vmul.f32 %v814, 1.442695
  %v816 = vpow.pop %v815
  %v817 = vadd.f32 %v816, 1.0
  %v818 = vrcp.pop %v817
  %v819 = vmul.f32 1.0, %v818
  %821 = vrot.lane.b32.xlu0 %v810, 64
  %v822 = vpop.permute.xlu0 %821
  %v824 = vmul.f32 %v819, %v822
  %826 = vrot.lane.b32.xlu0 %v824, 64
  %v827 = vpop.permute.xlu0 %826
  %v829 = vadd.f32 %v727, %v827
  %v830 = vtanh.pop %v829
  %v831 = vsub.f32 %v637, %v830
  %833 = vrot.lane.b32.xlu0 %v831, 96
  %v834 = vpop.permute.xlu0 %833
  %v836 = vmul.f32 %v819, %v834
  %838 = vrot.lane.b32.xlu0 %v836, 32
  %v839 = vpop.permute.xlu0 %838
  %v841 = vadd.f32 %v830, %v839
  %843 = vrot.lane.b32.xlu0 %v841, 64
  %v844 = vpop.permute.xlu0 %843
  %s846 = scalar_lea.vmem %s5, 6
  %847 = vst.msk [vmem:[%s846] sm:$0x3] %vm234, %v844
  %s848 = scalar_lea.vmem %s0, 8
  %v849 = vld [vmem:[%s848] sm:$0x3]
  %v850 = vld [vmem:[%s1] sm:$0xff]
  %v851 = vld [vmem:[%s1 + $0x8] sm:$0xff]
  %v852 = vld [vmem:[%s1 + $0x10] sm:$0xff]
  %v853 = vld [vmem:[%s1 + $0x18] sm:$0xff]
  %v854 = vld [vmem:[%s2] sm:$0x1]
  %v856 = vlaneseq
  %v857 = vshrl.u32 %v856, 7
  %v858 = vsub.s32 0, %v857
  %v859 = vrot.slane %v854, %v858
  %v862 = vsel %vm39, %v849, 0
  %864 = vmatprep.subr.mxu0 0.0
  %865 = vmatpush1.msra.mxu0 %v850
  %866 = vmatprep.subr.mxu0 0.0
  %867 = vmatpush1.msra.mxu0 %v851
  %868 = vmatprep.subr.mxu0 0.0
  %869 = vmatpush1.msra.mxu0 %v852
  %870 = vmatprep.subr.mxu0 0.0
  %871 = vmatpush1.msra.mxu0 %v853
  %872 = vmatprep.subr.mxu0 0.0
  %873 = vmatpush1.msra.mxu0 0.0
  %874 = vmatprep.subr.mxu0 0.0
  %875 = vmatpush1.msra.mxu0 0.0
  %876 = vmatprep.subr.mxu0 0.0
  %877 = vmatpush1.msra.mxu0 0.0
  %878 = vmatprep.subr.mxu0 0.0
  %879 = vmatpush1.msra.mxu0 0.0
  %880 = vmatprep.subr.mxu0 0.0
  %881 = vmatpush1.msra.mxu0 0.0
  %882 = vmatprep.subr.mxu0 0.0
  %883 = vmatpush1.msra.mxu0 0.0
  %884 = vmatprep.subr.mxu0 0.0
  %885 = vmatpush1.msra.mxu0 0.0
  %886 = vmatprep.subr.mxu0 0.0
  %887 = vmatpush1.msra.mxu0 0.0
  %888 = vmatprep.subr.mxu0 0.0
  %889 = vmatpush1.msra.mxu0 0.0
  %890 = vmatprep.subr.mxu0 0.0
  %891 = vmatpush1.msra.mxu0 0.0
  %892 = vmatprep.subr.mxu0 0.0
  %893 = vmatpush1.msra.mxu0 0.0
  %894 = vmatprep.subr.mxu0 0.0
  %895 = vmatpush1.msra.mxu0 0.0
  %896 = vmatprep.subr.mxu0 0.0
  %897 = vmatpush1.msra.mxu0 0.0
  %898 = vmatprep.subr.mxu0 0.0
  %899 = vmatpush1.msra.mxu0 0.0
  %900 = vmatprep.subr.mxu0 0.0
  %901 = vmatpush1.msra.mxu0 0.0
  %902 = vmatprep.subr.mxu0 0.0
  %903 = vmatpush1.msra.mxu0 0.0
  %904 = vmatprep.subr.mxu0 0.0
  %905 = vmatpush1.msra.mxu0 0.0
  %906 = vmatprep.subr.mxu0 0.0
  %907 = vmatpush1.msra.mxu0 0.0
  %908 = vmatprep.subr.mxu0 0.0
  %909 = vmatpush1.msra.mxu0 0.0
  %910 = vmatprep.subr.mxu0 0.0
  %911 = vmatpush1.msra.mxu0 0.0
  %912 = vmatprep.subr.mxu0 0.0
  %913 = vmatpush1.msra.mxu0 0.0
  %914 = vmatprep.subr.mxu0 0.0
  %915 = vmatpush1.msra.mxu0 0.0
  %916 = vmatprep.subr.mxu0 0.0
  %917 = vmatpush1.msra.mxu0 0.0
  %918 = vmatprep.subr.mxu0 0.0
  %919 = vmatpush1.msra.mxu0 0.0
  %920 = vmatprep.subr.mxu0 0.0
  %921 = vmatpush1.msra.mxu0 0.0
  %922 = vmatprep.subr.mxu0 0.0
  %923 = vmatpush1.msra.mxu0 0.0
  %924 = vmatprep.subr.mxu0 0.0
  %925 = vmatpush1.msra.mxu0 0.0
  %926 = vmatprep.subr.mxu0 0.0
  %927 = vmatpush1.msra.mxu0 0.0
  %928 = vmatprep.mubr.f32.mxu0 0.0
  %929 = vmatmul.mubr.f32.gmra.mrb[0].mxu0 %v862
  %v930 = vpop.f32.mrb[0].mxu0
  %v931 = vadd.f32 %v859, %v930
  %v932 = vpop.f32.mrb[0].mxu0
  %933 = vdwg.mxu0
  %v934 = vld [vmem:[%s3] sm:$0xff]
  %v935 = vld [vmem:[%s3 + $0x8] sm:$0xff]
  %v936 = vld [vmem:[%s3 + $0x10] sm:$0xff]
  %v937 = vld [vmem:[%s3 + $0x18] sm:$0xff]
  %v938 = vld [vmem:[%s4] sm:$0x1]
  %v940 = vlaneseq
  %v941 = vshrl.u32 %v940, 7
  %v942 = vsub.s32 0, %v941
  %v943 = vrot.slane %v938, %v942
  %v945 = vsel %vm39, %v844, 0
  %947 = vmatprep.subr.mxu0 0.0
  %948 = vmatpush1.msra.mxu0 %v934
  %949 = vmatprep.subr.mxu0 0.0
  %950 = vmatpush1.msra.mxu0 %v935
  %951 = vmatprep.subr.mxu0 0.0
  %952 = vmatpush1.msra.mxu0 %v936
  %953 = vmatprep.subr.mxu0 0.0
  %954 = vmatpush1.msra.mxu0 %v937
  %955 = vmatprep.subr.mxu0 0.0
  %956 = vmatpush1.msra.mxu0 0.0
  %957 = vmatprep.subr.mxu0 0.0
  %958 = vmatpush1.msra.mxu0 0.0
  %959 = vmatprep.subr.mxu0 0.0
  %960 = vmatpush1.msra.mxu0 0.0
  %961 = vmatprep.subr.mxu0 0.0
  %962 = vmatpush1.msra.mxu0 0.0
  %963 = vmatprep.subr.mxu0 0.0
  %964 = vmatpush1.msra.mxu0 0.0
  %965 = vmatprep.subr.mxu0 0.0
  %966 = vmatpush1.msra.mxu0 0.0
  %967 = vmatprep.subr.mxu0 0.0
  %968 = vmatpush1.msra.mxu0 0.0
  %969 = vmatprep.subr.mxu0 0.0
  %970 = vmatpush1.msra.mxu0 0.0
  %971 = vmatprep.subr.mxu0 0.0
  %972 = vmatpush1.msra.mxu0 0.0
  %973 = vmatprep.subr.mxu0 0.0
  %974 = vmatpush1.msra.mxu0 0.0
  %975 = vmatprep.subr.mxu0 0.0
  %976 = vmatpush1.msra.mxu0 0.0
  %977 = vmatprep.subr.mxu0 0.0
  %978 = vmatpush1.msra.mxu0 0.0
  %979 = vmatprep.subr.mxu0 0.0
  %980 = vmatpush1.msra.mxu0 0.0
  %981 = vmatprep.subr.mxu0 0.0
  %982 = vmatpush1.msra.mxu0 0.0
  %983 = vmatprep.subr.mxu0 0.0
  %984 = vmatpush1.msra.mxu0 0.0
  %985 = vmatprep.subr.mxu0 0.0
  %986 = vmatpush1.msra.mxu0 0.0
  %987 = vmatprep.subr.mxu0 0.0
  %988 = vmatpush1.msra.mxu0 0.0
  %989 = vmatprep.subr.mxu0 0.0
  %990 = vmatpush1.msra.mxu0 0.0
  %991 = vmatprep.subr.mxu0 0.0
  %992 = vmatpush1.msra.mxu0 0.0
  %993 = vmatprep.subr.mxu0 0.0
  %994 = vmatpush1.msra.mxu0 0.0
  %995 = vmatprep.subr.mxu0 0.0
  %996 = vmatpush1.msra.mxu0 0.0
  %997 = vmatprep.subr.mxu0 0.0
  %998 = vmatpush1.msra.mxu0 0.0
  %999 = vmatprep.subr.mxu0 0.0
  %1000 = vmatpush1.msra.mxu0 0.0
  %1001 = vmatprep.subr.mxu0 0.0
  %1002 = vmatpush1.msra.mxu0 0.0
  %1003 = vmatprep.subr.mxu0 0.0
  %1004 = vmatpush1.msra.mxu0 0.0
  %1005 = vmatprep.subr.mxu0 0.0
  %1006 = vmatpush1.msra.mxu0 0.0
  %1007 = vmatprep.subr.mxu0 0.0
  %1008 = vmatpush1.msra.mxu0 0.0
  %1009 = vmatprep.subr.mxu0 0.0
  %1010 = vmatpush1.msra.mxu0 0.0
  %1011 = vmatprep.mubr.f32.mxu0 0.0
  %1012 = vmatmul.mubr.f32.gmra.mrb[0].mxu0 %v945
  %v1013 = vpop.f32.mrb[0].mxu0
  %v1014 = vadd.f32 %v943, %v1013
  %v1015 = vpop.f32.mrb[0].mxu0
  %1016 = vdwg.mxu0
  %v1017 = vadd.f32 %v931, %v1014
  %v1018 = vxor.u32 %v1017, 2147483648
  %v1019 = vmul.f32 %v1018, 1.442695
  %v1020 = vpow.pop %v1019
  %v1021 = vadd.f32 %v1020, 1.0
  %v1022 = vrcp.pop %v1021
  %v1023 = vmul.f32 1.0, %v1022
  %1025 = vrot.lane.b32.xlu0 %v1014, 64
  %v1026 = vpop.permute.xlu0 %1025
  %v1028 = vmul.f32 %v1023, %v1026
  %1030 = vrot.lane.b32.xlu0 %v1028, 64
  %v1031 = vpop.permute.xlu0 %1030
  %v1033 = vadd.f32 %v931, %v1031
  %v1034 = vtanh.pop %v1033
  %v1035 = vsub.f32 %v841, %v1034
  %1037 = vrot.lane.b32.xlu0 %v1035, 96
  %v1038 = vpop.permute.xlu0 %1037
  %v1040 = vmul.f32 %v1023, %v1038
  %1042 = vrot.lane.b32.xlu0 %v1040, 32
  %v1043 = vpop.permute.xlu0 %1042
  %v1045 = vadd.f32 %v1034, %v1043
  %1047 = vrot.lane.b32.xlu0 %v1045, 64
  %v1048 = vpop.permute.xlu0 %1047
  %s1050 = scalar_lea.vmem %s5, 8
  %1051 = vst.msk [vmem:[%s1050] sm:$0x3] %vm234, %v1048
  %s1052 = scalar_lea.vmem %s0, 10
  %v1053 = vld [vmem:[%s1052] sm:$0x3]
  %v1054 = vld [vmem:[%s1] sm:$0xff]
  %v1055 = vld [vmem:[%s1 + $0x8] sm:$0xff]
  %v1056 = vld [vmem:[%s1 + $0x10] sm:$0xff]
  %v1057 = vld [vmem:[%s1 + $0x18] sm:$0xff]
  %v1058 = vld [vmem:[%s2] sm:$0x1]
  %v1060 = vlaneseq
  %v1061 = vshrl.u32 %v1060, 7
  %v1062 = vsub.s32 0, %v1061
  %v1063 = vrot.slane %v1058, %v1062
  %v1066 = vsel %vm39, %v1053, 0
  %1068 = vmatprep.subr.mxu0 0.0
  %1069 = vmatpush1.msra.mxu0 %v1054
  %1070 = vmatprep.subr.mxu0 0.0
  %1071 = vmatpush1.msra.mxu0 %v1055
  %1072 = vmatprep.subr.mxu0 0.0
  %1073 = vmatpush1.msra.mxu0 %v1056
  %1074 = vmatprep.subr.mxu0 0.0
  %1075 = vmatpush1.msra.mxu0 %v1057
  %1076 = vmatprep.subr.mxu0 0.0
  %1077 = vmatpush1.msra.mxu0 0.0
  %1078 = vmatprep.subr.mxu0 0.0
  %1079 = vmatpush1.msra.mxu0 0.0
  %1080 = vmatprep.subr.mxu0 0.0
  %1081 = vmatpush1.msra.mxu0 0.0
  %1082 = vmatprep.subr.mxu0 0.0
  %1083 = vmatpush1.msra.mxu0 0.0
  %1084 = vmatprep.subr.mxu0 0.0
  %1085 = vmatpush1.msra.mxu0 0.0
  %1086 = vmatprep.subr.mxu0 0.0
  %1087 = vmatpush1.msra.mxu0 0.0
  %1088 = vmatprep.subr.mxu0 0.0
  %1089 = vmatpush1.msra.mxu0 0.0
  %1090 = vmatprep.subr.mxu0 0.0
  %1091 = vmatpush1.msra.mxu0 0.0
  %1092 = vmatprep.subr.mxu0 0.0
  %1093 = vmatpush1.msra.mxu0 0.0
  %1094 = vmatprep.subr.mxu0 0.0
  %1095 = vmatpush1.msra.mxu0 0.0
  %1096 = vmatprep.subr.mxu0 0.0
  %1097 = vmatpush1.msra.mxu0 0.0
  %1098 = vmatprep.subr.mxu0 0.0
  %1099 = vmatpush1.msra.mxu0 0.0
  %1100 = vmatprep.subr.mxu0 0.0
  %1101 = vmatpush1.msra.mxu0 0.0
  %1102 = vmatprep.subr.mxu0 0.0
  %1103 = vmatpush1.msra.mxu0 0.0
  %1104 = vmatprep.subr.mxu0 0.0
  %1105 = vmatpush1.msra.mxu0 0.0
  %1106 = vmatprep.subr.mxu0 0.0
  %1107 = vmatpush1.msra.mxu0 0.0
  %1108 = vmatprep.subr.mxu0 0.0
  %1109 = vmatpush1.msra.mxu0 0.0
  %1110 = vmatprep.subr.mxu0 0.0
  %1111 = vmatpush1.msra.mxu0 0.0
  %1112 = vmatprep.subr.mxu0 0.0
  %1113 = vmatpush1.msra.mxu0 0.0
  %1114 = vmatprep.subr.mxu0 0.0
  %1115 = vmatpush1.msra.mxu0 0.0
  %1116 = vmatprep.subr.mxu0 0.0
  %1117 = vmatpush1.msra.mxu0 0.0
  %1118 = vmatprep.subr.mxu0 0.0
  %1119 = vmatpush1.msra.mxu0 0.0
  %1120 = vmatprep.subr.mxu0 0.0
  %1121 = vmatpush1.msra.mxu0 0.0
  %1122 = vmatprep.subr.mxu0 0.0
  %1123 = vmatpush1.msra.mxu0 0.0
  %1124 = vmatprep.subr.mxu0 0.0
  %1125 = vmatpush1.msra.mxu0 0.0
  %1126 = vmatprep.subr.mxu0 0.0
  %1127 = vmatpush1.msra.mxu0 0.0
  %1128 = vmatprep.subr.mxu0 0.0
  %1129 = vmatpush1.msra.mxu0 0.0
  %1130 = vmatprep.subr.mxu0 0.0
  %1131 = vmatpush1.msra.mxu0 0.0
  %1132 = vmatprep.mubr.f32.mxu0 0.0
  %1133 = vmatmul.mubr.f32.gmra.mrb[0].mxu0 %v1066
  %v1134 = vpop.f32.mrb[0].mxu0
  %v1135 = vadd.f32 %v1063, %v1134
  %v1136 = vpop.f32.mrb[0].mxu0
  %1137 = vdwg.mxu0
  %v1138 = vld [vmem:[%s3] sm:$0xff]
  %v1139 = vld [vmem:[%s3 + $0x8] sm:$0xff]
  %v1140 = vld [vmem:[%s3 + $0x10] sm:$0xff]
  %v1141 = vld [vmem:[%s3 + $0x18] sm:$0xff]
  %v1142 = vld [vmem:[%s4] sm:$0x1]
  %v1144 = vlaneseq
  %v1145 = vshrl.u32 %v1144, 7
  %v1146 = vsub.s32 0, %v1145
  %v1147 = vrot.slane %v1142, %v1146
  %v1149 = vsel %vm39, %v1048, 0
  %1151 = vmatprep.subr.mxu0 0.0
  %1152 = vmatpush1.msra.mxu0 %v1138
  %1153 = vmatprep.subr.mxu0 0.0
  %1154 = vmatpush1.msra.mxu0 %v1139
  %1155 = vmatprep.subr.mxu0 0.0
  %1156 = vmatpush1.msra.mxu0 %v1140
  %1157 = vmatprep.subr.mxu0 0.0
  %1158 = vmatpush1.msra.mxu0 %v1141
  %1159 = vmatprep.subr.mxu0 0.0
  %1160 = vmatpush1.msra.mxu0 0.0
  %1161 = vmatprep.subr.mxu0 0.0
  %1162 = vmatpush1.msra.mxu0 0.0
  %1163 = vmatprep.subr.mxu0 0.0
  %1164 = vmatpush1.msra.mxu0 0.0
  %1165 = vmatprep.subr.mxu0 0.0
  %1166 = vmatpush1.msra.mxu0 0.0
  %1167 = vmatprep.subr.mxu0 0.0
  %1168 = vmatpush1.msra.mxu0 0.0
  %1169 = vmatprep.subr.mxu0 0.0
  %1170 = vmatpush1.msra.mxu0 0.0
  %1171 = vmatprep.subr.mxu0 0.0
  %1172 = vmatpush1.msra.mxu0 0.0
  %1173 = vmatprep.subr.mxu0 0.0
  %1174 = vmatpush1.msra.mxu0 0.0
  %1175 = vmatprep.subr.mxu0 0.0
  %1176 = vmatpush1.msra.mxu0 0.0
  %1177 = vmatprep.subr.mxu0 0.0
  %1178 = vmatpush1.msra.mxu0 0.0
  %1179 = vmatprep.subr.mxu0 0.0
  %1180 = vmatpush1.msra.mxu0 0.0
  %1181 = vmatprep.subr.mxu0 0.0
  %1182 = vmatpush1.msra.mxu0 0.0
  %1183 = vmatprep.subr.mxu0 0.0
  %1184 = vmatpush1.msra.mxu0 0.0
  %1185 = vmatprep.subr.mxu0 0.0
  %1186 = vmatpush1.msra.mxu0 0.0
  %1187 = vmatprep.subr.mxu0 0.0
  %1188 = vmatpush1.msra.mxu0 0.0
  %1189 = vmatprep.subr.mxu0 0.0
  %1190 = vmatpush1.msra.mxu0 0.0
  %1191 = vmatprep.subr.mxu0 0.0
  %1192 = vmatpush1.msra.mxu0 0.0
  %1193 = vmatprep.subr.mxu0 0.0
  %1194 = vmatpush1.msra.mxu0 0.0
  %1195 = vmatprep.subr.mxu0 0.0
  %1196 = vmatpush1.msra.mxu0 0.0
  %1197 = vmatprep.subr.mxu0 0.0
  %1198 = vmatpush1.msra.mxu0 0.0
  %1199 = vmatprep.subr.mxu0 0.0
  %1200 = vmatpush1.msra.mxu0 0.0
  %1201 = vmatprep.subr.mxu0 0.0
  %1202 = vmatpush1.msra.mxu0 0.0
  %1203 = vmatprep.subr.mxu0 0.0
  %1204 = vmatpush1.msra.mxu0 0.0
  %1205 = vmatprep.subr.mxu0 0.0
  %1206 = vmatpush1.msra.mxu0 0.0
  %1207 = vmatprep.subr.mxu0 0.0
  %1208 = vmatpush1.msra.mxu0 0.0
  %1209 = vmatprep.subr.mxu0 0.0
  %1210 = vmatpush1.msra.mxu0 0.0
  %1211 = vmatprep.subr.mxu0 0.0
  %1212 = vmatpush1.msra.mxu0 0.0
  %1213 = vmatprep.subr.mxu0 0.0
  %1214 = vmatpush1.msra.mxu0 0.0
  %1215 = vmatprep.mubr.f32.mxu0 0.0
  %1216 = vmatmul.mubr.f32.gmra.mrb[0].mxu0 %v1149
  %v1217 = vpop.f32.mrb[0].mxu0
  %v1218 = vadd.f32 %v1147, %v1217
  %v1219 = vpop.f32.mrb[0].mxu0
  %1220 = vdwg.mxu0
  %v1221 = vadd.f32 %v1135, %v1218
  %v1222 = vxor.u32 %v1221, 2147483648
  %v1223 = vmul.f32 %v1222, 1.442695
  %v1224 = vpow.pop %v1223
  %v1225 = vadd.f32 %v1224, 1.0
  %v1226 = vrcp.pop %v1225
  %v1227 = vmul.f32 1.0, %v1226
  %1229 = vrot.lane.b32.xlu0 %v1218, 64
  %v1230 = vpop.permute.xlu0 %1229
  %v1232 = vmul.f32 %v1227, %v1230
  %1234 = vrot.lane.b32.xlu0 %v1232, 64
  %v1235 = vpop.permute.xlu0 %1234
  %v1237 = vadd.f32 %v1135, %v1235
  %v1238 = vtanh.pop %v1237
  %v1239 = vsub.f32 %v1045, %v1238
  %1241 = vrot.lane.b32.xlu0 %v1239, 96
  %v1242 = vpop.permute.xlu0 %1241
  %v1244 = vmul.f32 %v1227, %v1242
  %1246 = vrot.lane.b32.xlu0 %v1244, 32
  %v1247 = vpop.permute.xlu0 %1246
  %v1249 = vadd.f32 %v1238, %v1247
  %1251 = vrot.lane.b32.xlu0 %v1249, 64
  %v1252 = vpop.permute.xlu0 %1251
  %s1254 = scalar_lea.vmem %s5, 10
  %1255 = vst.msk [vmem:[%s1254] sm:$0x3] %vm234, %v1252
  %s1256 = scalar_lea.vmem %s0, 12
  %v1257 = vld [vmem:[%s1256] sm:$0x3]
  %v1258 = vld [vmem:[%s1] sm:$0xff]
  %v1259 = vld [vmem:[%s1 + $0x8] sm:$0xff]
  %v1260 = vld [vmem:[%s1 + $0x10] sm:$0xff]
  %v1261 = vld [vmem:[%s1 + $0x18] sm:$0xff]
  %v1262 = vld [vmem:[%s2] sm:$0x1]
  %v1264 = vlaneseq
  %v1265 = vshrl.u32 %v1264, 7
  %v1266 = vsub.s32 0, %v1265
  %v1267 = vrot.slane %v1262, %v1266
  %v1270 = vsel %vm39, %v1257, 0
  %1272 = vmatprep.subr.mxu0 0.0
  %1273 = vmatpush1.msra.mxu0 %v1258
  %1274 = vmatprep.subr.mxu0 0.0
  %1275 = vmatpush1.msra.mxu0 %v1259
  %1276 = vmatprep.subr.mxu0 0.0
  %1277 = vmatpush1.msra.mxu0 %v1260
  %1278 = vmatprep.subr.mxu0 0.0
  %1279 = vmatpush1.msra.mxu0 %v1261
  %1280 = vmatprep.subr.mxu0 0.0
  %1281 = vmatpush1.msra.mxu0 0.0
  %1282 = vmatprep.subr.mxu0 0.0
  %1283 = vmatpush1.msra.mxu0 0.0
  %1284 = vmatprep.subr.mxu0 0.0
  %1285 = vmatpush1.msra.mxu0 0.0
  %1286 = vmatprep.subr.mxu0 0.0
  %1287 = vmatpush1.msra.mxu0 0.0
  %1288 = vmatprep.subr.mxu0 0.0
  %1289 = vmatpush1.msra.mxu0 0.0
  %1290 = vmatprep.subr.mxu0 0.0
  %1291 = vmatpush1.msra.mxu0 0.0
  %1292 = vmatprep.subr.mxu0 0.0
  %1293 = vmatpush1.msra.mxu0 0.0
  %1294 = vmatprep.subr.mxu0 0.0
  %1295 = vmatpush1.msra.mxu0 0.0
  %1296 = vmatprep.subr.mxu0 0.0
  %1297 = vmatpush1.msra.mxu0 0.0
  %1298 = vmatprep.subr.mxu0 0.0
  %1299 = vmatpush1.msra.mxu0 0.0
  %1300 = vmatprep.subr.mxu0 0.0
  %1301 = vmatpush1.msra.mxu0 0.0
  %1302 = vmatprep.subr.mxu0 0.0
  %1303 = vmatpush1.msra.mxu0 0.0
  %1304 = vmatprep.subr.mxu0 0.0
  %1305 = vmatpush1.msra.mxu0 0.0
  %1306 = vmatprep.subr.mxu0 0.0
  %1307 = vmatpush1.msra.mxu0 0.0
  %1308 = vmatprep.subr.mxu0 0.0
  %1309 = vmatpush1.msra.mxu0 0.0
  %1310 = vmatprep.subr.mxu0 0.0
  %1311 = vmatpush1.msra.mxu0 0.0
  %1312 = vmatprep.subr.mxu0 0.0
  %1313 = vmatpush1.msra.mxu0 0.0
  %1314 = vmatprep.subr.mxu0 0.0
  %1315 = vmatpush1.msra.mxu0 0.0
  %1316 = vmatprep.subr.mxu0 0.0
  %1317 = vmatpush1.msra.mxu0 0.0
  %1318 = vmatprep.subr.mxu0 0.0
  %1319 = vmatpush1.msra.mxu0 0.0
  %1320 = vmatprep.subr.mxu0 0.0
  %1321 = vmatpush1.msra.mxu0 0.0
  %1322 = vmatprep.subr.mxu0 0.0
  %1323 = vmatpush1.msra.mxu0 0.0
  %1324 = vmatprep.subr.mxu0 0.0
  %1325 = vmatpush1.msra.mxu0 0.0
  %1326 = vmatprep.subr.mxu0 0.0
  %1327 = vmatpush1.msra.mxu0 0.0
  %1328 = vmatprep.subr.mxu0 0.0
  %1329 = vmatpush1.msra.mxu0 0.0
  %1330 = vmatprep.subr.mxu0 0.0
  %1331 = vmatpush1.msra.mxu0 0.0
  %1332 = vmatprep.subr.mxu0 0.0
  %1333 = vmatpush1.msra.mxu0 0.0
  %1334 = vmatprep.subr.mxu0 0.0
  %1335 = vmatpush1.msra.mxu0 0.0
  %1336 = vmatprep.mubr.f32.mxu0 0.0
  %1337 = vmatmul.mubr.f32.gmra.mrb[0].mxu0 %v1270
  %v1338 = vpop.f32.mrb[0].mxu0
  %v1339 = vadd.f32 %v1267, %v1338
  %v1340 = vpop.f32.mrb[0].mxu0
  %1341 = vdwg.mxu0
  %v1342 = vld [vmem:[%s3] sm:$0xff]
  %v1343 = vld [vmem:[%s3 + $0x8] sm:$0xff]
  %v1344 = vld [vmem:[%s3 + $0x10] sm:$0xff]
  %v1345 = vld [vmem:[%s3 + $0x18] sm:$0xff]
  %v1346 = vld [vmem:[%s4] sm:$0x1]
  %v1348 = vlaneseq
  %v1349 = vshrl.u32 %v1348, 7
  %v1350 = vsub.s32 0, %v1349
  %v1351 = vrot.slane %v1346, %v1350
  %v1353 = vsel %vm39, %v1252, 0
  %1355 = vmatprep.subr.mxu0 0.0
  %1356 = vmatpush1.msra.mxu0 %v1342
  %1357 = vmatprep.subr.mxu0 0.0
  %1358 = vmatpush1.msra.mxu0 %v1343
  %1359 = vmatprep.subr.mxu0 0.0
  %1360 = vmatpush1.msra.mxu0 %v1344
  %1361 = vmatprep.subr.mxu0 0.0
  %1362 = vmatpush1.msra.mxu0 %v1345
  %1363 = vmatprep.subr.mxu0 0.0
  %1364 = vmatpush1.msra.mxu0 0.0
  %1365 = vmatprep.subr.mxu0 0.0
  %1366 = vmatpush1.msra.mxu0 0.0
  %1367 = vmatprep.subr.mxu0 0.0
  %1368 = vmatpush1.msra.mxu0 0.0
  %1369 = vmatprep.subr.mxu0 0.0
  %1370 = vmatpush1.msra.mxu0 0.0
  %1371 = vmatprep.subr.mxu0 0.0
  %1372 = vmatpush1.msra.mxu0 0.0
  %1373 = vmatprep.subr.mxu0 0.0
  %1374 = vmatpush1.msra.mxu0 0.0
  %1375 = vmatprep.subr.mxu0 0.0
  %1376 = vmatpush1.msra.mxu0 0.0
  %1377 = vmatprep.subr.mxu0 0.0
  %1378 = vmatpush1.msra.mxu0 0.0
  %1379 = vmatprep.subr.mxu0 0.0
  %1380 = vmatpush1.msra.mxu0 0.0
  %1381 = vmatprep.subr.mxu0 0.0
  %1382 = vmatpush1.msra.mxu0 0.0
  %1383 = vmatprep.subr.mxu0 0.0
  %1384 = vmatpush1.msra.mxu0 0.0
  %1385 = vmatprep.subr.mxu0 0.0
  %1386 = vmatpush1.msra.mxu0 0.0
  %1387 = vmatprep.subr.mxu0 0.0
  %1388 = vmatpush1.msra.mxu0 0.0
  %1389 = vmatprep.subr.mxu0 0.0
  %1390 = vmatpush1.msra.mxu0 0.0
  %1391 = vmatprep.subr.mxu0 0.0
  %1392 = vmatpush1.msra.mxu0 0.0
  %1393 = vmatprep.subr.mxu0 0.0
  %1394 = vmatpush1.msra.mxu0 0.0
  %1395 = vmatprep.subr.mxu0 0.0
  %1396 = vmatpush1.msra.mxu0 0.0
  %1397 = vmatprep.subr.mxu0 0.0
  %1398 = vmatpush1.msra.mxu0 0.0
  %1399 = vmatprep.subr.mxu0 0.0
  %1400 = vmatpush1.msra.mxu0 0.0
  %1401 = vmatprep.subr.mxu0 0.0
  %1402 = vmatpush1.msra.mxu0 0.0
  %1403 = vmatprep.subr.mxu0 0.0
  %1404 = vmatpush1.msra.mxu0 0.0
  %1405 = vmatprep.subr.mxu0 0.0
  %1406 = vmatpush1.msra.mxu0 0.0
  %1407 = vmatprep.subr.mxu0 0.0
  %1408 = vmatpush1.msra.mxu0 0.0
  %1409 = vmatprep.subr.mxu0 0.0
  %1410 = vmatpush1.msra.mxu0 0.0
  %1411 = vmatprep.subr.mxu0 0.0
  %1412 = vmatpush1.msra.mxu0 0.0
  %1413 = vmatprep.subr.mxu0 0.0
  %1414 = vmatpush1.msra.mxu0 0.0
  %1415 = vmatprep.subr.mxu0 0.0
  %1416 = vmatpush1.msra.mxu0 0.0
  %1417 = vmatprep.subr.mxu0 0.0
  %1418 = vmatpush1.msra.mxu0 0.0
  %1419 = vmatprep.mubr.f32.mxu0 0.0
  %1420 = vmatmul.mubr.f32.gmra.mrb[0].mxu0 %v1353
  %v1421 = vpop.f32.mrb[0].mxu0
  %v1422 = vadd.f32 %v1351, %v1421
  %v1423 = vpop.f32.mrb[0].mxu0
  %1424 = vdwg.mxu0
  %v1425 = vadd.f32 %v1339, %v1422
  %v1426 = vxor.u32 %v1425, 2147483648
  %v1427 = vmul.f32 %v1426, 1.442695
  %v1428 = vpow.pop %v1427
  %v1429 = vadd.f32 %v1428, 1.0
  %v1430 = vrcp.pop %v1429
  %v1431 = vmul.f32 1.0, %v1430
  %1433 = vrot.lane.b32.xlu0 %v1422, 64
  %v1434 = vpop.permute.xlu0 %1433
  %v1436 = vmul.f32 %v1431, %v1434
  %1438 = vrot.lane.b32.xlu0 %v1436, 64
  %v1439 = vpop.permute.xlu0 %1438
  %v1441 = vadd.f32 %v1339, %v1439
  %v1442 = vtanh.pop %v1441
  %v1443 = vsub.f32 %v1249, %v1442
  %1445 = vrot.lane.b32.xlu0 %v1443, 96
  %v1446 = vpop.permute.xlu0 %1445
  %v1448 = vmul.f32 %v1431, %v1446
  %1450 = vrot.lane.b32.xlu0 %v1448, 32
  %v1451 = vpop.permute.xlu0 %1450
  %v1453 = vadd.f32 %v1442, %v1451
  %1455 = vrot.lane.b32.xlu0 %v1453, 64
  %v1456 = vpop.permute.xlu0 %1455
  %s1458 = scalar_lea.vmem %s5, 12
  %1459 = vst.msk [vmem:[%s1458] sm:$0x3] %vm234, %v1456
  %s1460 = scalar_lea.vmem %s0, 14
  %v1461 = vld [vmem:[%s1460] sm:$0x3]
  %v1462 = vld [vmem:[%s1] sm:$0xff]
  %v1463 = vld [vmem:[%s1 + $0x8] sm:$0xff]
  %v1464 = vld [vmem:[%s1 + $0x10] sm:$0xff]
  %v1465 = vld [vmem:[%s1 + $0x18] sm:$0xff]
  %v1466 = vld [vmem:[%s2] sm:$0x1]
  %v1468 = vlaneseq
  %v1469 = vshrl.u32 %v1468, 7
  %v1470 = vsub.s32 0, %v1469
  %v1471 = vrot.slane %v1466, %v1470
  %v1474 = vsel %vm39, %v1461, 0
  %1476 = vmatprep.subr.mxu0 0.0
  %1477 = vmatpush1.msra.mxu0 %v1462
  %1478 = vmatprep.subr.mxu0 0.0
  %1479 = vmatpush1.msra.mxu0 %v1463
  %1480 = vmatprep.subr.mxu0 0.0
  %1481 = vmatpush1.msra.mxu0 %v1464
  %1482 = vmatprep.subr.mxu0 0.0
  %1483 = vmatpush1.msra.mxu0 %v1465
  %1484 = vmatprep.subr.mxu0 0.0
  %1485 = vmatpush1.msra.mxu0 0.0
  %1486 = vmatprep.subr.mxu0 0.0
  %1487 = vmatpush1.msra.mxu0 0.0
  %1488 = vmatprep.subr.mxu0 0.0
  %1489 = vmatpush1.msra.mxu0 0.0
  %1490 = vmatprep.subr.mxu0 0.0
  %1491 = vmatpush1.msra.mxu0 0.0
  %1492 = vmatprep.subr.mxu0 0.0
  %1493 = vmatpush1.msra.mxu0 0.0
  %1494 = vmatprep.subr.mxu0 0.0
  %1495 = vmatpush1.msra.mxu0 0.0
  %1496 = vmatprep.subr.mxu0 0.0
  %1497 = vmatpush1.msra.mxu0 0.0
  %1498 = vmatprep.subr.mxu0 0.0
  %1499 = vmatpush1.msra.mxu0 0.0
  %1500 = vmatprep.subr.mxu0 0.0
  %1501 = vmatpush1.msra.mxu0 0.0
  %1502 = vmatprep.subr.mxu0 0.0
  %1503 = vmatpush1.msra.mxu0 0.0
  %1504 = vmatprep.subr.mxu0 0.0
  %1505 = vmatpush1.msra.mxu0 0.0
  %1506 = vmatprep.subr.mxu0 0.0
  %1507 = vmatpush1.msra.mxu0 0.0
  %1508 = vmatprep.subr.mxu0 0.0
  %1509 = vmatpush1.msra.mxu0 0.0
  %1510 = vmatprep.subr.mxu0 0.0
  %1511 = vmatpush1.msra.mxu0 0.0
  %1512 = vmatprep.subr.mxu0 0.0
  %1513 = vmatpush1.msra.mxu0 0.0
  %1514 = vmatprep.subr.mxu0 0.0
  %1515 = vmatpush1.msra.mxu0 0.0
  %1516 = vmatprep.subr.mxu0 0.0
  %1517 = vmatpush1.msra.mxu0 0.0
  %1518 = vmatprep.subr.mxu0 0.0
  %1519 = vmatpush1.msra.mxu0 0.0
  %1520 = vmatprep.subr.mxu0 0.0
  %1521 = vmatpush1.msra.mxu0 0.0
  %1522 = vmatprep.subr.mxu0 0.0
  %1523 = vmatpush1.msra.mxu0 0.0
  %1524 = vmatprep.subr.mxu0 0.0
  %1525 = vmatpush1.msra.mxu0 0.0
  %1526 = vmatprep.subr.mxu0 0.0
  %1527 = vmatpush1.msra.mxu0 0.0
  %1528 = vmatprep.subr.mxu0 0.0
  %1529 = vmatpush1.msra.mxu0 0.0
  %1530 = vmatprep.subr.mxu0 0.0
  %1531 = vmatpush1.msra.mxu0 0.0
  %1532 = vmatprep.subr.mxu0 0.0
  %1533 = vmatpush1.msra.mxu0 0.0
  %1534 = vmatprep.subr.mxu0 0.0
  %1535 = vmatpush1.msra.mxu0 0.0
  %1536 = vmatprep.subr.mxu0 0.0
  %1537 = vmatpush1.msra.mxu0 0.0
  %1538 = vmatprep.subr.mxu0 0.0
  %1539 = vmatpush1.msra.mxu0 0.0
  %1540 = vmatprep.mubr.f32.mxu0 0.0
  %1541 = vmatmul.mubr.f32.gmra.mrb[0].mxu0 %v1474
  %v1542 = vpop.f32.mrb[0].mxu0
  %v1543 = vadd.f32 %v1471, %v1542
  %v1544 = vpop.f32.mrb[0].mxu0
  %1545 = vdwg.mxu0
  %v1546 = vld [vmem:[%s3] sm:$0xff]
  %v1547 = vld [vmem:[%s3 + $0x8] sm:$0xff]
  %v1548 = vld [vmem:[%s3 + $0x10] sm:$0xff]
  %v1549 = vld [vmem:[%s3 + $0x18] sm:$0xff]
  %v1550 = vld [vmem:[%s4] sm:$0x1]
  %v1552 = vlaneseq
  %v1553 = vshrl.u32 %v1552, 7
  %v1554 = vsub.s32 0, %v1553
  %v1555 = vrot.slane %v1550, %v1554
  %v1557 = vsel %vm39, %v1456, 0
  %1559 = vmatprep.subr.mxu0 0.0
  %1560 = vmatpush1.msra.mxu0 %v1546
  %1561 = vmatprep.subr.mxu0 0.0
  %1562 = vmatpush1.msra.mxu0 %v1547
  %1563 = vmatprep.subr.mxu0 0.0
  %1564 = vmatpush1.msra.mxu0 %v1548
  %1565 = vmatprep.subr.mxu0 0.0
  %1566 = vmatpush1.msra.mxu0 %v1549
  %1567 = vmatprep.subr.mxu0 0.0
  %1568 = vmatpush1.msra.mxu0 0.0
  %1569 = vmatprep.subr.mxu0 0.0
  %1570 = vmatpush1.msra.mxu0 0.0
  %1571 = vmatprep.subr.mxu0 0.0
  %1572 = vmatpush1.msra.mxu0 0.0
  %1573 = vmatprep.subr.mxu0 0.0
  %1574 = vmatpush1.msra.mxu0 0.0
  %1575 = vmatprep.subr.mxu0 0.0
  %1576 = vmatpush1.msra.mxu0 0.0
  %1577 = vmatprep.subr.mxu0 0.0
  %1578 = vmatpush1.msra.mxu0 0.0
  %1579 = vmatprep.subr.mxu0 0.0
  %1580 = vmatpush1.msra.mxu0 0.0
  %1581 = vmatprep.subr.mxu0 0.0
  %1582 = vmatpush1.msra.mxu0 0.0
  %1583 = vmatprep.subr.mxu0 0.0
  %1584 = vmatpush1.msra.mxu0 0.0
  %1585 = vmatprep.subr.mxu0 0.0
  %1586 = vmatpush1.msra.mxu0 0.0
  %1587 = vmatprep.subr.mxu0 0.0
  %1588 = vmatpush1.msra.mxu0 0.0
  %1589 = vmatprep.subr.mxu0 0.0
  %1590 = vmatpush1.msra.mxu0 0.0
  %1591 = vmatprep.subr.mxu0 0.0
  %1592 = vmatpush1.msra.mxu0 0.0
  %1593 = vmatprep.subr.mxu0 0.0
  %1594 = vmatpush1.msra.mxu0 0.0
  %1595 = vmatprep.subr.mxu0 0.0
  %1596 = vmatpush1.msra.mxu0 0.0
  %1597 = vmatprep.subr.mxu0 0.0
  %1598 = vmatpush1.msra.mxu0 0.0
  %1599 = vmatprep.subr.mxu0 0.0
  %1600 = vmatpush1.msra.mxu0 0.0
  %1601 = vmatprep.subr.mxu0 0.0
  %1602 = vmatpush1.msra.mxu0 0.0
  %1603 = vmatprep.subr.mxu0 0.0
  %1604 = vmatpush1.msra.mxu0 0.0
  %1605 = vmatprep.subr.mxu0 0.0
  %1606 = vmatpush1.msra.mxu0 0.0
  %1607 = vmatprep.subr.mxu0 0.0
  %1608 = vmatpush1.msra.mxu0 0.0
  %1609 = vmatprep.subr.mxu0 0.0
  %1610 = vmatpush1.msra.mxu0 0.0
  %1611 = vmatprep.subr.mxu0 0.0
  %1612 = vmatpush1.msra.mxu0 0.0
  %1613 = vmatprep.subr.mxu0 0.0
  %1614 = vmatpush1.msra.mxu0 0.0
  %1615 = vmatprep.subr.mxu0 0.0
  %1616 = vmatpush1.msra.mxu0 0.0
  %1617 = vmatprep.subr.mxu0 0.0
  %1618 = vmatpush1.msra.mxu0 0.0
  %1619 = vmatprep.subr.mxu0 0.0
  %1620 = vmatpush1.msra.mxu0 0.0
  %1621 = vmatprep.subr.mxu0 0.0
  %1622 = vmatpush1.msra.mxu0 0.0
  %1623 = vmatprep.mubr.f32.mxu0 0.0
  %1624 = vmatmul.mubr.f32.gmra.mrb[0].mxu0 %v1557
  %v1625 = vpop.f32.mrb[0].mxu0
  %v1626 = vadd.f32 %v1555, %v1625
  %v1627 = vpop.f32.mrb[0].mxu0
  %1628 = vdwg.mxu0
  %v1629 = vadd.f32 %v1543, %v1626
  %v1630 = vxor.u32 %v1629, 2147483648
  %v1631 = vmul.f32 %v1630, 1.442695
  %v1632 = vpow.pop %v1631
  %v1633 = vadd.f32 %v1632, 1.0
  %v1634 = vrcp.pop %v1633
  %v1635 = vmul.f32 1.0, %v1634
  %1637 = vrot.lane.b32.xlu0 %v1626, 64
  %v1638 = vpop.permute.xlu0 %1637
  %v1640 = vmul.f32 %v1635, %v1638
  %1642 = vrot.lane.b32.xlu0 %v1640, 64
  %v1643 = vpop.permute.xlu0 %1642
  %v1645 = vadd.f32 %v1543, %v1643
  %v1646 = vtanh.pop %v1645
  %v1647 = vsub.f32 %v1453, %v1646
  %1649 = vrot.lane.b32.xlu0 %v1647, 96
  %v1650 = vpop.permute.xlu0 %1649
  %v1652 = vmul.f32 %v1635, %v1650
  %1654 = vrot.lane.b32.xlu0 %v1652, 32
  %v1655 = vpop.permute.xlu0 %1654
  %v1657 = vadd.f32 %v1646, %v1655
  %1659 = vrot.lane.b32.xlu0 %v1657, 64
  %v1660 = vpop.permute.xlu0 %1659
  %s1662 = scalar_lea.vmem %s5, 14
  %1663 = vst.msk [vmem:[%s1662] sm:$0x3] %vm234, %v1660
  %1664 = vst.msk [vmem:[#allocation2] sm:$0x3] %vm234, %v1660
  // Predicated region
  $region26: #{forward.7} parent=0 // pred_check
    _
  $region27: #{forward.7} parent=0 // pred_check_branch
    %1666 = sbr.rel (0) target = $region29
  $region28: #{forward.7} parent=0 // pred_region
    _
  $region29: #{forward.7} parent=0 // pred_fallthru
    _
  // Predicated region
  $region30: #{forward.7} parent=0 // pred_check
    _
  $region31: #{forward.7} parent=0 // pred_check_branch
    %1668 = sbr.rel (0) target = $region33
  $region32: #{forward.7} parent=0 // pred_region
    _
  $region33: #{forward.7} parent=0 // pred_fallthru
    _

</llo_original>
